<compile_context>
chip_gen: v5e
topology: v5e:2x2
jax: 0.10.0
libtpu: 0.0.40
codegen_flags: <defaults>
</compile_context>

<pallas_src>
import functools

import jax
import jax.numpy as jnp
from jax import lax
from jax.experimental import pallas as pl
from jax.experimental.pallas import tpu as pltpu


# ----------------------------------------------------------------------------
# Pallas kernel (one grid step == one batch element)
# ----------------------------------------------------------------------------
def _upsampling_kernel(x1_ref, x2_ref, wm_ref, bm_ref, gk_ref, gb_ref,
                       rh_ref, rwT_ref, swT_ref, alpha_ref, out_ref, u_scr):
    f32 = jnp.float32
    chalf = wm_ref.shape[0]
    W, Wo = rwT_ref.shape
    Ho, H = rh_ref.shape
    s = Wo // W
    a = alpha_ref[0]                       # shared PReLU weight (SMEM scalar)

    def prelu(v):
        return jnp.where(v >= 0.0, v, a * v)

    # ---- fused channel mix (conv1x1 + folded eval-BN): ONE lane-dense dot per
    #      path, contraction dim = Cin, H*W lanes; bias via VPU broadcast add.
    ym = jnp.dot(wm_ref[...], x1_ref[...],
                 preferred_element_type=f32) + bm_ref[...]          # (chalf, H*W)
    zs = jnp.dot(gk_ref[...], x2_ref[...],
                 preferred_element_type=f32) + gb_ref[...]          # (s*s*chalf, H*W)

    rwT = rwT_ref[...]                                              # (W, Wo)
    swT = [swT_ref[j] for j in range(s)]                            # hoisted taps

    # ---- per low-res row (fully unrolled; H is small & static):
    #      main: bilinear W-interp, staged channel-major into u_scr for pass 2.
    #      skip: lane placement of the ConvT taps, PReLU, direct NCHW store.
    for h in range(H):
        ymh = ym[:, h * W:(h + 1) * W]                              # (chalf, W)
        uh = jnp.dot(ymh, rwT, preferred_element_type=f32)          # (chalf, Wo)
        u_scr[:, pl.ds(h, 1), :] = uh[:, None, :]

        zsh = zs[:, h * W:(h + 1) * W]                              # (s*s*chalf, W)
        combined = None
        for j in range(s):                                          # lane tap j
            blk = zsh[j * s * chalf:(j + 1) * s * chalf, :]         # rows = (i, c)
            part = jnp.dot(blk, swT[j],
                           preferred_element_type=f32)              # lanes w*s+j
            combined = part if combined is None else combined + part
        combined = prelu(combined)                                  # (s*chalf, Wo)
        for i in range(s):                                          # row tap i
            slab = combined[i * chalf:(i + 1) * chalf]              # (chalf, Wo)
            out_ref[pl.ds(chalf, chalf), pl.ds(h * s + i, 1), :] = (
                slab[:, None, :].astype(out_ref.dtype))

    # ---- main-path H-interp: ONE batched (per-channel) MXU matmul, PReLU, and
    #      a single chunky store into the first half of the NCHW output block.
    rh_b = jnp.broadcast_to(rh_ref[...][None, :, :], (chalf, Ho, H))
    main_up = lax.dot_general(rh_b, u_scr[...],
                              dimension_numbers=(((2,), (1,)), ((0,), (0,))),
                              preferred_element_type=f32)           # (chalf, Ho, Wo)
    out_ref[pl.ds(0, chalf), :, :] = prelu(main_up).astype(out_ref.dtype)


# ----------------------------------------------------------------------------
# Wrapper: parameter folding + layout plumbing + pallas_call
# ----------------------------------------------------------------------------
def _bn_fold(gamma, beta, mean, var, eps=1e-5):
    scale = gamma / jnp.sqrt(var + eps)
    shift = beta - mean * scale
    return scale.astype(jnp.float32), shift.astype(jnp.float32)


def _bilinear_matrix(n_in, n_out):
    """Interpolation matrix (n_out, n_in) for align_corners=True bilinear."""
    if n_in == 1:
        return jnp.ones((n_out, 1), jnp.float32)
    idx = jnp.arange(n_out, dtype=jnp.float32)
    src = idx * ((n_in - 1) / (n_out - 1))
    i0 = jnp.clip(jnp.floor(src), 0, n_in - 2).astype(jnp.int32)
    frac = src - i0.astype(jnp.float32)
    rows = jnp.arange(n_out)
    r = jnp.zeros((n_out, n_in), jnp.float32)
    r = r.at[rows, i0].add(1.0 - frac)
    r = r.at[rows, i0 + 1].add(frac)
    return r


def _lane_scatter(w_in, s):
    """swT[j] is (W, W*s) with ones at (w, w*s+j): places lane w at lane w*s+j."""
    wo = w_in * s
    swT = jnp.zeros((s, w_in, wo), jnp.float32)
    widx = jnp.arange(w_in)
    for j in range(s):
        swT = swT.at[j, widx, widx * s + j].set(1.0)
    return swT


def upsampling_block(x1, x2, params, *, stride, compute_dtype=jnp.float32):
    s = int(stride)
    B, Cin, H, W = x1.shape
    assert x2.shape == x1.shape
    Ho, Wo = H * s, W * s
    chalf = params['wm'].shape[0]
    cout = 2 * chalf
    f32 = jnp.float32

    # --- main path: fold conv bias + eval-BN into (chalf, Cin) weight + bias.
    sm, tm = _bn_fold(params['bnm_g'], params['bnm_b'], params['bnm_m'], params['bnm_v'])
    wm_f = (sm[:, None] * params['wm'].reshape(chalf, Cin)).astype(compute_dtype)
    bm_f = (sm * params['bm'] + tm).reshape(chalf, 1).astype(f32)

    # --- skip path: fold conv1x1 + ConvTranspose2d(kernel=s, stride=s) + eval-BN.
    #     Row order of gk/gb is (j, i, c): j = lane tap, i = row tap, c = channel.
    ssk, tsk = _bn_fold(params['bns_g'], params['bns_b'], params['bns_m'], params['bns_v'])
    ws2 = params['ws'].reshape(chalf, Cin)
    wt = params['wt']                                               # (chalf, chalf, s, s)
    g_w = jnp.einsum('moij,mk->jiok', wt, ws2)                      # (s, s, chalf, Cin)
    g_b = jnp.einsum('moij,m->jio', wt, params['bs']) + params['bt'][None, None, :]
    g_w = ssk[None, None, :, None] * g_w
    g_b = ssk[None, None, :] * g_b + tsk[None, None, :]
    gk = g_w.reshape(s * s * chalf, Cin).astype(compute_dtype)
    gb = g_b.reshape(s * s * chalf, 1).astype(f32)

    # --- precomputed spatial operators
    rh = _bilinear_matrix(H, Ho)              # (Ho, H)   bilinear along H
    rwT = _bilinear_matrix(W, Wo).T           # (W, Wo)   bilinear along W
    swT = _lane_scatter(W, s)                 # (s, W, Wo) 0/1 lane placement

    # --- inputs stay in native NCHW order; only a free flatten of (H, W).
    x1f = x1.astype(compute_dtype).reshape(B, Cin, H * W)
    x2f = x2.astype(compute_dtype).reshape(B, Cin, H * W)
    alpha = params['alpha'].reshape(1).astype(f32)

    # --- explicit scoped-VMEM budget from the actual per-step footprint
    #     (double-buffered blocks + scratch, with margin; capped < 64 MiB).
    isz = jnp.dtype(compute_dtype).itemsize
    need = (2 * 2 * Cin * H * W * isz                     # both inputs, x2 buffers
            + 2 * cout * Ho * Wo * 4                      # output, x2 buffers
            + (wm_f.size + gk.size) * isz
            + (bm_f.size + gb.size + rh.size + rwT.size + swT.size) * 4
            + chalf * H * Wo * 4)                         # u_scr scratch
    vmem_limit = int(min(max(4 * need, 16 << 20), 48 << 20))

    out = pl.pallas_call(
        _upsampling_kernel,
        out_shape=jax.ShapeDtypeStruct((B, cout, Ho, Wo), f32),
        grid=(B,),
        in_specs=[
            pl.BlockSpec((None, Cin, H * W), lambda b: (b, 0, 0)),
            pl.BlockSpec((None, Cin, H * W), lambda b: (b, 0, 0)),
            pl.BlockSpec((chalf, Cin), lambda b: (0, 0)),
            pl.BlockSpec((chalf, 1), lambda b: (0, 0)),
            pl.BlockSpec((s * s * chalf, Cin), lambda b: (0, 0)),
            pl.BlockSpec((s * s * chalf, 1), lambda b: (0, 0)),
            pl.BlockSpec((Ho, H), lambda b: (0, 0)),
            pl.BlockSpec((W, Wo), lambda b: (0, 0)),
            pl.BlockSpec((s, W, Wo), lambda b: (0, 0, 0)),
            pl.BlockSpec(memory_space=pltpu.MemorySpace.SMEM),      # PReLU alpha
        ],
        out_specs=pl.BlockSpec((None, cout, Ho, Wo), lambda b: (b, 0, 0, 0)),
        scratch_shapes=[pltpu.VMEM((chalf, H, Wo), f32)],           # main W-interp
        compiler_params=pltpu.CompilerParams(
            dimension_semantics=("parallel",),
            vmem_limit_bytes=vmem_limit),
    )(x1f, x2f, wm_f, bm_f, gk, gb, rh, rwT, swT, alpha)
    return out                                                      # NCHW, f32


# ----------------------------------------------------------------------------
# Deterministic parameter init (torch layouts / defaults, bias=True)
# ----------------------------------------------------------------------------
def init_params(key, cin, cout, stride):
    chalf = cout // 2
    ks = jax.random.split(key, 16)

    def nrm(kk, shape, scale=0.1):
        return scale * jax.random.normal(kk, shape, jnp.float32)

    def pos(kk, shape):
        return 0.5 + jax.random.uniform(kk, shape, dtype=jnp.float32)

    p = {}
    # main path: 1x1 conv + BN
    p['wm'] = nrm(ks[0], (chalf, cin, 1, 1)); p['bm'] = nrm(ks[1], (chalf,))
    p['bnm_g'] = pos(ks[2], (chalf,)); p['bnm_b'] = nrm(ks[3], (chalf,))
    p['bnm_m'] = nrm(ks[4], (chalf,)); p['bnm_v'] = pos(ks[5], (chalf,))
    # skip path: 1x1 conv, ConvTranspose2d(s,s,stride s), BN
    p['ws'] = nrm(ks[6], (chalf, cin, 1, 1)); p['bs'] = nrm(ks[7], (chalf,))
    p['wt'] = nrm(ks[8], (chalf, chalf, stride, stride)); p['bt'] = nrm(ks[9], (chalf,))
    p['bns_g'] = pos(ks[10], (chalf,)); p['bns_b'] = nrm(ks[11], (chalf,))
    p['bns_m'] = nrm(ks[12], (chalf,)); p['bns_v'] = pos(ks[13], (chalf,))
    # shared PReLU weight (torch default 0.25)
    p['alpha'] = jnp.asarray(0.25, jnp.float32)
    return p


# ----------------------------------------------------------------------------
# Pure-JAX reference (lax convs + explicit math) for validation
# ----------------------------------------------------------------------------
def reference(x1, x2, p, *, stride):
    s = stride
    f32 = jnp.float32
    x1 = x1.astype(f32)
    x2 = x2.astype(f32)
    dn = ('NCHW', 'OIHW', 'NCHW')

    def conv1x1(x, w, b):
        y = lax.conv_general_dilated(x, w, (1, 1), 'VALID', dimension_numbers=dn)
        return y + b[None, :, None, None]

    def bn(x, g, b, m, v, eps=1e-5):
        return (x - m[None, :, None, None]) / jnp.sqrt(v + eps)[None, :, None, None] \
            * g[None, :, None, None] + b[None, :, None, None]

    def prelu(x, a):
        return jnp.where(x >= 0, x, a * x)

    # main path: conv -> BN -> bilinear upsample (align_corners=True)
    y1 = bn(conv1x1(x1, p['wm'], p['bm']),
            p['bnm_g'], p['bnm_b'], p['bnm_m'], p['bnm_v'])
    B, C, H, W = y1.shape
    rh = _bilinear_matrix(H, H * s)
    rw = _bilinear_matrix(W, W * s)
    y1 = jnp.einsum('qh,bchw,pw->bcqp', rh, y1, rw)

    # skip path: conv -> ConvTranspose2d(kernel=s, stride=s, pad=0) -> BN
    y2 = conv1x1(x2, p['ws'], p['bs'])
    up = jnp.einsum('bmhw,moij->bohiwj', y2, p['wt'])        # (B, C, H, s, W, s)
    up = up.reshape(B, C, H * s, W * s) + p['bt'][None, :, None, None]
    y2 = bn(up, p['bns_g'], p['bns_b'], p['bns_m'], p['bns_v'])
    # Dropout2d: identity in eval mode.

    return prelu(jnp.concatenate([y1, y2], axis=1), p['alpha'])


# ----------------------------------------------------------------------------
if __name__ == "__main__":
    B, Cin, H, W = 2, 4, 16, 16
    Cout, stride = 16, 2

    kp, kx1, kx2 = jax.random.split(jax.random.PRNGKey(0), 3)
    params = init_params(kp, Cin, Cout, stride)
    x1 = jax.random.normal(kx1, (B, Cin, H, W), jnp.float32)
    x2 = jax.random.normal(kx2, (B, Cin, H, W), jnp.float32)

    ref = jax.block_until_ready(reference(x1, x2, params, stride=stride))

    # f32 path (tight numerical agreement with the reference).
    fwd = jax.jit(functools.partial(upsampling_block, stride=stride))
    out = jax.block_until_ready(fwd(x1, x2, params))
    assert out.shape == (B, Cout, H * stride, W * stride), out.shape
    err = float(jnp.max(jnp.abs(out - ref)))
    assert err < 1e-4, f"f32 mismatch vs reference: {err}"

    # bf16 activations / folded matmul weights (v6e/v7x mem-bound recommendation);
    # f32 accumulation and f32 element-wise math (v5e-safe), looser tolerance.
    fwd16 = jax.jit(functools.partial(upsampling_block, stride=stride,
                                      compute_dtype=jnp.bfloat16))
    out16 = jax.block_until_ready(fwd16(x1, x2, params))
    err16 = float(jnp.max(jnp.abs(out16 - ref)))
    assert err16 < 5e-2, f"bf16 mismatch vs reference: {err16}"

    print("KERNEL_OK")
</pallas_src>

<mosaic_0001>
module attributes {stable_mosaic.version = 11 : i64} {
  func.func @_upsampling_kernel(%arg0: i32, %arg1: memref<1x4x256xf32, #tpu.memory_space<vmem>>, %arg2: memref<1x4x256xf32, #tpu.memory_space<vmem>>, %arg3: memref<8x4xf32, #tpu.memory_space<vmem>>, %arg4: memref<8x1xf32, #tpu.memory_space<vmem>>, %arg5: memref<32x4xf32, #tpu.memory_space<vmem>>, %arg6: memref<32x1xf32, #tpu.memory_space<vmem>>, %arg7: memref<32x16xf32, #tpu.memory_space<vmem>>, %arg8: memref<16x32xf32, #tpu.memory_space<vmem>>, %arg9: memref<2x16x32xf32, #tpu.memory_space<vmem>>, %arg10: memref<1xf32, #tpu.memory_space<smem>>, %arg11: memref<1x16x32x32xf32, #tpu.memory_space<vmem>>, %arg12: memref<8x16x32xf32, #tpu.memory_space<vmem>>) attributes {dimension_semantics = [#tpu.dimension_semantics<parallel>], iteration_bounds = array<i64: 2>, scalar_prefetch = 0 : i64, scratch_operands = 1 : i64, tpu.core_type = #tpu.core_type<tc>, window_params = [{transform_indices = @transform_0, window_bounds = array<i64: 1, 4, 256>}, {transform_indices = @transform_1, window_bounds = array<i64: 1, 4, 256>}, {pipeline_mode = #tpu.pipeline_mode<synchronous>, transform_indices = @transform_2, window_bounds = array<i64: 8, 4>}, {pipeline_mode = #tpu.pipeline_mode<synchronous>, transform_indices = @transform_3, window_bounds = array<i64: 8, 1>}, {pipeline_mode = #tpu.pipeline_mode<synchronous>, transform_indices = @transform_4, window_bounds = array<i64: 32, 4>}, {pipeline_mode = #tpu.pipeline_mode<synchronous>, transform_indices = @transform_5, window_bounds = array<i64: 32, 1>}, {pipeline_mode = #tpu.pipeline_mode<synchronous>, transform_indices = @transform_6, window_bounds = array<i64: 32, 16>}, {pipeline_mode = #tpu.pipeline_mode<synchronous>, transform_indices = @transform_7, window_bounds = array<i64: 16, 32>}, {pipeline_mode = #tpu.pipeline_mode<synchronous>, transform_indices = @transform_8, window_bounds = array<i64: 2, 16, 32>}, {transform_indices = @transform_9, window_bounds = array<i64: 1>}, {transform_indices = @transform_10, window_bounds = array<i64: 1, 16, 32, 32>}]} {
    %c0 = arith.constant 0 : index
    %0 = memref.load %arg10[%c0] : memref<1xf32, #tpu.memory_space<smem>>
    %c0_0 = arith.constant 0 : index
    %c0_1 = arith.constant 0 : index
    %1 = vector.load %arg3[%c0_0, %c0_1] : memref<8x4xf32, #tpu.memory_space<vmem>>, vector<8x4xf32>
    %c0_2 = arith.constant 0 : index
    %c0_3 = arith.constant 0 : index
    %c0_4 = arith.constant 0 : index
    %2 = vector.load %arg1[%c0_2, %c0_3, %c0_4] : memref<1x4x256xf32, #tpu.memory_space<vmem>>, vector<1x4x256xf32>
    %3 = vector.shape_cast %2 : vector<1x4x256xf32> to vector<4x256xf32>
    %cst = arith.constant dense<0.000000e+00> : vector<8x256xf32>
    %4 = tpu.matmul %1, %3, %cst {dimension_numbers = #tpu.dot_dimension_numbers<[1], [0], [0], [1], [0, 0, 1, 1], [], []>} : vector<8x4xf32>, vector<4x256xf32>, vector<8x256xf32> -> vector<8x256xf32>
    %c0_5 = arith.constant 0 : index
    %c0_6 = arith.constant 0 : index
    %5 = vector.load %arg4[%c0_5, %c0_6] : memref<8x1xf32, #tpu.memory_space<vmem>>, vector<8x1xf32>
    %6 = vector.broadcast %5 : vector<8x1xf32> to vector<8x256xf32>
    %7 = arith.addf %4, %6 : vector<8x256xf32>
    %c0_7 = arith.constant 0 : index
    %c0_8 = arith.constant 0 : index
    %8 = vector.load %arg5[%c0_7, %c0_8] : memref<32x4xf32, #tpu.memory_space<vmem>>, vector<32x4xf32>
    %c0_9 = arith.constant 0 : index
    %c0_10 = arith.constant 0 : index
    %c0_11 = arith.constant 0 : index
    %9 = vector.load %arg2[%c0_9, %c0_10, %c0_11] : memref<1x4x256xf32, #tpu.memory_space<vmem>>, vector<1x4x256xf32>
    %10 = vector.shape_cast %9 : vector<1x4x256xf32> to vector<4x256xf32>
    %cst_12 = arith.constant dense<0.000000e+00> : vector<32x256xf32>
    %11 = tpu.matmul %8, %10, %cst_12 {dimension_numbers = #tpu.dot_dimension_numbers<[1], [0], [0], [1], [0, 0, 1, 1], [], []>} : vector<32x4xf32>, vector<4x256xf32>, vector<32x256xf32> -> vector<32x256xf32>
    %c0_13 = arith.constant 0 : index
    %c0_14 = arith.constant 0 : index
    %12 = vector.load %arg6[%c0_13, %c0_14] : memref<32x1xf32, #tpu.memory_space<vmem>>, vector<32x1xf32>
    %13 = vector.broadcast %12 : vector<32x1xf32> to vector<32x256xf32>
    %14 = arith.addf %11, %13 : vector<32x256xf32>
    %c0_15 = arith.constant 0 : index
    %c0_16 = arith.constant 0 : index
    %15 = vector.load %arg8[%c0_15, %c0_16] : memref<16x32xf32, #tpu.memory_space<vmem>>, vector<16x32xf32>
    %c0_17 = arith.constant 0 : index
    %c0_18 = arith.constant 0 : index
    %c0_19 = arith.constant 0 : index
    %16 = vector.load %arg9[%c0_17, %c0_18, %c0_19] : memref<2x16x32xf32, #tpu.memory_space<vmem>>, vector<1x16x32xf32>
    %17 = vector.shape_cast %16 : vector<1x16x32xf32> to vector<16x32xf32>
    %c1 = arith.constant 1 : index
    %c0_20 = arith.constant 0 : index
    %c0_21 = arith.constant 0 : index
    %18 = vector.load %arg9[%c1, %c0_20, %c0_21] : memref<2x16x32xf32, #tpu.memory_space<vmem>>, vector<1x16x32xf32>
    %19 = vector.shape_cast %18 : vector<1x16x32xf32> to vector<16x32xf32>
    %20 = vector.extract_strided_slice %7 {offsets = [0, 0], sizes = [8, 16], strides = [1, 1]} : vector<8x256xf32> to vector<8x16xf32>
    %cst_22 = arith.constant dense<0.000000e+00> : vector<8x32xf32>
    %21 = tpu.matmul %20, %15, %cst_22 {dimension_numbers = #tpu.dot_dimension_numbers<[1], [0], [0], [1], [0, 0, 1, 1], [], []>} : vector<8x16xf32>, vector<16x32xf32>, vector<8x32xf32> -> vector<8x32xf32>
    %22 = vector.shape_cast %21 : vector<8x32xf32> to vector<8x1x32xf32>
    %c0_23 = arith.constant 0 : index
    %c0_24 = arith.constant 0 : index
    %c0_25 = arith.constant 0 : index
    %23 = vector.load %arg12[%c0_23, %c0_24, %c0_25] : memref<8x16x32xf32, #tpu.memory_space<vmem>>, vector<8x1x32xf32>
    tpu.vector_store %arg12[%c0_23, %c0_24, %c0_25], %22 {strides = array<i32>} : memref<8x16x32xf32, #tpu.memory_space<vmem>>, vector<8x1x32xf32>,
    %24 = vector.extract_strided_slice %14 {offsets = [0, 0], sizes = [32, 16], strides = [1, 1]} : vector<32x256xf32> to vector<32x16xf32>
    %25 = vector.extract_strided_slice %24 {offsets = [0, 0], sizes = [16, 16], strides = [1, 1]} : vector<32x16xf32> to vector<16x16xf32>
    %cst_26 = arith.constant dense<0.000000e+00> : vector<16x32xf32>
    %26 = tpu.matmul %25, %17, %cst_26 {dimension_numbers = #tpu.dot_dimension_numbers<[1], [0], [0], [1], [0, 0, 1, 1], [], []>} : vector<16x16xf32>, vector<16x32xf32>, vector<16x32xf32> -> vector<16x32xf32>
    %27 = vector.extract_strided_slice %24 {offsets = [16, 0], sizes = [16, 16], strides = [1, 1]} : vector<32x16xf32> to vector<16x16xf32>
    %cst_27 = arith.constant dense<0.000000e+00> : vector<16x32xf32>
    %28 = tpu.matmul %27, %19, %cst_27 {dimension_numbers = #tpu.dot_dimension_numbers<[1], [0], [0], [1], [0, 0, 1, 1], [], []>} : vector<16x16xf32>, vector<16x32xf32>, vector<16x32xf32> -> vector<16x32xf32>
    %29 = arith.addf %26, %28 : vector<16x32xf32>
    %cst_28 = arith.constant 0.000000e+00 : f32
    %30 = vector.broadcast %cst_28 : f32 to vector<16x32xf32>
    %31 = arith.cmpf oge, %29, %30 : vector<16x32xf32>
    %32 = vector.broadcast %0 : f32 to vector<16x32xf32>
    %33 = arith.mulf %32, %29 : vector<16x32xf32>
    %34 = arith.select %31, %29, %33 : vector<16x32xi1>, vector<16x32xf32>
    %35 = vector.extract_strided_slice %34 {offsets = [0, 0], sizes = [8, 32], strides = [1, 1]} : vector<16x32xf32> to vector<8x32xf32>
    %36 = vector.shape_cast %35 : vector<8x32xf32> to vector<8x1x32xf32>
    %c0_29 = arith.constant 0 : index
    %c8 = arith.constant 8 : index
    %c0_30 = arith.constant 0 : index
    %c0_31 = arith.constant 0 : index
    %37 = vector.load %arg11[%c0_29, %c8, %c0_30, %c0_31] : memref<1x16x32x32xf32, #tpu.memory_space<vmem>>, vector<1x8x1x32xf32>
    %38 = vector.shape_cast %37 : vector<1x8x1x32xf32> to vector<8x1x32xf32>
    %39 = vector.shape_cast %36 : vector<8x1x32xf32> to vector<1x8x1x32xf32>
    tpu.vector_store %arg11[%c0_29, %c8, %c0_30, %c0_31], %39 {strides = array<i32>} : memref<1x16x32x32xf32, #tpu.memory_space<vmem>>, vector<1x8x1x32xf32>,
    %40 = vector.extract_strided_slice %34 {offsets = [8, 0], sizes = [8, 32], strides = [1, 1]} : vector<16x32xf32> to vector<8x32xf32>
    %41 = vector.shape_cast %40 : vector<8x32xf32> to vector<8x1x32xf32>
    %c0_32 = arith.constant 0 : index
    %c8_33 = arith.constant 8 : index
    %c1_34 = arith.constant 1 : index
    %c0_35 = arith.constant 0 : index
    %42 = vector.load %arg11[%c0_32, %c8_33, %c1_34, %c0_35] : memref<1x16x32x32xf32, #tpu.memory_space<vmem>>, vector<1x8x1x32xf32>
    %43 = vector.shape_cast %42 : vector<1x8x1x32xf32> to vector<8x1x32xf32>
    %44 = vector.shape_cast %41 : vector<8x1x32xf32> to vector<1x8x1x32xf32>
    tpu.vector_store %arg11[%c0_32, %c8_33, %c1_34, %c0_35], %44 {strides = array<i32>} : memref<1x16x32x32xf32, #tpu.memory_space<vmem>>, vector<1x8x1x32xf32>,
    %45 = vector.extract_strided_slice %7 {offsets = [0, 16], sizes = [8, 16], strides = [1, 1]} : vector<8x256xf32> to vector<8x16xf32>
    %cst_36 = arith.constant dense<0.000000e+00> : vector<8x32xf32>
    %46 = tpu.matmul %45, %15, %cst_36 {dimension_numbers = #tpu.dot_dimension_numbers<[1], [0], [0], [1], [0, 0, 1, 1], [], []>} : vector<8x16xf32>, vector<16x32xf32>, vector<8x32xf32> -> vector<8x32xf32>
    %47 = vector.shape_cast %46 : vector<8x32xf32> to vector<8x1x32xf32>
    %c0_37 = arith.constant 0 : index
    %c1_38 = arith.constant 1 : index
    %c0_39 = arith.constant 0 : index
    %48 = vector.load %arg12[%c0_37, %c1_38, %c0_39] : memref<8x16x32xf32, #tpu.memory_space<vmem>>, vector<8x1x32xf32>
    tpu.vector_store %arg12[%c0_37, %c1_38, %c0_39], %47 {strides = array<i32>} : memref<8x16x32xf32, #tpu.memory_space<vmem>>, vector<8x1x32xf32>,
    %49 = vector.extract_strided_slice %14 {offsets = [0, 16], sizes = [32, 16], strides = [1, 1]} : vector<32x256xf32> to vector<32x16xf32>
    %50 = vector.extract_strided_slice %49 {offsets = [0, 0], sizes = [16, 16], strides = [1, 1]} : vector<32x16xf32> to vector<16x16xf32>
    %cst_40 = arith.constant dense<0.000000e+00> : vector<16x32xf32>
    %51 = tpu.matmul %50, %17, %cst_40 {dimension_numbers = #tpu.dot_dimension_numbers<[1], [0], [0], [1], [0, 0, 1, 1], [], []>} : vector<16x16xf32>, vector<16x32xf32>, vector<16x32xf32> -> vector<16x32xf32>
    %52 = vector.extract_strided_slice %49 {offsets = [16, 0], sizes = [16, 16], strides = [1, 1]} : vector<32x16xf32> to vector<16x16xf32>
    %cst_41 = arith.constant dense<0.000000e+00> : vector<16x32xf32>
    %53 = tpu.matmul %52, %19, %cst_41 {dimension_numbers = #tpu.dot_dimension_numbers<[1], [0], [0], [1], [0, 0, 1, 1], [], []>} : vector<16x16xf32>, vector<16x32xf32>, vector<16x32xf32> -> vector<16x32xf32>
    %54 = arith.addf %51, %53 : vector<16x32xf32>
    %cst_42 = arith.constant 0.000000e+00 : f32
    %55 = vector.broadcast %cst_42 : f32 to vector<16x32xf32>
    %56 = arith.cmpf oge, %54, %55 : vector<16x32xf32>
    %57 = vector.broadcast %0 : f32 to vector<16x32xf32>
    %58 = arith.mulf %57, %54 : vector<16x32xf32>
    %59 = arith.select %56, %54, %58 : vector<16x32xi1>, vector<16x32xf32>
    %60 = vector.extract_strided_slice %59 {offsets = [0, 0], sizes = [8, 32], strides = [1, 1]} : vector<16x32xf32> to vector<8x32xf32>
    %61 = vector.shape_cast %60 : vector<8x32xf32> to vector<8x1x32xf32>
    %c0_43 = arith.constant 0 : index
    %c8_44 = arith.constant 8 : index
    %c2 = arith.constant 2 : index
    %c0_45 = arith.constant 0 : index
    %62 = vector.load %arg11[%c0_43, %c8_44, %c2, %c0_45] : memref<1x16x32x32xf32, #tpu.memory_space<vmem>>, vector<1x8x1x32xf32>
    %63 = vector.shape_cast %62 : vector<1x8x1x32xf32> to vector<8x1x32xf32>
    %64 = vector.shape_cast %61 : vector<8x1x32xf32> to vector<1x8x1x32xf32>
    tpu.vector_store %arg11[%c0_43, %c8_44, %c2, %c0_45], %64 {strides = array<i32>} : memref<1x16x32x32xf32, #tpu.memory_space<vmem>>, vector<1x8x1x32xf32>,
    %65 = vector.extract_strided_slice %59 {offsets = [8, 0], sizes = [8, 32], strides = [1, 1]} : vector<16x32xf32> to vector<8x32xf32>
    %66 = vector.shape_cast %65 : vector<8x32xf32> to vector<8x1x32xf32>
    %c0_46 = arith.constant 0 : index
    %c8_47 = arith.constant 8 : index
    %c3 = arith.constant 3 : index
    %c0_48 = arith.constant 0 : index
    %67 = vector.load %arg11[%c0_46, %c8_47, %c3, %c0_48] : memref<1x16x32x32xf32, #tpu.memory_space<vmem>>, vector<1x8x1x32xf32>
    %68 = vector.shape_cast %67 : vector<1x8x1x32xf32> to vector<8x1x32xf32>
    %69 = vector.shape_cast %66 : vector<8x1x32xf32> to vector<1x8x1x32xf32>
    tpu.vector_store %arg11[%c0_46, %c8_47, %c3, %c0_48], %69 {strides = array<i32>} : memref<1x16x32x32xf32, #tpu.memory_space<vmem>>, vector<1x8x1x32xf32>,
    %70 = vector.extract_strided_slice %7 {offsets = [0, 32], sizes = [8, 16], strides = [1, 1]} : vector<8x256xf32> to vector<8x16xf32>
    %cst_49 = arith.constant dense<0.000000e+00> : vector<8x32xf32>
    %71 = tpu.matmul %70, %15, %cst_49 {dimension_numbers = #tpu.dot_dimension_numbers<[1], [0], [0], [1], [0, 0, 1, 1], [], []>} : vector<8x16xf32>, vector<16x32xf32>, vector<8x32xf32> -> vector<8x32xf32>
    %72 = vector.shape_cast %71 : vector<8x32xf32> to vector<8x1x32xf32>
    %c0_50 = arith.constant 0 : index
    %c2_51 = arith.constant 2 : index
    %c0_52 = arith.constant 0 : index
    %73 = vector.load %arg12[%c0_50, %c2_51, %c0_52] : memref<8x16x32xf32, #tpu.memory_space<vmem>>, vector<8x1x32xf32>
    tpu.vector_store %arg12[%c0_50, %c2_51, %c0_52], %72 {strides = array<i32>} : memref<8x16x32xf32, #tpu.memory_space<vmem>>, vector<8x1x32xf32>,
    %74 = vector.extract_strided_slice %14 {offsets = [0, 32], sizes = [32, 16], strides = [1, 1]} : vector<32x256xf32> to vector<32x16xf32>
    %75 = vector.extract_strided_slice %74 {offsets = [0, 0], sizes = [16, 16], strides = [1, 1]} : vector<32x16xf32> to vector<16x16xf32>
    %cst_53 = arith.constant dense<0.000000e+00> : vector<16x32xf32>
    %76 = tpu.matmul %75, %17, %cst_53 {dimension_numbers = #tpu.dot_dimension_numbers<[1], [0], [0], [1], [0, 0, 1, 1], [], []>} : vector<16x16xf32>, vector<16x32xf32>, vector<16x32xf32> -> vector<16x32xf32>
    %77 = vector.extract_strided_slice %74 {offsets = [16, 0], sizes = [16, 16], strides = [1, 1]} : vector<32x16xf32> to vector<16x16xf32>
    %cst_54 = arith.constant dense<0.000000e+00> : vector<16x32xf32>
    %78 = tpu.matmul %77, %19, %cst_54 {dimension_numbers = #tpu.dot_dimension_numbers<[1], [0], [0], [1], [0, 0, 1, 1], [], []>} : vector<16x16xf32>, vector<16x32xf32>, vector<16x32xf32> -> vector<16x32xf32>
    %79 = arith.addf %76, %78 : vector<16x32xf32>
    %cst_55 = arith.constant 0.000000e+00 : f32
    %80 = vector.broadcast %cst_55 : f32 to vector<16x32xf32>
    %81 = arith.cmpf oge, %79, %80 : vector<16x32xf32>
    %82 = vector.broadcast %0 : f32 to vector<16x32xf32>
    %83 = arith.mulf %82, %79 : vector<16x32xf32>
    %84 = arith.select %81, %79, %83 : vector<16x32xi1>, vector<16x32xf32>
    %85 = vector.extract_strided_slice %84 {offsets = [0, 0], sizes = [8, 32], strides = [1, 1]} : vector<16x32xf32> to vector<8x32xf32>
    %86 = vector.shape_cast %85 : vector<8x32xf32> to vector<8x1x32xf32>
    %c0_56 = arith.constant 0 : index
    %c8_57 = arith.constant 8 : index
    %c4 = arith.constant 4 : index
    %c0_58 = arith.constant 0 : index
    %87 = vector.load %arg11[%c0_56, %c8_57, %c4, %c0_58] : memref<1x16x32x32xf32, #tpu.memory_space<vmem>>, vector<1x8x1x32xf32>
    %88 = vector.shape_cast %87 : vector<1x8x1x32xf32> to vector<8x1x32xf32>
    %89 = vector.shape_cast %86 : vector<8x1x32xf32> to vector<1x8x1x32xf32>
    tpu.vector_store %arg11[%c0_56, %c8_57, %c4, %c0_58], %89 {strides = array<i32>} : memref<1x16x32x32xf32, #tpu.memory_space<vmem>>, vector<1x8x1x32xf32>,
    %90 = vector.extract_strided_slice %84 {offsets = [8, 0], sizes = [8, 32], strides = [1, 1]} : vector<16x32xf32> to vector<8x32xf32>
    %91 = vector.shape_cast %90 : vector<8x32xf32> to vector<8x1x32xf32>
    %c0_59 = arith.constant 0 : index
    %c8_60 = arith.constant 8 : index
    %c5 = arith.constant 5 : index
    %c0_61 = arith.constant 0 : index
    %92 = vector.load %arg11[%c0_59, %c8_60, %c5, %c0_61] : memref<1x16x32x32xf32, #tpu.memory_space<vmem>>, vector<1x8x1x32xf32>
    %93 = vector.shape_cast %92 : vector<1x8x1x32xf32> to vector<8x1x32xf32>
    %94 = vector.shape_cast %91 : vector<8x1x32xf32> to vector<1x8x1x32xf32>
    tpu.vector_store %arg11[%c0_59, %c8_60, %c5, %c0_61], %94 {strides = array<i32>} : memref<1x16x32x32xf32, #tpu.memory_space<vmem>>, vector<1x8x1x32xf32>,
    %95 = vector.extract_strided_slice %7 {offsets = [0, 48], sizes = [8, 16], strides = [1, 1]} : vector<8x256xf32> to vector<8x16xf32>
    %cst_62 = arith.constant dense<0.000000e+00> : vector<8x32xf32>
    %96 = tpu.matmul %95, %15, %cst_62 {dimension_numbers = #tpu.dot_dimension_numbers<[1], [0], [0], [1], [0, 0, 1, 1], [], []>} : vector<8x16xf32>, vector<16x32xf32>, vector<8x32xf32> -> vector<8x32xf32>
    %97 = vector.shape_cast %96 : vector<8x32xf32> to vector<8x1x32xf32>
    %c0_63 = arith.constant 0 : index
    %c3_64 = arith.constant 3 : index
    %c0_65 = arith.constant 0 : index
    %98 = vector.load %arg12[%c0_63, %c3_64, %c0_65] : memref<8x16x32xf32, #tpu.memory_space<vmem>>, vector<8x1x32xf32>
    tpu.vector_store %arg12[%c0_63, %c3_64, %c0_65], %97 {strides = array<i32>} : memref<8x16x32xf32, #tpu.memory_space<vmem>>, vector<8x1x32xf32>,
    %99 = vector.extract_strided_slice %14 {offsets = [0, 48], sizes = [32, 16], strides = [1, 1]} : vector<32x256xf32> to vector<32x16xf32>
    %100 = vector.extract_strided_slice %99 {offsets = [0, 0], sizes = [16, 16], strides = [1, 1]} : vector<32x16xf32> to vector<16x16xf32>
    %cst_66 = arith.constant dense<0.000000e+00> : vector<16x32xf32>
    %101 = tpu.matmul %100, %17, %cst_66 {dimension_numbers = #tpu.dot_dimension_numbers<[1], [0], [0], [1], [0, 0, 1, 1], [], []>} : vector<16x16xf32>, vector<16x32xf32>, vector<16x32xf32> -> vector<16x32xf32>
    %102 = vector.extract_strided_slice %99 {offsets = [16, 0], sizes = [16, 16], strides = [1, 1]} : vector<32x16xf32> to vector<16x16xf32>
    %cst_67 = arith.constant dense<0.000000e+00> : vector<16x32xf32>
    %103 = tpu.matmul %102, %19, %cst_67 {dimension_numbers = #tpu.dot_dimension_numbers<[1], [0], [0], [1], [0, 0, 1, 1], [], []>} : vector<16x16xf32>, vector<16x32xf32>, vector<16x32xf32> -> vector<16x32xf32>
    %104 = arith.addf %101, %103 : vector<16x32xf32>
    %cst_68 = arith.constant 0.000000e+00 : f32
    %105 = vector.broadcast %cst_68 : f32 to vector<16x32xf32>
    %106 = arith.cmpf oge, %104, %105 : vector<16x32xf32>
    %107 = vector.broadcast %0 : f32 to vector<16x32xf32>
    %108 = arith.mulf %107, %104 : vector<16x32xf32>
    %109 = arith.select %106, %104, %108 : vector<16x32xi1>, vector<16x32xf32>
    %110 = vector.extract_strided_slice %109 {offsets = [0, 0], sizes = [8, 32], strides = [1, 1]} : vector<16x32xf32> to vector<8x32xf32>
    %111 = vector.shape_cast %110 : vector<8x32xf32> to vector<8x1x32xf32>
    %c0_69 = arith.constant 0 : index
    %c8_70 = arith.constant 8 : index
    %c6 = arith.constant 6 : index
    %c0_71 = arith.constant 0 : index
    %112 = vector.load %arg11[%c0_69, %c8_70, %c6, %c0_71] : memref<1x16x32x32xf32, #tpu.memory_space<vmem>>, vector<1x8x1x32xf32>
    %113 = vector.shape_cast %112 : vector<1x8x1x32xf32> to vector<8x1x32xf32>
    %114 = vector.shape_cast %111 : vector<8x1x32xf32> to vector<1x8x1x32xf32>
    tpu.vector_store %arg11[%c0_69, %c8_70, %c6, %c0_71], %114 {strides = array<i32>} : memref<1x16x32x32xf32, #tpu.memory_space<vmem>>, vector<1x8x1x32xf32>,
    %115 = vector.extract_strided_slice %109 {offsets = [8, 0], sizes = [8, 32], strides = [1, 1]} : vector<16x32xf32> to vector<8x32xf32>
    %116 = vector.shape_cast %115 : vector<8x32xf32> to vector<8x1x32xf32>
    %c0_72 = arith.constant 0 : index
    %c8_73 = arith.constant 8 : index
    %c7 = arith.constant 7 : index
    %c0_74 = arith.constant 0 : index
    %117 = vector.load %arg11[%c0_72, %c8_73, %c7, %c0_74] : memref<1x16x32x32xf32, #tpu.memory_space<vmem>>, vector<1x8x1x32xf32>
    %118 = vector.shape_cast %117 : vector<1x8x1x32xf32> to vector<8x1x32xf32>
    %119 = vector.shape_cast %116 : vector<8x1x32xf32> to vector<1x8x1x32xf32>
    tpu.vector_store %arg11[%c0_72, %c8_73, %c7, %c0_74], %119 {strides = array<i32>} : memref<1x16x32x32xf32, #tpu.memory_space<vmem>>, vector<1x8x1x32xf32>,
    %120 = vector.extract_strided_slice %7 {offsets = [0, 64], sizes = [8, 16], strides = [1, 1]} : vector<8x256xf32> to vector<8x16xf32>
    %cst_75 = arith.constant dense<0.000000e+00> : vector<8x32xf32>
    %121 = tpu.matmul %120, %15, %cst_75 {dimension_numbers = #tpu.dot_dimension_numbers<[1], [0], [0], [1], [0, 0, 1, 1], [], []>} : vector<8x16xf32>, vector<16x32xf32>, vector<8x32xf32> -> vector<8x32xf32>
    %122 = vector.shape_cast %121 : vector<8x32xf32> to vector<8x1x32xf32>
    %c0_76 = arith.constant 0 : index
    %c4_77 = arith.constant 4 : index
    %c0_78 = arith.constant 0 : index
    %123 = vector.load %arg12[%c0_76, %c4_77, %c0_78] : memref<8x16x32xf32, #tpu.memory_space<vmem>>, vector<8x1x32xf32>
    tpu.vector_store %arg12[%c0_76, %c4_77, %c0_78], %122 {strides = array<i32>} : memref<8x16x32xf32, #tpu.memory_space<vmem>>, vector<8x1x32xf32>,
    %124 = vector.extract_strided_slice %14 {offsets = [0, 64], sizes = [32, 16], strides = [1, 1]} : vector<32x256xf32> to vector<32x16xf32>
    %125 = vector.extract_strided_slice %124 {offsets = [0, 0], sizes = [16, 16], strides = [1, 1]} : vector<32x16xf32> to vector<16x16xf32>
    %cst_79 = arith.constant dense<0.000000e+00> : vector<16x32xf32>
    %126 = tpu.matmul %125, %17, %cst_79 {dimension_numbers = #tpu.dot_dimension_numbers<[1], [0], [0], [1], [0, 0, 1, 1], [], []>} : vector<16x16xf32>, vector<16x32xf32>, vector<16x32xf32> -> vector<16x32xf32>
    %127 = vector.extract_strided_slice %124 {offsets = [16, 0], sizes = [16, 16], strides = [1, 1]} : vector<32x16xf32> to vector<16x16xf32>
    %cst_80 = arith.constant dense<0.000000e+00> : vector<16x32xf32>
    %128 = tpu.matmul %127, %19, %cst_80 {dimension_numbers = #tpu.dot_dimension_numbers<[1], [0], [0], [1], [0, 0, 1, 1], [], []>} : vector<16x16xf32>, vector<16x32xf32>, vector<16x32xf32> -> vector<16x32xf32>
    %129 = arith.addf %126, %128 : vector<16x32xf32>
    %cst_81 = arith.constant 0.000000e+00 : f32
    %130 = vector.broadcast %cst_81 : f32 to vector<16x32xf32>
    %131 = arith.cmpf oge, %129, %130 : vector<16x32xf32>
    %132 = vector.broadcast %0 : f32 to vector<16x32xf32>
    %133 = arith.mulf %132, %129 : vector<16x32xf32>
    %134 = arith.select %131, %129, %133 : vector<16x32xi1>, vector<16x32xf32>
    %135 = vector.extract_strided_slice %134 {offsets = [0, 0], sizes = [8, 32], strides = [1, 1]} : vector<16x32xf32> to vector<8x32xf32>
    %136 = vector.shape_cast %135 : vector<8x32xf32> to vector<8x1x32xf32>
    %c0_82 = arith.constant 0 : index
    %c8_83 = arith.constant 8 : index
    %c8_84 = arith.constant 8 : index
    %c0_85 = arith.constant 0 : index
    %137 = vector.load %arg11[%c0_82, %c8_83, %c8_84, %c0_85] : memref<1x16x32x32xf32, #tpu.memory_space<vmem>>, vector<1x8x1x32xf32>
    %138 = vector.shape_cast %137 : vector<1x8x1x32xf32> to vector<8x1x32xf32>
    %139 = vector.shape_cast %136 : vector<8x1x32xf32> to vector<1x8x1x32xf32>
    tpu.vector_store %arg11[%c0_82, %c8_83, %c8_84, %c0_85], %139 {strides = array<i32>} : memref<1x16x32x32xf32, #tpu.memory_space<vmem>>, vector<1x8x1x32xf32>,
    %140 = vector.extract_strided_slice %134 {offsets = [8, 0], sizes = [8, 32], strides = [1, 1]} : vector<16x32xf32> to vector<8x32xf32>
    %141 = vector.shape_cast %140 : vector<8x32xf32> to vector<8x1x32xf32>
    %c0_86 = arith.constant 0 : index
    %c8_87 = arith.constant 8 : index
    %c9 = arith.constant 9 : index
    %c0_88 = arith.constant 0 : index
    %142 = vector.load %arg11[%c0_86, %c8_87, %c9, %c0_88] : memref<1x16x32x32xf32, #tpu.memory_space<vmem>>, vector<1x8x1x32xf32>
    %143 = vector.shape_cast %142 : vector<1x8x1x32xf32> to vector<8x1x32xf32>
    %144 = vector.shape_cast %141 : vector<8x1x32xf32> to vector<1x8x1x32xf32>
    tpu.vector_store %arg11[%c0_86, %c8_87, %c9, %c0_88], %144 {strides = array<i32>} : memref<1x16x32x32xf32, #tpu.memory_space<vmem>>, vector<1x8x1x32xf32>,
    %145 = vector.extract_strided_slice %7 {offsets = [0, 80], sizes = [8, 16], strides = [1, 1]} : vector<8x256xf32> to vector<8x16xf32>
    %cst_89 = arith.constant dense<0.000000e+00> : vector<8x32xf32>
    %146 = tpu.matmul %145, %15, %cst_89 {dimension_numbers = #tpu.dot_dimension_numbers<[1], [0], [0], [1], [0, 0, 1, 1], [], []>} : vector<8x16xf32>, vector<16x32xf32>, vector<8x32xf32> -> vector<8x32xf32>
    %147 = vector.shape_cast %146 : vector<8x32xf32> to vector<8x1x32xf32>
    %c0_90 = arith.constant 0 : index
    %c5_91 = arith.constant 5 : index
    %c0_92 = arith.constant 0 : index
    %148 = vector.load %arg12[%c0_90, %c5_91, %c0_92] : memref<8x16x32xf32, #tpu.memory_space<vmem>>, vector<8x1x32xf32>
    tpu.vector_store %arg12[%c0_90, %c5_91, %c0_92], %147 {strides = array<i32>} : memref<8x16x32xf32, #tpu.memory_space<vmem>>, vector<8x1x32xf32>,
    %149 = vector.extract_strided_slice %14 {offsets = [0, 80], sizes = [32, 16], strides = [1, 1]} : vector<32x256xf32> to vector<32x16xf32>
    %150 = vector.extract_strided_slice %149 {offsets = [0, 0], sizes = [16, 16], strides = [1, 1]} : vector<32x16xf32> to vector<16x16xf32>
    %cst_93 = arith.constant dense<0.000000e+00> : vector<16x32xf32>
    %151 = tpu.matmul %150, %17, %cst_93 {dimension_numbers = #tpu.dot_dimension_numbers<[1], [0], [0], [1], [0, 0, 1, 1], [], []>} : vector<16x16xf32>, vector<16x32xf32>, vector<16x32xf32> -> vector<16x32xf32>
    %152 = vector.extract_strided_slice %149 {offsets = [16, 0], sizes = [16, 16], strides = [1, 1]} : vector<32x16xf32> to vector<16x16xf32>
    %cst_94 = arith.constant dense<0.000000e+00> : vector<16x32xf32>
    %153 = tpu.matmul %152, %19, %cst_94 {dimension_numbers = #tpu.dot_dimension_numbers<[1], [0], [0], [1], [0, 0, 1, 1], [], []>} : vector<16x16xf32>, vector<16x32xf32>, vector<16x32xf32> -> vector<16x32xf32>
    %154 = arith.addf %151, %153 : vector<16x32xf32>
    %cst_95 = arith.constant 0.000000e+00 : f32
    %155 = vector.broadcast %cst_95 : f32 to vector<16x32xf32>
    %156 = arith.cmpf oge, %154, %155 : vector<16x32xf32>
    %157 = vector.broadcast %0 : f32 to vector<16x32xf32>
    %158 = arith.mulf %157, %154 : vector<16x32xf32>
    %159 = arith.select %156, %154, %158 : vector<16x32xi1>, vector<16x32xf32>
    %160 = vector.extract_strided_slice %159 {offsets = [0, 0], sizes = [8, 32], strides = [1, 1]} : vector<16x32xf32> to vector<8x32xf32>
    %161 = vector.shape_cast %160 : vector<8x32xf32> to vector<8x1x32xf32>
    %c0_96 = arith.constant 0 : index
    %c8_97 = arith.constant 8 : index
    %c10 = arith.constant 10 : index
    %c0_98 = arith.constant 0 : index
    %162 = vector.load %arg11[%c0_96, %c8_97, %c10, %c0_98] : memref<1x16x32x32xf32, #tpu.memory_space<vmem>>, vector<1x8x1x32xf32>
    %163 = vector.shape_cast %162 : vector<1x8x1x32xf32> to vector<8x1x32xf32>
    %164 = vector.shape_cast %161 : vector<8x1x32xf32> to vector<1x8x1x32xf32>
    tpu.vector_store %arg11[%c0_96, %c8_97, %c10, %c0_98], %164 {strides = array<i32>} : memref<1x16x32x32xf32, #tpu.memory_space<vmem>>, vector<1x8x1x32xf32>,
    %165 = vector.extract_strided_slice %159 {offsets = [8, 0], sizes = [8, 32], strides = [1, 1]} : vector<16x32xf32> to vector<8x32xf32>
    %166 = vector.shape_cast %165 : vector<8x32xf32> to vector<8x1x32xf32>
    %c0_99 = arith.constant 0 : index
    %c8_100 = arith.constant 8 : index
    %c11 = arith.constant 11 : index
    %c0_101 = arith.constant 0 : index
    %167 = vector.load %arg11[%c0_99, %c8_100, %c11, %c0_101] : memref<1x16x32x32xf32, #tpu.memory_space<vmem>>, vector<1x8x1x32xf32>
    %168 = vector.shape_cast %167 : vector<1x8x1x32xf32> to vector<8x1x32xf32>
    %169 = vector.shape_cast %166 : vector<8x1x32xf32> to vector<1x8x1x32xf32>
    tpu.vector_store %arg11[%c0_99, %c8_100, %c11, %c0_101], %169 {strides = array<i32>} : memref<1x16x32x32xf32, #tpu.memory_space<vmem>>, vector<1x8x1x32xf32>,
    %170 = vector.extract_strided_slice %7 {offsets = [0, 96], sizes = [8, 16], strides = [1, 1]} : vector<8x256xf32> to vector<8x16xf32>
    %cst_102 = arith.constant dense<0.000000e+00> : vector<8x32xf32>
    %171 = tpu.matmul %170, %15, %cst_102 {dimension_numbers = #tpu.dot_dimension_numbers<[1], [0], [0], [1], [0, 0, 1, 1], [], []>} : vector<8x16xf32>, vector<16x32xf32>, vector<8x32xf32> -> vector<8x32xf32>
    %172 = vector.shape_cast %171 : vector<8x32xf32> to vector<8x1x32xf32>
    %c0_103 = arith.constant 0 : index
    %c6_104 = arith.constant 6 : index
    %c0_105 = arith.constant 0 : index
    %173 = vector.load %arg12[%c0_103, %c6_104, %c0_105] : memref<8x16x32xf32, #tpu.memory_space<vmem>>, vector<8x1x32xf32>
    tpu.vector_store %arg12[%c0_103, %c6_104, %c0_105], %172 {strides = array<i32>} : memref<8x16x32xf32, #tpu.memory_space<vmem>>, vector<8x1x32xf32>,
    %174 = vector.extract_strided_slice %14 {offsets = [0, 96], sizes = [32, 16], strides = [1, 1]} : vector<32x256xf32> to vector<32x16xf32>
    %175 = vector.extract_strided_slice %174 {offsets = [0, 0], sizes = [16, 16], strides = [1, 1]} : vector<32x16xf32> to vector<16x16xf32>
    %cst_106 = arith.constant dense<0.000000e+00> : vector<16x32xf32>
    %176 = tpu.matmul %175, %17, %cst_106 {dimension_numbers = #tpu.dot_dimension_numbers<[1], [0], [0], [1], [0, 0, 1, 1], [], []>} : vector<16x16xf32>, vector<16x32xf32>, vector<16x32xf32> -> vector<16x32xf32>
    %177 = vector.extract_strided_slice %174 {offsets = [16, 0], sizes = [16, 16], strides = [1, 1]} : vector<32x16xf32> to vector<16x16xf32>
    %cst_107 = arith.constant dense<0.000000e+00> : vector<16x32xf32>
    %178 = tpu.matmul %177, %19, %cst_107 {dimension_numbers = #tpu.dot_dimension_numbers<[1], [0], [0], [1], [0, 0, 1, 1], [], []>} : vector<16x16xf32>, vector<16x32xf32>, vector<16x32xf32> -> vector<16x32xf32>
    %179 = arith.addf %176, %178 : vector<16x32xf32>
    %cst_108 = arith.constant 0.000000e+00 : f32
    %180 = vector.broadcast %cst_108 : f32 to vector<16x32xf32>
    %181 = arith.cmpf oge, %179, %180 : vector<16x32xf32>
    %182 = vector.broadcast %0 : f32 to vector<16x32xf32>
    %183 = arith.mulf %182, %179 : vector<16x32xf32>
    %184 = arith.select %181, %179, %183 : vector<16x32xi1>, vector<16x32xf32>
    %185 = vector.extract_strided_slice %184 {offsets = [0, 0], sizes = [8, 32], strides = [1, 1]} : vector<16x32xf32> to vector<8x32xf32>
    %186 = vector.shape_cast %185 : vector<8x32xf32> to vector<8x1x32xf32>
    %c0_109 = arith.constant 0 : index
    %c8_110 = arith.constant 8 : index
    %c12 = arith.constant 12 : index
    %c0_111 = arith.constant 0 : index
    %187 = vector.load %arg11[%c0_109, %c8_110, %c12, %c0_111] : memref<1x16x32x32xf32, #tpu.memory_space<vmem>>, vector<1x8x1x32xf32>
    %188 = vector.shape_cast %187 : vector<1x8x1x32xf32> to vector<8x1x32xf32>
    %189 = vector.shape_cast %186 : vector<8x1x32xf32> to vector<1x8x1x32xf32>
    tpu.vector_store %arg11[%c0_109, %c8_110, %c12, %c0_111], %189 {strides = array<i32>} : memref<1x16x32x32xf32, #tpu.memory_space<vmem>>, vector<1x8x1x32xf32>,
    %190 = vector.extract_strided_slice %184 {offsets = [8, 0], sizes = [8, 32], strides = [1, 1]} : vector<16x32xf32> to vector<8x32xf32>
    %191 = vector.shape_cast %190 : vector<8x32xf32> to vector<8x1x32xf32>
    %c0_112 = arith.constant 0 : index
    %c8_113 = arith.constant 8 : index
    %c13 = arith.constant 13 : index
    %c0_114 = arith.constant 0 : index
    %192 = vector.load %arg11[%c0_112, %c8_113, %c13, %c0_114] : memref<1x16x32x32xf32, #tpu.memory_space<vmem>>, vector<1x8x1x32xf32>
    %193 = vector.shape_cast %192 : vector<1x8x1x32xf32> to vector<8x1x32xf32>
    %194 = vector.shape_cast %191 : vector<8x1x32xf32> to vector<1x8x1x32xf32>
    tpu.vector_store %arg11[%c0_112, %c8_113, %c13, %c0_114], %194 {strides = array<i32>} : memref<1x16x32x32xf32, #tpu.memory_space<vmem>>, vector<1x8x1x32xf32>,
    %195 = vector.extract_strided_slice %7 {offsets = [0, 112], sizes = [8, 16], strides = [1, 1]} : vector<8x256xf32> to vector<8x16xf32>
    %cst_115 = arith.constant dense<0.000000e+00> : vector<8x32xf32>
    %196 = tpu.matmul %195, %15, %cst_115 {dimension_numbers = #tpu.dot_dimension_numbers<[1], [0], [0], [1], [0, 0, 1, 1], [], []>} : vector<8x16xf32>, vector<16x32xf32>, vector<8x32xf32> -> vector<8x32xf32>
    %197 = vector.shape_cast %196 : vector<8x32xf32> to vector<8x1x32xf32>
    %c0_116 = arith.constant 0 : index
    %c7_117 = arith.constant 7 : index
    %c0_118 = arith.constant 0 : index
    %198 = vector.load %arg12[%c0_116, %c7_117, %c0_118] : memref<8x16x32xf32, #tpu.memory_space<vmem>>, vector<8x1x32xf32>
    tpu.vector_store %arg12[%c0_116, %c7_117, %c0_118], %197 {strides = array<i32>} : memref<8x16x32xf32, #tpu.memory_space<vmem>>, vector<8x1x32xf32>,
    %199 = vector.extract_strided_slice %14 {offsets = [0, 112], sizes = [32, 16], strides = [1, 1]} : vector<32x256xf32> to vector<32x16xf32>
    %200 = vector.extract_strided_slice %199 {offsets = [0, 0], sizes = [16, 16], strides = [1, 1]} : vector<32x16xf32> to vector<16x16xf32>
    %cst_119 = arith.constant dense<0.000000e+00> : vector<16x32xf32>
    %201 = tpu.matmul %200, %17, %cst_119 {dimension_numbers = #tpu.dot_dimension_numbers<[1], [0], [0], [1], [0, 0, 1, 1], [], []>} : vector<16x16xf32>, vector<16x32xf32>, vector<16x32xf32> -> vector<16x32xf32>
    %202 = vector.extract_strided_slice %199 {offsets = [16, 0], sizes = [16, 16], strides = [1, 1]} : vector<32x16xf32> to vector<16x16xf32>
    %cst_120 = arith.constant dense<0.000000e+00> : vector<16x32xf32>
    %203 = tpu.matmul %202, %19, %cst_120 {dimension_numbers = #tpu.dot_dimension_numbers<[1], [0], [0], [1], [0, 0, 1, 1], [], []>} : vector<16x16xf32>, vector<16x32xf32>, vector<16x32xf32> -> vector<16x32xf32>
    %204 = arith.addf %201, %203 : vector<16x32xf32>
    %cst_121 = arith.constant 0.000000e+00 : f32
    %205 = vector.broadcast %cst_121 : f32 to vector<16x32xf32>
    %206 = arith.cmpf oge, %204, %205 : vector<16x32xf32>
    %207 = vector.broadcast %0 : f32 to vector<16x32xf32>
    %208 = arith.mulf %207, %204 : vector<16x32xf32>
    %209 = arith.select %206, %204, %208 : vector<16x32xi1>, vector<16x32xf32>
    %210 = vector.extract_strided_slice %209 {offsets = [0, 0], sizes = [8, 32], strides = [1, 1]} : vector<16x32xf32> to vector<8x32xf32>
    %211 = vector.shape_cast %210 : vector<8x32xf32> to vector<8x1x32xf32>
    %c0_122 = arith.constant 0 : index
    %c8_123 = arith.constant 8 : index
    %c14 = arith.constant 14 : index
    %c0_124 = arith.constant 0 : index
    %212 = vector.load %arg11[%c0_122, %c8_123, %c14, %c0_124] : memref<1x16x32x32xf32, #tpu.memory_space<vmem>>, vector<1x8x1x32xf32>
    %213 = vector.shape_cast %212 : vector<1x8x1x32xf32> to vector<8x1x32xf32>
    %214 = vector.shape_cast %211 : vector<8x1x32xf32> to vector<1x8x1x32xf32>
    tpu.vector_store %arg11[%c0_122, %c8_123, %c14, %c0_124], %214 {strides = array<i32>} : memref<1x16x32x32xf32, #tpu.memory_space<vmem>>, vector<1x8x1x32xf32>,
    %215 = vector.extract_strided_slice %209 {offsets = [8, 0], sizes = [8, 32], strides = [1, 1]} : vector<16x32xf32> to vector<8x32xf32>
    %216 = vector.shape_cast %215 : vector<8x32xf32> to vector<8x1x32xf32>
    %c0_125 = arith.constant 0 : index
    %c8_126 = arith.constant 8 : index
    %c15 = arith.constant 15 : index
    %c0_127 = arith.constant 0 : index
    %217 = vector.load %arg11[%c0_125, %c8_126, %c15, %c0_127] : memref<1x16x32x32xf32, #tpu.memory_space<vmem>>, vector<1x8x1x32xf32>
    %218 = vector.shape_cast %217 : vector<1x8x1x32xf32> to vector<8x1x32xf32>
    %219 = vector.shape_cast %216 : vector<8x1x32xf32> to vector<1x8x1x32xf32>
    tpu.vector_store %arg11[%c0_125, %c8_126, %c15, %c0_127], %219 {strides = array<i32>} : memref<1x16x32x32xf32, #tpu.memory_space<vmem>>, vector<1x8x1x32xf32>,
    %220 = vector.extract_strided_slice %7 {offsets = [0, 128], sizes = [8, 16], strides = [1, 1]} : vector<8x256xf32> to vector<8x16xf32>
    %cst_128 = arith.constant dense<0.000000e+00> : vector<8x32xf32>
    %221 = tpu.matmul %220, %15, %cst_128 {dimension_numbers = #tpu.dot_dimension_numbers<[1], [0], [0], [1], [0, 0, 1, 1], [], []>} : vector<8x16xf32>, vector<16x32xf32>, vector<8x32xf32> -> vector<8x32xf32>
    %222 = vector.shape_cast %221 : vector<8x32xf32> to vector<8x1x32xf32>
    %c0_129 = arith.constant 0 : index
    %c8_130 = arith.constant 8 : index
    %c0_131 = arith.constant 0 : index
    %223 = vector.load %arg12[%c0_129, %c8_130, %c0_131] : memref<8x16x32xf32, #tpu.memory_space<vmem>>, vector<8x1x32xf32>
    tpu.vector_store %arg12[%c0_129, %c8_130, %c0_131], %222 {strides = array<i32>} : memref<8x16x32xf32, #tpu.memory_space<vmem>>, vector<8x1x32xf32>,
    %224 = vector.extract_strided_slice %14 {offsets = [0, 128], sizes = [32, 16], strides = [1, 1]} : vector<32x256xf32> to vector<32x16xf32>
    %225 = vector.extract_strided_slice %224 {offsets = [0, 0], sizes = [16, 16], strides = [1, 1]} : vector<32x16xf32> to vector<16x16xf32>
    %cst_132 = arith.constant dense<0.000000e+00> : vector<16x32xf32>
    %226 = tpu.matmul %225, %17, %cst_132 {dimension_numbers = #tpu.dot_dimension_numbers<[1], [0], [0], [1], [0, 0, 1, 1], [], []>} : vector<16x16xf32>, vector<16x32xf32>, vector<16x32xf32> -> vector<16x32xf32>
    %227 = vector.extract_strided_slice %224 {offsets = [16, 0], sizes = [16, 16], strides = [1, 1]} : vector<32x16xf32> to vector<16x16xf32>
    %cst_133 = arith.constant dense<0.000000e+00> : vector<16x32xf32>
    %228 = tpu.matmul %227, %19, %cst_133 {dimension_numbers = #tpu.dot_dimension_numbers<[1], [0], [0], [1], [0, 0, 1, 1], [], []>} : vector<16x16xf32>, vector<16x32xf32>, vector<16x32xf32> -> vector<16x32xf32>
    %229 = arith.addf %226, %228 : vector<16x32xf32>
    %cst_134 = arith.constant 0.000000e+00 : f32
    %230 = vector.broadcast %cst_134 : f32 to vector<16x32xf32>
    %231 = arith.cmpf oge, %229, %230 : vector<16x32xf32>
    %232 = vector.broadcast %0 : f32 to vector<16x32xf32>
    %233 = arith.mulf %232, %229 : vector<16x32xf32>
    %234 = arith.select %231, %229, %233 : vector<16x32xi1>, vector<16x32xf32>
    %235 = vector.extract_strided_slice %234 {offsets = [0, 0], sizes = [8, 32], strides = [1, 1]} : vector<16x32xf32> to vector<8x32xf32>
    %236 = vector.shape_cast %235 : vector<8x32xf32> to vector<8x1x32xf32>
    %c0_135 = arith.constant 0 : index
    %c8_136 = arith.constant 8 : index
    %c16 = arith.constant 16 : index
    %c0_137 = arith.constant 0 : index
    %237 = vector.load %arg11[%c0_135, %c8_136, %c16, %c0_137] : memref<1x16x32x32xf32, #tpu.memory_space<vmem>>, vector<1x8x1x32xf32>
    %238 = vector.shape_cast %237 : vector<1x8x1x32xf32> to vector<8x1x32xf32>
    %239 = vector.shape_cast %236 : vector<8x1x32xf32> to vector<1x8x1x32xf32>
    tpu.vector_store %arg11[%c0_135, %c8_136, %c16, %c0_137], %239 {strides = array<i32>} : memref<1x16x32x32xf32, #tpu.memory_space<vmem>>, vector<1x8x1x32xf32>,
    %240 = vector.extract_strided_slice %234 {offsets = [8, 0], sizes = [8, 32], strides = [1, 1]} : vector<16x32xf32> to vector<8x32xf32>
    %241 = vector.shape_cast %240 : vector<8x32xf32> to vector<8x1x32xf32>
    %c0_138 = arith.constant 0 : index
    %c8_139 = arith.constant 8 : index
    %c17 = arith.constant 17 : index
    %c0_140 = arith.constant 0 : index
    %242 = vector.load %arg11[%c0_138, %c8_139, %c17, %c0_140] : memref<1x16x32x32xf32, #tpu.memory_space<vmem>>, vector<1x8x1x32xf32>
    %243 = vector.shape_cast %242 : vector<1x8x1x32xf32> to vector<8x1x32xf32>
    %244 = vector.shape_cast %241 : vector<8x1x32xf32> to vector<1x8x1x32xf32>
    tpu.vector_store %arg11[%c0_138, %c8_139, %c17, %c0_140], %244 {strides = array<i32>} : memref<1x16x32x32xf32, #tpu.memory_space<vmem>>, vector<1x8x1x32xf32>,
    %245 = vector.extract_strided_slice %7 {offsets = [0, 144], sizes = [8, 16], strides = [1, 1]} : vector<8x256xf32> to vector<8x16xf32>
    %cst_141 = arith.constant dense<0.000000e+00> : vector<8x32xf32>
    %246 = tpu.matmul %245, %15, %cst_141 {dimension_numbers = #tpu.dot_dimension_numbers<[1], [0], [0], [1], [0, 0, 1, 1], [], []>} : vector<8x16xf32>, vector<16x32xf32>, vector<8x32xf32> -> vector<8x32xf32>
    %247 = vector.shape_cast %246 : vector<8x32xf32> to vector<8x1x32xf32>
    %c0_142 = arith.constant 0 : index
    %c9_143 = arith.constant 9 : index
    %c0_144 = arith.constant 0 : index
    %248 = vector.load %arg12[%c0_142, %c9_143, %c0_144] : memref<8x16x32xf32, #tpu.memory_space<vmem>>, vector<8x1x32xf32>
    tpu.vector_store %arg12[%c0_142, %c9_143, %c0_144], %247 {strides = array<i32>} : memref<8x16x32xf32, #tpu.memory_space<vmem>>, vector<8x1x32xf32>,
    %249 = vector.extract_strided_slice %14 {offsets = [0, 144], sizes = [32, 16], strides = [1, 1]} : vector<32x256xf32> to vector<32x16xf32>
    %250 = vector.extract_strided_slice %249 {offsets = [0, 0], sizes = [16, 16], strides = [1, 1]} : vector<32x16xf32> to vector<16x16xf32>
    %cst_145 = arith.constant dense<0.000000e+00> : vector<16x32xf32>
    %251 = tpu.matmul %250, %17, %cst_145 {dimension_numbers = #tpu.dot_dimension_numbers<[1], [0], [0], [1], [0, 0, 1, 1], [], []>} : vector<16x16xf32>, vector<16x32xf32>, vector<16x32xf32> -> vector<16x32xf32>
    %252 = vector.extract_strided_slice %249 {offsets = [16, 0], sizes = [16, 16], strides = [1, 1]} : vector<32x16xf32> to vector<16x16xf32>
    %cst_146 = arith.constant dense<0.000000e+00> : vector<16x32xf32>
    %253 = tpu.matmul %252, %19, %cst_146 {dimension_numbers = #tpu.dot_dimension_numbers<[1], [0], [0], [1], [0, 0, 1, 1], [], []>} : vector<16x16xf32>, vector<16x32xf32>, vector<16x32xf32> -> vector<16x32xf32>
    %254 = arith.addf %251, %253 : vector<16x32xf32>
    %cst_147 = arith.constant 0.000000e+00 : f32
    %255 = vector.broadcast %cst_147 : f32 to vector<16x32xf32>
    %256 = arith.cmpf oge, %254, %255 : vector<16x32xf32>
    %257 = vector.broadcast %0 : f32 to vector<16x32xf32>
    %258 = arith.mulf %257, %254 : vector<16x32xf32>
    %259 = arith.select %256, %254, %258 : vector<16x32xi1>, vector<16x32xf32>
    %260 = vector.extract_strided_slice %259 {offsets = [0, 0], sizes = [8, 32], strides = [1, 1]} : vector<16x32xf32> to vector<8x32xf32>
    %261 = vector.shape_cast %260 : vector<8x32xf32> to vector<8x1x32xf32>
    %c0_148 = arith.constant 0 : index
    %c8_149 = arith.constant 8 : index
    %c18 = arith.constant 18 : index
    %c0_150 = arith.constant 0 : index
    %262 = vector.load %arg11[%c0_148, %c8_149, %c18, %c0_150] : memref<1x16x32x32xf32, #tpu.memory_space<vmem>>, vector<1x8x1x32xf32>
    %263 = vector.shape_cast %262 : vector<1x8x1x32xf32> to vector<8x1x32xf32>
    %264 = vector.shape_cast %261 : vector<8x1x32xf32> to vector<1x8x1x32xf32>
    tpu.vector_store %arg11[%c0_148, %c8_149, %c18, %c0_150], %264 {strides = array<i32>} : memref<1x16x32x32xf32, #tpu.memory_space<vmem>>, vector<1x8x1x32xf32>,
    %265 = vector.extract_strided_slice %259 {offsets = [8, 0], sizes = [8, 32], strides = [1, 1]} : vector<16x32xf32> to vector<8x32xf32>
    %266 = vector.shape_cast %265 : vector<8x32xf32> to vector<8x1x32xf32>
    %c0_151 = arith.constant 0 : index
    %c8_152 = arith.constant 8 : index
    %c19 = arith.constant 19 : index
    %c0_153 = arith.constant 0 : index
    %267 = vector.load %arg11[%c0_151, %c8_152, %c19, %c0_153] : memref<1x16x32x32xf32, #tpu.memory_space<vmem>>, vector<1x8x1x32xf32>
    %268 = vector.shape_cast %267 : vector<1x8x1x32xf32> to vector<8x1x32xf32>
    %269 = vector.shape_cast %266 : vector<8x1x32xf32> to vector<1x8x1x32xf32>
    tpu.vector_store %arg11[%c0_151, %c8_152, %c19, %c0_153], %269 {strides = array<i32>} : memref<1x16x32x32xf32, #tpu.memory_space<vmem>>, vector<1x8x1x32xf32>,
    %270 = vector.extract_strided_slice %7 {offsets = [0, 160], sizes = [8, 16], strides = [1, 1]} : vector<8x256xf32> to vector<8x16xf32>
    %cst_154 = arith.constant dense<0.000000e+00> : vector<8x32xf32>
    %271 = tpu.matmul %270, %15, %cst_154 {dimension_numbers = #tpu.dot_dimension_numbers<[1], [0], [0], [1], [0, 0, 1, 1], [], []>} : vector<8x16xf32>, vector<16x32xf32>, vector<8x32xf32> -> vector<8x32xf32>
    %272 = vector.shape_cast %271 : vector<8x32xf32> to vector<8x1x32xf32>
    %c0_155 = arith.constant 0 : index
    %c10_156 = arith.constant 10 : index
    %c0_157 = arith.constant 0 : index
    %273 = vector.load %arg12[%c0_155, %c10_156, %c0_157] : memref<8x16x32xf32, #tpu.memory_space<vmem>>, vector<8x1x32xf32>
    tpu.vector_store %arg12[%c0_155, %c10_156, %c0_157], %272 {strides = array<i32>} : memref<8x16x32xf32, #tpu.memory_space<vmem>>, vector<8x1x32xf32>,
    %274 = vector.extract_strided_slice %14 {offsets = [0, 160], sizes = [32, 16], strides = [1, 1]} : vector<32x256xf32> to vector<32x16xf32>
    %275 = vector.extract_strided_slice %274 {offsets = [0, 0], sizes = [16, 16], strides = [1, 1]} : vector<32x16xf32> to vector<16x16xf32>
    %cst_158 = arith.constant dense<0.000000e+00> : vector<16x32xf32>
    %276 = tpu.matmul %275, %17, %cst_158 {dimension_numbers = #tpu.dot_dimension_numbers<[1], [0], [0], [1], [0, 0, 1, 1], [], []>} : vector<16x16xf32>, vector<16x32xf32>, vector<16x32xf32> -> vector<16x32xf32>
    %277 = vector.extract_strided_slice %274 {offsets = [16, 0], sizes = [16, 16], strides = [1, 1]} : vector<32x16xf32> to vector<16x16xf32>
    %cst_159 = arith.constant dense<0.000000e+00> : vector<16x32xf32>
    %278 = tpu.matmul %277, %19, %cst_159 {dimension_numbers = #tpu.dot_dimension_numbers<[1], [0], [0], [1], [0, 0, 1, 1], [], []>} : vector<16x16xf32>, vector<16x32xf32>, vector<16x32xf32> -> vector<16x32xf32>
    %279 = arith.addf %276, %278 : vector<16x32xf32>
    %cst_160 = arith.constant 0.000000e+00 : f32
    %280 = vector.broadcast %cst_160 : f32 to vector<16x32xf32>
    %281 = arith.cmpf oge, %279, %280 : vector<16x32xf32>
    %282 = vector.broadcast %0 : f32 to vector<16x32xf32>
    %283 = arith.mulf %282, %279 : vector<16x32xf32>
    %284 = arith.select %281, %279, %283 : vector<16x32xi1>, vector<16x32xf32>
    %285 = vector.extract_strided_slice %284 {offsets = [0, 0], sizes = [8, 32], strides = [1, 1]} : vector<16x32xf32> to vector<8x32xf32>
    %286 = vector.shape_cast %285 : vector<8x32xf32> to vector<8x1x32xf32>
    %c0_161 = arith.constant 0 : index
    %c8_162 = arith.constant 8 : index
    %c20 = arith.constant 20 : index
    %c0_163 = arith.constant 0 : index
    %287 = vector.load %arg11[%c0_161, %c8_162, %c20, %c0_163] : memref<1x16x32x32xf32, #tpu.memory_space<vmem>>, vector<1x8x1x32xf32>
    %288 = vector.shape_cast %287 : vector<1x8x1x32xf32> to vector<8x1x32xf32>
    %289 = vector.shape_cast %286 : vector<8x1x32xf32> to vector<1x8x1x32xf32>
    tpu.vector_store %arg11[%c0_161, %c8_162, %c20, %c0_163], %289 {strides = array<i32>} : memref<1x16x32x32xf32, #tpu.memory_space<vmem>>, vector<1x8x1x32xf32>,
    %290 = vector.extract_strided_slice %284 {offsets = [8, 0], sizes = [8, 32], strides = [1, 1]} : vector<16x32xf32> to vector<8x32xf32>
    %291 = vector.shape_cast %290 : vector<8x32xf32> to vector<8x1x32xf32>
    %c0_164 = arith.constant 0 : index
    %c8_165 = arith.constant 8 : index
    %c21 = arith.constant 21 : index
    %c0_166 = arith.constant 0 : index
    %292 = vector.load %arg11[%c0_164, %c8_165, %c21, %c0_166] : memref<1x16x32x32xf32, #tpu.memory_space<vmem>>, vector<1x8x1x32xf32>
    %293 = vector.shape_cast %292 : vector<1x8x1x32xf32> to vector<8x1x32xf32>
    %294 = vector.shape_cast %291 : vector<8x1x32xf32> to vector<1x8x1x32xf32>
    tpu.vector_store %arg11[%c0_164, %c8_165, %c21, %c0_166], %294 {strides = array<i32>} : memref<1x16x32x32xf32, #tpu.memory_space<vmem>>, vector<1x8x1x32xf32>,
    %295 = vector.extract_strided_slice %7 {offsets = [0, 176], sizes = [8, 16], strides = [1, 1]} : vector<8x256xf32> to vector<8x16xf32>
    %cst_167 = arith.constant dense<0.000000e+00> : vector<8x32xf32>
    %296 = tpu.matmul %295, %15, %cst_167 {dimension_numbers = #tpu.dot_dimension_numbers<[1], [0], [0], [1], [0, 0, 1, 1], [], []>} : vector<8x16xf32>, vector<16x32xf32>, vector<8x32xf32> -> vector<8x32xf32>
    %297 = vector.shape_cast %296 : vector<8x32xf32> to vector<8x1x32xf32>
    %c0_168 = arith.constant 0 : index
    %c11_169 = arith.constant 11 : index
    %c0_170 = arith.constant 0 : index
    %298 = vector.load %arg12[%c0_168, %c11_169, %c0_170] : memref<8x16x32xf32, #tpu.memory_space<vmem>>, vector<8x1x32xf32>
    tpu.vector_store %arg12[%c0_168, %c11_169, %c0_170], %297 {strides = array<i32>} : memref<8x16x32xf32, #tpu.memory_space<vmem>>, vector<8x1x32xf32>,
    %299 = vector.extract_strided_slice %14 {offsets = [0, 176], sizes = [32, 16], strides = [1, 1]} : vector<32x256xf32> to vector<32x16xf32>
    %300 = vector.extract_strided_slice %299 {offsets = [0, 0], sizes = [16, 16], strides = [1, 1]} : vector<32x16xf32> to vector<16x16xf32>
    %cst_171 = arith.constant dense<0.000000e+00> : vector<16x32xf32>
    %301 = tpu.matmul %300, %17, %cst_171 {dimension_numbers = #tpu.dot_dimension_numbers<[1], [0], [0], [1], [0, 0, 1, 1], [], []>} : vector<16x16xf32>, vector<16x32xf32>, vector<16x32xf32> -> vector<16x32xf32>
    %302 = vector.extract_strided_slice %299 {offsets = [16, 0], sizes = [16, 16], strides = [1, 1]} : vector<32x16xf32> to vector<16x16xf32>
    %cst_172 = arith.constant dense<0.000000e+00> : vector<16x32xf32>
    %303 = tpu.matmul %302, %19, %cst_172 {dimension_numbers = #tpu.dot_dimension_numbers<[1], [0], [0], [1], [0, 0, 1, 1], [], []>} : vector<16x16xf32>, vector<16x32xf32>, vector<16x32xf32> -> vector<16x32xf32>
    %304 = arith.addf %301, %303 : vector<16x32xf32>
    %cst_173 = arith.constant 0.000000e+00 : f32
    %305 = vector.broadcast %cst_173 : f32 to vector<16x32xf32>
    %306 = arith.cmpf oge, %304, %305 : vector<16x32xf32>
    %307 = vector.broadcast %0 : f32 to vector<16x32xf32>
    %308 = arith.mulf %307, %304 : vector<16x32xf32>
    %309 = arith.select %306, %304, %308 : vector<16x32xi1>, vector<16x32xf32>
    %310 = vector.extract_strided_slice %309 {offsets = [0, 0], sizes = [8, 32], strides = [1, 1]} : vector<16x32xf32> to vector<8x32xf32>
    %311 = vector.shape_cast %310 : vector<8x32xf32> to vector<8x1x32xf32>
    %c0_174 = arith.constant 0 : index
    %c8_175 = arith.constant 8 : index
    %c22 = arith.constant 22 : index
    %c0_176 = arith.constant 0 : index
    %312 = vector.load %arg11[%c0_174, %c8_175, %c22, %c0_176] : memref<1x16x32x32xf32, #tpu.memory_space<vmem>>, vector<1x8x1x32xf32>
    %313 = vector.shape_cast %312 : vector<1x8x1x32xf32> to vector<8x1x32xf32>
    %314 = vector.shape_cast %311 : vector<8x1x32xf32> to vector<1x8x1x32xf32>
    tpu.vector_store %arg11[%c0_174, %c8_175, %c22, %c0_176], %314 {strides = array<i32>} : memref<1x16x32x32xf32, #tpu.memory_space<vmem>>, vector<1x8x1x32xf32>,
    %315 = vector.extract_strided_slice %309 {offsets = [8, 0], sizes = [8, 32], strides = [1, 1]} : vector<16x32xf32> to vector<8x32xf32>
    %316 = vector.shape_cast %315 : vector<8x32xf32> to vector<8x1x32xf32>
    %c0_177 = arith.constant 0 : index
    %c8_178 = arith.constant 8 : index
    %c23 = arith.constant 23 : index
    %c0_179 = arith.constant 0 : index
    %317 = vector.load %arg11[%c0_177, %c8_178, %c23, %c0_179] : memref<1x16x32x32xf32, #tpu.memory_space<vmem>>, vector<1x8x1x32xf32>
    %318 = vector.shape_cast %317 : vector<1x8x1x32xf32> to vector<8x1x32xf32>
    %319 = vector.shape_cast %316 : vector<8x1x32xf32> to vector<1x8x1x32xf32>
    tpu.vector_store %arg11[%c0_177, %c8_178, %c23, %c0_179], %319 {strides = array<i32>} : memref<1x16x32x32xf32, #tpu.memory_space<vmem>>, vector<1x8x1x32xf32>,
    %320 = vector.extract_strided_slice %7 {offsets = [0, 192], sizes = [8, 16], strides = [1, 1]} : vector<8x256xf32> to vector<8x16xf32>
    %cst_180 = arith.constant dense<0.000000e+00> : vector<8x32xf32>
    %321 = tpu.matmul %320, %15, %cst_180 {dimension_numbers = #tpu.dot_dimension_numbers<[1], [0], [0], [1], [0, 0, 1, 1], [], []>} : vector<8x16xf32>, vector<16x32xf32>, vector<8x32xf32> -> vector<8x32xf32>
    %322 = vector.shape_cast %321 : vector<8x32xf32> to vector<8x1x32xf32>
    %c0_181 = arith.constant 0 : index
    %c12_182 = arith.constant 12 : index
    %c0_183 = arith.constant 0 : index
    %323 = vector.load %arg12[%c0_181, %c12_182, %c0_183] : memref<8x16x32xf32, #tpu.memory_space<vmem>>, vector<8x1x32xf32>
    tpu.vector_store %arg12[%c0_181, %c12_182, %c0_183], %322 {strides = array<i32>} : memref<8x16x32xf32, #tpu.memory_space<vmem>>, vector<8x1x32xf32>,
    %324 = vector.extract_strided_slice %14 {offsets = [0, 192], sizes = [32, 16], strides = [1, 1]} : vector<32x256xf32> to vector<32x16xf32>
    %325 = vector.extract_strided_slice %324 {offsets = [0, 0], sizes = [16, 16], strides = [1, 1]} : vector<32x16xf32> to vector<16x16xf32>
    %cst_184 = arith.constant dense<0.000000e+00> : vector<16x32xf32>
    %326 = tpu.matmul %325, %17, %cst_184 {dimension_numbers = #tpu.dot_dimension_numbers<[1], [0], [0], [1], [0, 0, 1, 1], [], []>} : vector<16x16xf32>, vector<16x32xf32>, vector<16x32xf32> -> vector<16x32xf32>
    %327 = vector.extract_strided_slice %324 {offsets = [16, 0], sizes = [16, 16], strides = [1, 1]} : vector<32x16xf32> to vector<16x16xf32>
    %cst_185 = arith.constant dense<0.000000e+00> : vector<16x32xf32>
    %328 = tpu.matmul %327, %19, %cst_185 {dimension_numbers = #tpu.dot_dimension_numbers<[1], [0], [0], [1], [0, 0, 1, 1], [], []>} : vector<16x16xf32>, vector<16x32xf32>, vector<16x32xf32> -> vector<16x32xf32>
    %329 = arith.addf %326, %328 : vector<16x32xf32>
    %cst_186 = arith.constant 0.000000e+00 : f32
    %330 = vector.broadcast %cst_186 : f32 to vector<16x32xf32>
    %331 = arith.cmpf oge, %329, %330 : vector<16x32xf32>
    %332 = vector.broadcast %0 : f32 to vector<16x32xf32>
    %333 = arith.mulf %332, %329 : vector<16x32xf32>
    %334 = arith.select %331, %329, %333 : vector<16x32xi1>, vector<16x32xf32>
    %335 = vector.extract_strided_slice %334 {offsets = [0, 0], sizes = [8, 32], strides = [1, 1]} : vector<16x32xf32> to vector<8x32xf32>
    %336 = vector.shape_cast %335 : vector<8x32xf32> to vector<8x1x32xf32>
    %c0_187 = arith.constant 0 : index
    %c8_188 = arith.constant 8 : index
    %c24 = arith.constant 24 : index
    %c0_189 = arith.constant 0 : index
    %337 = vector.load %arg11[%c0_187, %c8_188, %c24, %c0_189] : memref<1x16x32x32xf32, #tpu.memory_space<vmem>>, vector<1x8x1x32xf32>
    %338 = vector.shape_cast %337 : vector<1x8x1x32xf32> to vector<8x1x32xf32>
    %339 = vector.shape_cast %336 : vector<8x1x32xf32> to vector<1x8x1x32xf32>
    tpu.vector_store %arg11[%c0_187, %c8_188, %c24, %c0_189], %339 {strides = array<i32>} : memref<1x16x32x32xf32, #tpu.memory_space<vmem>>, vector<1x8x1x32xf32>,
    %340 = vector.extract_strided_slice %334 {offsets = [8, 0], sizes = [8, 32], strides = [1, 1]} : vector<16x32xf32> to vector<8x32xf32>
    %341 = vector.shape_cast %340 : vector<8x32xf32> to vector<8x1x32xf32>
    %c0_190 = arith.constant 0 : index
    %c8_191 = arith.constant 8 : index
    %c25 = arith.constant 25 : index
    %c0_192 = arith.constant 0 : index
    %342 = vector.load %arg11[%c0_190, %c8_191, %c25, %c0_192] : memref<1x16x32x32xf32, #tpu.memory_space<vmem>>, vector<1x8x1x32xf32>
    %343 = vector.shape_cast %342 : vector<1x8x1x32xf32> to vector<8x1x32xf32>
    %344 = vector.shape_cast %341 : vector<8x1x32xf32> to vector<1x8x1x32xf32>
    tpu.vector_store %arg11[%c0_190, %c8_191, %c25, %c0_192], %344 {strides = array<i32>} : memref<1x16x32x32xf32, #tpu.memory_space<vmem>>, vector<1x8x1x32xf32>,
    %345 = vector.extract_strided_slice %7 {offsets = [0, 208], sizes = [8, 16], strides = [1, 1]} : vector<8x256xf32> to vector<8x16xf32>
    %cst_193 = arith.constant dense<0.000000e+00> : vector<8x32xf32>
    %346 = tpu.matmul %345, %15, %cst_193 {dimension_numbers = #tpu.dot_dimension_numbers<[1], [0], [0], [1], [0, 0, 1, 1], [], []>} : vector<8x16xf32>, vector<16x32xf32>, vector<8x32xf32> -> vector<8x32xf32>
    %347 = vector.shape_cast %346 : vector<8x32xf32> to vector<8x1x32xf32>
    %c0_194 = arith.constant 0 : index
    %c13_195 = arith.constant 13 : index
    %c0_196 = arith.constant 0 : index
    %348 = vector.load %arg12[%c0_194, %c13_195, %c0_196] : memref<8x16x32xf32, #tpu.memory_space<vmem>>, vector<8x1x32xf32>
    tpu.vector_store %arg12[%c0_194, %c13_195, %c0_196], %347 {strides = array<i32>} : memref<8x16x32xf32, #tpu.memory_space<vmem>>, vector<8x1x32xf32>,
    %349 = vector.extract_strided_slice %14 {offsets = [0, 208], sizes = [32, 16], strides = [1, 1]} : vector<32x256xf32> to vector<32x16xf32>
    %350 = vector.extract_strided_slice %349 {offsets = [0, 0], sizes = [16, 16], strides = [1, 1]} : vector<32x16xf32> to vector<16x16xf32>
    %cst_197 = arith.constant dense<0.000000e+00> : vector<16x32xf32>
    %351 = tpu.matmul %350, %17, %cst_197 {dimension_numbers = #tpu.dot_dimension_numbers<[1], [0], [0], [1], [0, 0, 1, 1], [], []>} : vector<16x16xf32>, vector<16x32xf32>, vector<16x32xf32> -> vector<16x32xf32>
    %352 = vector.extract_strided_slice %349 {offsets = [16, 0], sizes = [16, 16], strides = [1, 1]} : vector<32x16xf32> to vector<16x16xf32>
    %cst_198 = arith.constant dense<0.000000e+00> : vector<16x32xf32>
    %353 = tpu.matmul %352, %19, %cst_198 {dimension_numbers = #tpu.dot_dimension_numbers<[1], [0], [0], [1], [0, 0, 1, 1], [], []>} : vector<16x16xf32>, vector<16x32xf32>, vector<16x32xf32> -> vector<16x32xf32>
    %354 = arith.addf %351, %353 : vector<16x32xf32>
    %cst_199 = arith.constant 0.000000e+00 : f32
    %355 = vector.broadcast %cst_199 : f32 to vector<16x32xf32>
    %356 = arith.cmpf oge, %354, %355 : vector<16x32xf32>
    %357 = vector.broadcast %0 : f32 to vector<16x32xf32>
    %358 = arith.mulf %357, %354 : vector<16x32xf32>
    %359 = arith.select %356, %354, %358 : vector<16x32xi1>, vector<16x32xf32>
    %360 = vector.extract_strided_slice %359 {offsets = [0, 0], sizes = [8, 32], strides = [1, 1]} : vector<16x32xf32> to vector<8x32xf32>
    %361 = vector.shape_cast %360 : vector<8x32xf32> to vector<8x1x32xf32>
    %c0_200 = arith.constant 0 : index
    %c8_201 = arith.constant 8 : index
    %c26 = arith.constant 26 : index
    %c0_202 = arith.constant 0 : index
    %362 = vector.load %arg11[%c0_200, %c8_201, %c26, %c0_202] : memref<1x16x32x32xf32, #tpu.memory_space<vmem>>, vector<1x8x1x32xf32>
    %363 = vector.shape_cast %362 : vector<1x8x1x32xf32> to vector<8x1x32xf32>
    %364 = vector.shape_cast %361 : vector<8x1x32xf32> to vector<1x8x1x32xf32>
    tpu.vector_store %arg11[%c0_200, %c8_201, %c26, %c0_202], %364 {strides = array<i32>} : memref<1x16x32x32xf32, #tpu.memory_space<vmem>>, vector<1x8x1x32xf32>,
    %365 = vector.extract_strided_slice %359 {offsets = [8, 0], sizes = [8, 32], strides = [1, 1]} : vector<16x32xf32> to vector<8x32xf32>
    %366 = vector.shape_cast %365 : vector<8x32xf32> to vector<8x1x32xf32>
    %c0_203 = arith.constant 0 : index
    %c8_204 = arith.constant 8 : index
    %c27 = arith.constant 27 : index
    %c0_205 = arith.constant 0 : index
    %367 = vector.load %arg11[%c0_203, %c8_204, %c27, %c0_205] : memref<1x16x32x32xf32, #tpu.memory_space<vmem>>, vector<1x8x1x32xf32>
    %368 = vector.shape_cast %367 : vector<1x8x1x32xf32> to vector<8x1x32xf32>
    %369 = vector.shape_cast %366 : vector<8x1x32xf32> to vector<1x8x1x32xf32>
    tpu.vector_store %arg11[%c0_203, %c8_204, %c27, %c0_205], %369 {strides = array<i32>} : memref<1x16x32x32xf32, #tpu.memory_space<vmem>>, vector<1x8x1x32xf32>,
    %370 = vector.extract_strided_slice %7 {offsets = [0, 224], sizes = [8, 16], strides = [1, 1]} : vector<8x256xf32> to vector<8x16xf32>
    %cst_206 = arith.constant dense<0.000000e+00> : vector<8x32xf32>
    %371 = tpu.matmul %370, %15, %cst_206 {dimension_numbers = #tpu.dot_dimension_numbers<[1], [0], [0], [1], [0, 0, 1, 1], [], []>} : vector<8x16xf32>, vector<16x32xf32>, vector<8x32xf32> -> vector<8x32xf32>
    %372 = vector.shape_cast %371 : vector<8x32xf32> to vector<8x1x32xf32>
    %c0_207 = arith.constant 0 : index
    %c14_208 = arith.constant 14 : index
    %c0_209 = arith.constant 0 : index
    %373 = vector.load %arg12[%c0_207, %c14_208, %c0_209] : memref<8x16x32xf32, #tpu.memory_space<vmem>>, vector<8x1x32xf32>
    tpu.vector_store %arg12[%c0_207, %c14_208, %c0_209], %372 {strides = array<i32>} : memref<8x16x32xf32, #tpu.memory_space<vmem>>, vector<8x1x32xf32>,
    %374 = vector.extract_strided_slice %14 {offsets = [0, 224], sizes = [32, 16], strides = [1, 1]} : vector<32x256xf32> to vector<32x16xf32>
    %375 = vector.extract_strided_slice %374 {offsets = [0, 0], sizes = [16, 16], strides = [1, 1]} : vector<32x16xf32> to vector<16x16xf32>
    %cst_210 = arith.constant dense<0.000000e+00> : vector<16x32xf32>
    %376 = tpu.matmul %375, %17, %cst_210 {dimension_numbers = #tpu.dot_dimension_numbers<[1], [0], [0], [1], [0, 0, 1, 1], [], []>} : vector<16x16xf32>, vector<16x32xf32>, vector<16x32xf32> -> vector<16x32xf32>
    %377 = vector.extract_strided_slice %374 {offsets = [16, 0], sizes = [16, 16], strides = [1, 1]} : vector<32x16xf32> to vector<16x16xf32>
    %cst_211 = arith.constant dense<0.000000e+00> : vector<16x32xf32>
    %378 = tpu.matmul %377, %19, %cst_211 {dimension_numbers = #tpu.dot_dimension_numbers<[1], [0], [0], [1], [0, 0, 1, 1], [], []>} : vector<16x16xf32>, vector<16x32xf32>, vector<16x32xf32> -> vector<16x32xf32>
    %379 = arith.addf %376, %378 : vector<16x32xf32>
    %cst_212 = arith.constant 0.000000e+00 : f32
    %380 = vector.broadcast %cst_212 : f32 to vector<16x32xf32>
    %381 = arith.cmpf oge, %379, %380 : vector<16x32xf32>
    %382 = vector.broadcast %0 : f32 to vector<16x32xf32>
    %383 = arith.mulf %382, %379 : vector<16x32xf32>
    %384 = arith.select %381, %379, %383 : vector<16x32xi1>, vector<16x32xf32>
    %385 = vector.extract_strided_slice %384 {offsets = [0, 0], sizes = [8, 32], strides = [1, 1]} : vector<16x32xf32> to vector<8x32xf32>
    %386 = vector.shape_cast %385 : vector<8x32xf32> to vector<8x1x32xf32>
    %c0_213 = arith.constant 0 : index
    %c8_214 = arith.constant 8 : index
    %c28 = arith.constant 28 : index
    %c0_215 = arith.constant 0 : index
    %387 = vector.load %arg11[%c0_213, %c8_214, %c28, %c0_215] : memref<1x16x32x32xf32, #tpu.memory_space<vmem>>, vector<1x8x1x32xf32>
    %388 = vector.shape_cast %387 : vector<1x8x1x32xf32> to vector<8x1x32xf32>
    %389 = vector.shape_cast %386 : vector<8x1x32xf32> to vector<1x8x1x32xf32>
    tpu.vector_store %arg11[%c0_213, %c8_214, %c28, %c0_215], %389 {strides = array<i32>} : memref<1x16x32x32xf32, #tpu.memory_space<vmem>>, vector<1x8x1x32xf32>,
    %390 = vector.extract_strided_slice %384 {offsets = [8, 0], sizes = [8, 32], strides = [1, 1]} : vector<16x32xf32> to vector<8x32xf32>
    %391 = vector.shape_cast %390 : vector<8x32xf32> to vector<8x1x32xf32>
    %c0_216 = arith.constant 0 : index
    %c8_217 = arith.constant 8 : index
    %c29 = arith.constant 29 : index
    %c0_218 = arith.constant 0 : index
    %392 = vector.load %arg11[%c0_216, %c8_217, %c29, %c0_218] : memref<1x16x32x32xf32, #tpu.memory_space<vmem>>, vector<1x8x1x32xf32>
    %393 = vector.shape_cast %392 : vector<1x8x1x32xf32> to vector<8x1x32xf32>
    %394 = vector.shape_cast %391 : vector<8x1x32xf32> to vector<1x8x1x32xf32>
    tpu.vector_store %arg11[%c0_216, %c8_217, %c29, %c0_218], %394 {strides = array<i32>} : memref<1x16x32x32xf32, #tpu.memory_space<vmem>>, vector<1x8x1x32xf32>,
    %395 = vector.extract_strided_slice %7 {offsets = [0, 240], sizes = [8, 16], strides = [1, 1]} : vector<8x256xf32> to vector<8x16xf32>
    %cst_219 = arith.constant dense<0.000000e+00> : vector<8x32xf32>
    %396 = tpu.matmul %395, %15, %cst_219 {dimension_numbers = #tpu.dot_dimension_numbers<[1], [0], [0], [1], [0, 0, 1, 1], [], []>} : vector<8x16xf32>, vector<16x32xf32>, vector<8x32xf32> -> vector<8x32xf32>
    %397 = vector.shape_cast %396 : vector<8x32xf32> to vector<8x1x32xf32>
    %c0_220 = arith.constant 0 : index
    %c15_221 = arith.constant 15 : index
    %c0_222 = arith.constant 0 : index
    %398 = vector.load %arg12[%c0_220, %c15_221, %c0_222] : memref<8x16x32xf32, #tpu.memory_space<vmem>>, vector<8x1x32xf32>
    tpu.vector_store %arg12[%c0_220, %c15_221, %c0_222], %397 {strides = array<i32>} : memref<8x16x32xf32, #tpu.memory_space<vmem>>, vector<8x1x32xf32>,
    %399 = vector.extract_strided_slice %14 {offsets = [0, 240], sizes = [32, 16], strides = [1, 1]} : vector<32x256xf32> to vector<32x16xf32>
    %400 = vector.extract_strided_slice %399 {offsets = [0, 0], sizes = [16, 16], strides = [1, 1]} : vector<32x16xf32> to vector<16x16xf32>
    %cst_223 = arith.constant dense<0.000000e+00> : vector<16x32xf32>
    %401 = tpu.matmul %400, %17, %cst_223 {dimension_numbers = #tpu.dot_dimension_numbers<[1], [0], [0], [1], [0, 0, 1, 1], [], []>} : vector<16x16xf32>, vector<16x32xf32>, vector<16x32xf32> -> vector<16x32xf32>
    %402 = vector.extract_strided_slice %399 {offsets = [16, 0], sizes = [16, 16], strides = [1, 1]} : vector<32x16xf32> to vector<16x16xf32>
    %cst_224 = arith.constant dense<0.000000e+00> : vector<16x32xf32>
    %403 = tpu.matmul %402, %19, %cst_224 {dimension_numbers = #tpu.dot_dimension_numbers<[1], [0], [0], [1], [0, 0, 1, 1], [], []>} : vector<16x16xf32>, vector<16x32xf32>, vector<16x32xf32> -> vector<16x32xf32>
    %404 = arith.addf %401, %403 : vector<16x32xf32>
    %cst_225 = arith.constant 0.000000e+00 : f32
    %405 = vector.broadcast %cst_225 : f32 to vector<16x32xf32>
    %406 = arith.cmpf oge, %404, %405 : vector<16x32xf32>
    %407 = vector.broadcast %0 : f32 to vector<16x32xf32>
    %408 = arith.mulf %407, %404 : vector<16x32xf32>
    %409 = arith.select %406, %404, %408 : vector<16x32xi1>, vector<16x32xf32>
    %410 = vector.extract_strided_slice %409 {offsets = [0, 0], sizes = [8, 32], strides = [1, 1]} : vector<16x32xf32> to vector<8x32xf32>
    %411 = vector.shape_cast %410 : vector<8x32xf32> to vector<8x1x32xf32>
    %c0_226 = arith.constant 0 : index
    %c8_227 = arith.constant 8 : index
    %c30 = arith.constant 30 : index
    %c0_228 = arith.constant 0 : index
    %412 = vector.load %arg11[%c0_226, %c8_227, %c30, %c0_228] : memref<1x16x32x32xf32, #tpu.memory_space<vmem>>, vector<1x8x1x32xf32>
    %413 = vector.shape_cast %412 : vector<1x8x1x32xf32> to vector<8x1x32xf32>
    %414 = vector.shape_cast %411 : vector<8x1x32xf32> to vector<1x8x1x32xf32>
    tpu.vector_store %arg11[%c0_226, %c8_227, %c30, %c0_228], %414 {strides = array<i32>} : memref<1x16x32x32xf32, #tpu.memory_space<vmem>>, vector<1x8x1x32xf32>,
    %415 = vector.extract_strided_slice %409 {offsets = [8, 0], sizes = [8, 32], strides = [1, 1]} : vector<16x32xf32> to vector<8x32xf32>
    %416 = vector.shape_cast %415 : vector<8x32xf32> to vector<8x1x32xf32>
    %c0_229 = arith.constant 0 : index
    %c8_230 = arith.constant 8 : index
    %c31 = arith.constant 31 : index
    %c0_231 = arith.constant 0 : index
    %417 = vector.load %arg11[%c0_229, %c8_230, %c31, %c0_231] : memref<1x16x32x32xf32, #tpu.memory_space<vmem>>, vector<1x8x1x32xf32>
    %418 = vector.shape_cast %417 : vector<1x8x1x32xf32> to vector<8x1x32xf32>
    %419 = vector.shape_cast %416 : vector<8x1x32xf32> to vector<1x8x1x32xf32>
    tpu.vector_store %arg11[%c0_229, %c8_230, %c31, %c0_231], %419 {strides = array<i32>} : memref<1x16x32x32xf32, #tpu.memory_space<vmem>>, vector<1x8x1x32xf32>,
    %c0_232 = arith.constant 0 : index
    %c0_233 = arith.constant 0 : index
    %420 = vector.load %arg7[%c0_232, %c0_233] : memref<32x16xf32, #tpu.memory_space<vmem>>, vector<32x16xf32>
    %421 = vector.shape_cast %420 : vector<32x16xf32> to vector<1x32x16xf32>
    %422 = vector.shape_cast %421 : vector<1x32x16xf32> to vector<1x32x16xf32>
    %423 = vector.broadcast %422 : vector<1x32x16xf32> to vector<8x32x16xf32>
    %c0_234 = arith.constant 0 : index
    %c0_235 = arith.constant 0 : index
    %c0_236 = arith.constant 0 : index
    %424 = vector.load %arg12[%c0_234, %c0_235, %c0_236] : memref<8x16x32xf32, #tpu.memory_space<vmem>>, vector<8x16x32xf32>
    %cst_237 = arith.constant dense<0.000000e+00> : vector<8x32x32xf32>
    %425 = tpu.matmul %423, %424, %cst_237 {dimension_numbers = #tpu.dot_dimension_numbers<[2], [1], [1], [2], [0, 0, 0, 1, 1, 2], [0], [0]>} : vector<8x32x16xf32>, vector<8x16x32xf32>, vector<8x32x32xf32> -> vector<8x32x32xf32>
    %cst_238 = arith.constant 0.000000e+00 : f32
    %426 = vector.broadcast %cst_238 : f32 to vector<8x32x32xf32>
    %427 = arith.cmpf oge, %425, %426 : vector<8x32x32xf32>
    %428 = vector.broadcast %0 : f32 to vector<8x32x32xf32>
    %429 = arith.mulf %428, %425 : vector<8x32x32xf32>
    %430 = arith.select %427, %425, %429 : vector<8x32x32xi1>, vector<8x32x32xf32>
    %c0_239 = arith.constant 0 : index
    %c0_240 = arith.constant 0 : index
    %c0_241 = arith.constant 0 : index
    %c0_242 = arith.constant 0 : index
    %431 = vector.load %arg11[%c0_239, %c0_240, %c0_241, %c0_242] : memref<1x16x32x32xf32, #tpu.memory_space<vmem>>, vector<1x8x32x32xf32>
    %432 = vector.shape_cast %431 : vector<1x8x32x32xf32> to vector<8x32x32xf32>
    %433 = vector.shape_cast %430 : vector<8x32x32xf32> to vector<1x8x32x32xf32>
    tpu.vector_store %arg11[%c0_239, %c0_240, %c0_241, %c0_242], %433 {strides = array<i32>} : memref<1x16x32x32xf32, #tpu.memory_space<vmem>>, vector<1x8x32x32xf32>,
    return
  }
  func.func @transform_0(%arg0: i32) -> (i32, i32, i32) {
    %c0_i32 = arith.constant 0 : i32
    %c0_i32_0 = arith.constant 0 : i32
    %c0_i32_1 = arith.constant 0 : i32
    return %arg0, %c0_i32, %c0_i32_0 : i32, i32, i32
  }
  func.func @transform_1(%arg0: i32) -> (i32, i32, i32) {
    %c0_i32 = arith.constant 0 : i32
    %c0_i32_0 = arith.constant 0 : i32
    %c0_i32_1 = arith.constant 0 : i32
    return %arg0, %c0_i32, %c0_i32_0 : i32, i32, i32
  }
  func.func @transform_2(%arg0: i32) -> (i32, i32) {
    %c0_i32 = arith.constant 0 : i32
    %c0_i32_0 = arith.constant 0 : i32
    %c0_i32_1 = arith.constant 0 : i32
    return %c0_i32, %c0_i32_0 : i32, i32
  }
  func.func @transform_3(%arg0: i32) -> (i32, i32) {
    %c0_i32 = arith.constant 0 : i32
    %c0_i32_0 = arith.constant 0 : i32
    %c0_i32_1 = arith.constant 0 : i32
    return %c0_i32, %c0_i32_0 : i32, i32
  }
  func.func @transform_4(%arg0: i32) -> (i32, i32) {
    %c0_i32 = arith.constant 0 : i32
    %c0_i32_0 = arith.constant 0 : i32
    %c0_i32_1 = arith.constant 0 : i32
    return %c0_i32, %c0_i32_0 : i32, i32
  }
  func.func @transform_5(%arg0: i32) -> (i32, i32) {
    %c0_i32 = arith.constant 0 : i32
    %c0_i32_0 = arith.constant 0 : i32
    %c0_i32_1 = arith.constant 0 : i32
    return %c0_i32, %c0_i32_0 : i32, i32
  }
  func.func @transform_6(%arg0: i32) -> (i32, i32) {
    %c0_i32 = arith.constant 0 : i32
    %c0_i32_0 = arith.constant 0 : i32
    %c0_i32_1 = arith.constant 0 : i32
    return %c0_i32, %c0_i32_0 : i32, i32
  }
  func.func @transform_7(%arg0: i32) -> (i32, i32) {
    %c0_i32 = arith.constant 0 : i32
    %c0_i32_0 = arith.constant 0 : i32
    %c0_i32_1 = arith.constant 0 : i32
    return %c0_i32, %c0_i32_0 : i32, i32
  }
  func.func @transform_8(%arg0: i32) -> (i32, i32, i32) {
    %c0_i32 = arith.constant 0 : i32
    %c0_i32_0 = arith.constant 0 : i32
    %c0_i32_1 = arith.constant 0 : i32
    %c0_i32_2 = arith.constant 0 : i32
    return %c0_i32, %c0_i32_0, %c0_i32_1 : i32, i32, i32
  }
  func.func @transform_9(%arg0: i32) -> i32 {
    %c0_i32 = arith.constant 0 : i32
    %c0_i32_0 = arith.constant 0 : i32
    return %c0_i32 : i32
  }
  func.func @transform_10(%arg0: i32) -> (i32, i32, i32, i32) {
    %c0_i32 = arith.constant 0 : i32
    %c0_i32_0 = arith.constant 0 : i32
    %c0_i32_1 = arith.constant 0 : i32
    %c0_i32_2 = arith.constant 0 : i32
    return %arg0, %c0_i32, %c0_i32_0, %c0_i32_1 : i32, i32, i32, i32
  }
}

</mosaic_0001>

<llo_original>
// kernel: upsampling_block.1
$region0: #{upsampling_block.1}
  #allocation0 [shape = 'u32[]', space=smem, size = 0x4, offset = 0x4, fixed_abs, tag = 'smem constant byte address 0x4 - core index']
  #allocation1 [shape = 'u32[72,128]{1,0:T(1,128)}', space=vmem, size = 0x9000, scoped, tag = 'internal scratch']
  #allocation2 [shape = 'f32[8,16,32]{2,1,0:T(8,128)}', space=vmem, size = 0x10000, scoped, tag = 'scratch operand']
  #allocation3 [shape = 'f32[1]{0:T(128)S(6)}', space=smem, size = 0x200, scoped, tag = 'scoped memory for upsampling_block.1']
  %s0 = inlined_call_operand.vmem [shape: f32[2,4,256], index: 0, kind: input, shape index: {}]
  %s1 = inlined_call_operand.vmem [shape: f32[2,4,256], index: 1, kind: input, shape index: {}]
  %s2 = inlined_call_operand.vmem [shape: f32[8,4], index: 2, kind: input, shape index: {}]
  %s3 = inlined_call_operand.vmem [shape: f32[8,1], index: 3, kind: input, shape index: {}]
  %s4 = inlined_call_operand.vmem [shape: f32[32,4], index: 4, kind: input, shape index: {}]
  %s5 = inlined_call_operand.vmem [shape: f32[32,1], index: 5, kind: input, shape index: {}]
  %s6 = inlined_call_operand.vmem [shape: f32[32,16], index: 6, kind: input, shape index: {}]
  %s7 = inlined_call_operand.vmem [shape: f32[16,32], index: 7, kind: input, shape index: {}]
  %s8 = inlined_call_operand.vmem [shape: f32[2,16,32], index: 8, kind: input, shape index: {}]
  %s9 = inlined_call_operand.<no memory space> [shape: f32[1], index: 9, kind: input, shape index: {}]
  %s10 = inlined_call_operand.hbm [shape: f32[2,16,32,32], index: 10, kind: output, shape index: {}]
  %s11 = sld [smem:[#allocation0]]
  $region73: #{upsampling_block.1} parent=0
    _
  %s13 = ssub.s32 1, %s11
  %s14 = scalar_select 0, %s13, %s11
  %15 = sst [smem:[#allocation3]] %s9
  $region1: #{upsampling_block.1} parent=0
    #allocation4 [shape = 'u8[524288]{0}', space=vmem, size = 0x80000, scoped, tag = 'output window, operand 0']
    #allocation5 [shape = 's32[2]{0}', space=sflag, size = 0x8, scoped, tag = 'scoped memory for upsampling_block.1']
    %16 = vsyncpa [#allocation5], 0
    %s17 = scalar_lea.sflag [#allocation5], 1
    %18 = vsyncpa %s17, 0
    loop: start=0, step=1, limit=4
    $region2: #{upsampling_block.1} parent=1 // loop_pre_header
      _
    $region3: #{upsampling_block.1} parent=1 // loop_header
      %s20 = sphi 0, %s24
      %p21 = scmp.ge.s32.totalorder %s20, 4
      %s30 = sphi 0, %s32
      %s33 = sphi 0, %s30
      %s34 = sphi 0, %s33
      %s50 = sphi 0, %s34
      %s56 = sphi 0, %s58
      %s59 = sphi 0, %s56
      %s60 = sphi 0, %s59
      %s76 = sphi 0, %s60
      %s80 = sphi 0, %s80
      %s82 = sphi 0, %s80
      %s83 = sphi 0, %s82
      %s97 = sphi 0, %s83
      %s101 = sphi 0, %s101
      %s103 = sphi 0, %s101
      %s104 = sphi 0, %s103
      %s118 = sphi 0, %s104
      %s122 = sphi 0, %s122
      %s124 = sphi 0, %s122
      %s125 = sphi 0, %s124
      %s139 = sphi 0, %s125
      %s143 = sphi 0, %s143
      %s145 = sphi 0, %s143
      %s146 = sphi 0, %s145
      %s160 = sphi 0, %s146
      %s164 = sphi 0, %s164
      %s166 = sphi 0, %s164
      %s167 = sphi 0, %s166
      %s181 = sphi 0, %s167
      %s185 = sphi 0, %s185
      %s187 = sphi 0, %s185
      %s188 = sphi 0, %s187
      %s202 = sphi 0, %s188
      %s206 = sphi 0, %s206
      %s208 = sphi 0, %s206
      %s209 = sphi 0, %s208
      %s223 = sphi 0, %s209
      %s227 = sphi 0, %s227
      %s229 = sphi 0, %s227
      %s230 = sphi 0, %s229
      %s244 = sphi 0, %s230
      %s250 = sphi 0, %s252
      %s253 = sphi 0, %s250
      %s254 = sphi 0, %s253
      %s270 = sphi 0, %s254
    $region4: #{upsampling_block.1} parent=1 // loop_header_branch
      %23 = sbr.rel (%p21) target = $region8
    $region5: #{upsampling_block.1} parent=1 // loop_body
      %s25 = ssub.s32 %s20, 1
      %s26 = ssub.s32 %s20, 2
      %s27 = sadd.s32 %s20, 1
      %s28 = ssub.s32 %s20, %s27
      %p29 = scmp.eq.s32.totalorder %s28, 0
      %s31 = sadd.s32 %s30, 1
      %s32 = scalar_select %p29, %s30, %s31
      %p35 = pneg %p29
      %p36 = scmp.eq.s32.totalorder %s20, 1
      %p37 = por %p35, %p36
      %p38 = scmp.ne.s32.totalorder %s30, %s33
      %p39 = scmp.eq.s32.totalorder %s20, 0
      %p40 = por %p38, %p39
      %p41 = scmp.ne.s32.totalorder %s30, %s33
      %p42 = scmp.eq.s32.totalorder %s25, 1
      %p43 = por %p41, %p42
      %p44 = scmp.ne.s32.totalorder %s33, %s34
      %p45 = scmp.eq.s32.totalorder %s25, 0
      %p46 = por %p44, %p45
      %p47 = scmp.ne.s32.totalorder %s33, %s34
      %p48 = scmp.eq.s32.totalorder %s26, 1
      %p49 = por %p47, %p48
      %p51 = scmp.ne.s32.totalorder %s34, %s50
      %p52 = scmp.eq.s32.totalorder %s26, 0
      %p53 = por %p51, %p52
      %s54 = ssub.s32 %s20, %s27
      %p55 = scmp.eq.s32.totalorder %s54, 0
      %s57 = sadd.s32 %s56, 1
      %s58 = scalar_select %p55, %s56, %s57
      %p61 = pneg %p55
      %p62 = scmp.eq.s32.totalorder %s20, 1
      %p63 = por %p61, %p62
      %p64 = scmp.ne.s32.totalorder %s56, %s59
      %p65 = scmp.eq.s32.totalorder %s20, 0
      %p66 = por %p64, %p65
      %p67 = scmp.ne.s32.totalorder %s56, %s59
      %p68 = scmp.eq.s32.totalorder %s25, 1
      %p69 = por %p67, %p68
      %p70 = scmp.ne.s32.totalorder %s59, %s60
      %p71 = scmp.eq.s32.totalorder %s25, 0
      %p72 = por %p70, %p71
      %p73 = scmp.ne.s32.totalorder %s59, %s60
      %p74 = scmp.eq.s32.totalorder %s26, 1
      %p75 = por %p73, %p74
      %p77 = scmp.ne.s32.totalorder %s60, %s76
      %p78 = scmp.eq.s32.totalorder %s26, 0
      %p79 = por %p77, %p78
      %s81 = sadd.s32 %s80, 1
      %p84 = scmp.eq.s32.totalorder %s20, 1
      %p85 = scmp.ne.s32.totalorder %s80, %s82
      %p86 = scmp.eq.s32.totalorder %s20, 0
      %p87 = por %p85, %p86
      %p88 = scmp.ne.s32.totalorder %s80, %s82
      %p89 = scmp.eq.s32.totalorder %s25, 1
      %p90 = por %p88, %p89
      %p91 = scmp.ne.s32.totalorder %s82, %s83
      %p92 = scmp.eq.s32.totalorder %s25, 0
      %p93 = por %p91, %p92
      %p94 = scmp.ne.s32.totalorder %s82, %s83
      %p95 = scmp.eq.s32.totalorder %s26, 1
      %p96 = por %p94, %p95
      %p98 = scmp.ne.s32.totalorder %s83, %s97
      %p99 = scmp.eq.s32.totalorder %s26, 0
      %p100 = por %p98, %p99
      %s102 = sadd.s32 %s101, 1
      %p105 = scmp.eq.s32.totalorder %s20, 1
      %p106 = scmp.ne.s32.totalorder %s101, %s103
      %p107 = scmp.eq.s32.totalorder %s20, 0
      %p108 = por %p106, %p107
      %p109 = scmp.ne.s32.totalorder %s101, %s103
      %p110 = scmp.eq.s32.totalorder %s25, 1
      %p111 = por %p109, %p110
      %p112 = scmp.ne.s32.totalorder %s103, %s104
      %p113 = scmp.eq.s32.totalorder %s25, 0
      %p114 = por %p112, %p113
      %p115 = scmp.ne.s32.totalorder %s103, %s104
      %p116 = scmp.eq.s32.totalorder %s26, 1
      %p117 = por %p115, %p116
      %p119 = scmp.ne.s32.totalorder %s104, %s118
      %p120 = scmp.eq.s32.totalorder %s26, 0
      %p121 = por %p119, %p120
      %s123 = sadd.s32 %s122, 1
      %p126 = scmp.eq.s32.totalorder %s20, 1
      %p127 = scmp.ne.s32.totalorder %s122, %s124
      %p128 = scmp.eq.s32.totalorder %s20, 0
      %p129 = por %p127, %p128
      %p130 = scmp.ne.s32.totalorder %s122, %s124
      %p131 = scmp.eq.s32.totalorder %s25, 1
      %p132 = por %p130, %p131
      %p133 = scmp.ne.s32.totalorder %s124, %s125
      %p134 = scmp.eq.s32.totalorder %s25, 0
      %p135 = por %p133, %p134
      %p136 = scmp.ne.s32.totalorder %s124, %s125
      %p137 = scmp.eq.s32.totalorder %s26, 1
      %p138 = por %p136, %p137
      %p140 = scmp.ne.s32.totalorder %s125, %s139
      %p141 = scmp.eq.s32.totalorder %s26, 0
      %p142 = por %p140, %p141
      %s144 = sadd.s32 %s143, 1
      %p147 = scmp.eq.s32.totalorder %s20, 1
      %p148 = scmp.ne.s32.totalorder %s143, %s145
      %p149 = scmp.eq.s32.totalorder %s20, 0
      %p150 = por %p148, %p149
      %p151 = scmp.ne.s32.totalorder %s143, %s145
      %p152 = scmp.eq.s32.totalorder %s25, 1
      %p153 = por %p151, %p152
      %p154 = scmp.ne.s32.totalorder %s145, %s146
      %p155 = scmp.eq.s32.totalorder %s25, 0
      %p156 = por %p154, %p155
      %p157 = scmp.ne.s32.totalorder %s145, %s146
      %p158 = scmp.eq.s32.totalorder %s26, 1
      %p159 = por %p157, %p158
      %p161 = scmp.ne.s32.totalorder %s146, %s160
      %p162 = scmp.eq.s32.totalorder %s26, 0
      %p163 = por %p161, %p162
      %s165 = sadd.s32 %s164, 1
      %p168 = scmp.eq.s32.totalorder %s20, 1
      %p169 = scmp.ne.s32.totalorder %s164, %s166
      %p170 = scmp.eq.s32.totalorder %s20, 0
      %p171 = por %p169, %p170
      %p172 = scmp.ne.s32.totalorder %s164, %s166
      %p173 = scmp.eq.s32.totalorder %s25, 1
      %p174 = por %p172, %p173
      %p175 = scmp.ne.s32.totalorder %s166, %s167
      %p176 = scmp.eq.s32.totalorder %s25, 0
      %p177 = por %p175, %p176
      %p178 = scmp.ne.s32.totalorder %s166, %s167
      %p179 = scmp.eq.s32.totalorder %s26, 1
      %p180 = por %p178, %p179
      %p182 = scmp.ne.s32.totalorder %s167, %s181
      %p183 = scmp.eq.s32.totalorder %s26, 0
      %p184 = por %p182, %p183
      %s186 = sadd.s32 %s185, 1
      %p189 = scmp.eq.s32.totalorder %s20, 1
      %p190 = scmp.ne.s32.totalorder %s185, %s187
      %p191 = scmp.eq.s32.totalorder %s20, 0
      %p192 = por %p190, %p191
      %p193 = scmp.ne.s32.totalorder %s185, %s187
      %p194 = scmp.eq.s32.totalorder %s25, 1
      %p195 = por %p193, %p194
      %p196 = scmp.ne.s32.totalorder %s187, %s188
      %p197 = scmp.eq.s32.totalorder %s25, 0
      %p198 = por %p196, %p197
      %p199 = scmp.ne.s32.totalorder %s187, %s188
      %p200 = scmp.eq.s32.totalorder %s26, 1
      %p201 = por %p199, %p200
      %p203 = scmp.ne.s32.totalorder %s188, %s202
      %p204 = scmp.eq.s32.totalorder %s26, 0
      %p205 = por %p203, %p204
      %s207 = sadd.s32 %s206, 1
      %p210 = scmp.eq.s32.totalorder %s20, 1
      %p211 = scmp.ne.s32.totalorder %s206, %s208
      %p212 = scmp.eq.s32.totalorder %s20, 0
      %p213 = por %p211, %p212
      %p214 = scmp.ne.s32.totalorder %s206, %s208
      %p215 = scmp.eq.s32.totalorder %s25, 1
      %p216 = por %p214, %p215
      %p217 = scmp.ne.s32.totalorder %s208, %s209
      %p218 = scmp.eq.s32.totalorder %s25, 0
      %p219 = por %p217, %p218
      %p220 = scmp.ne.s32.totalorder %s208, %s209
      %p221 = scmp.eq.s32.totalorder %s26, 1
      %p222 = por %p220, %p221
      %p224 = scmp.ne.s32.totalorder %s209, %s223
      %p225 = scmp.eq.s32.totalorder %s26, 0
      %p226 = por %p224, %p225
      %s228 = sadd.s32 %s227, 1
      %p231 = scmp.eq.s32.totalorder %s20, 1
      %p232 = scmp.ne.s32.totalorder %s227, %s229
      %p233 = scmp.eq.s32.totalorder %s20, 0
      %p234 = por %p232, %p233
      %p235 = scmp.ne.s32.totalorder %s227, %s229
      %p236 = scmp.eq.s32.totalorder %s25, 1
      %p237 = por %p235, %p236
      %p238 = scmp.ne.s32.totalorder %s229, %s230
      %p239 = scmp.eq.s32.totalorder %s25, 0
      %p240 = por %p238, %p239
      %p241 = scmp.ne.s32.totalorder %s229, %s230
      %p242 = scmp.eq.s32.totalorder %s26, 1
      %p243 = por %p241, %p242
      %p245 = scmp.ne.s32.totalorder %s230, %s244
      %p246 = scmp.eq.s32.totalorder %s26, 0
      %p247 = por %p245, %p246
      %s248 = ssub.s32 %s20, %s27
      %p249 = scmp.eq.s32.totalorder %s248, 0
      %s251 = sadd.s32 %s250, 1
      %s252 = scalar_select %p249, %s250, %s251
      %p255 = pneg %p249
      %p256 = scmp.eq.s32.totalorder %s20, 1
      %p257 = por %p255, %p256
      %p258 = scmp.ne.s32.totalorder %s250, %s253
      %p259 = scmp.eq.s32.totalorder %s20, 0
      %p260 = por %p258, %p259
      %p261 = scmp.ne.s32.totalorder %s250, %s253
      %p262 = scmp.eq.s32.totalorder %s25, 1
      %p263 = por %p261, %p262
      %p264 = scmp.ne.s32.totalorder %s253, %s254
      %p265 = scmp.eq.s32.totalorder %s25, 0
      %p266 = por %p264, %p265
      %p267 = scmp.ne.s32.totalorder %s253, %s254
      %p268 = scmp.eq.s32.totalorder %s26, 1
      %p269 = por %p267, %p268
      %p271 = scmp.ne.s32.totalorder %s254, %s270
      %p272 = scmp.eq.s32.totalorder %s26, 0
      %p273 = por %p271, %p272
      %p274 = scmp.le.s32.totalorder 1, %s20
      %p275 = scmp.lt.s32.totalorder %s20, 3
      %p276 = pnand %p274, %p275
      %p277 = pneg %p276
      // Predicated region
      $region9: #{upsampling_block.1} parent=5 // pred_check
        _
      $region10: #{upsampling_block.1} parent=5 // pred_check_branch
        %279 = sbr.rel (%p276) target = $region12
      $region11: #{upsampling_block.1} parent=5 // pred_region
        %s280 = ssub.s32 %s20, 1
        // Predicated region
        $region13: #{upsampling_block.1} parent=11 // pred_check
          %p281 = pneg %p93
        $region14: #{upsampling_block.1} parent=11 // pred_check_branch
          %283 = sbr.rel (%p281) target = $region16
        $region15: #{upsampling_block.1} parent=11 // pred_region
          _
        $region16: #{upsampling_block.1} parent=11 // pred_fallthru
          _
        // Predicated region
        $region17: #{upsampling_block.1} parent=11 // pred_check
          %p284 = pneg %p114
        $region18: #{upsampling_block.1} parent=11 // pred_check_branch
          %286 = sbr.rel (%p284) target = $region20
        $region19: #{upsampling_block.1} parent=11 // pred_region
          _
        $region20: #{upsampling_block.1} parent=11 // pred_fallthru
          _
        // Predicated region
        $region21: #{upsampling_block.1} parent=11 // pred_check
          %p287 = pneg %p135
        $region22: #{upsampling_block.1} parent=11 // pred_check_branch
          %289 = sbr.rel (%p287) target = $region24
        $region23: #{upsampling_block.1} parent=11 // pred_region
          _
        $region24: #{upsampling_block.1} parent=11 // pred_fallthru
          _
        // Predicated region
        $region25: #{upsampling_block.1} parent=11 // pred_check
          %p290 = pneg %p156
        $region26: #{upsampling_block.1} parent=11 // pred_check_branch
          %292 = sbr.rel (%p290) target = $region28
        $region27: #{upsampling_block.1} parent=11 // pred_region
          _
        $region28: #{upsampling_block.1} parent=11 // pred_fallthru
          _
        // Predicated region
        $region29: #{upsampling_block.1} parent=11 // pred_check
          %p293 = pneg %p177
        $region30: #{upsampling_block.1} parent=11 // pred_check_branch
          %295 = sbr.rel (%p293) target = $region32
        $region31: #{upsampling_block.1} parent=11 // pred_region
          _
        $region32: #{upsampling_block.1} parent=11 // pred_fallthru
          _
        // Predicated region
        $region33: #{upsampling_block.1} parent=11 // pred_check
          %p296 = pneg %p198
        $region34: #{upsampling_block.1} parent=11 // pred_check_branch
          %298 = sbr.rel (%p296) target = $region36
        $region35: #{upsampling_block.1} parent=11 // pred_region
          _
        $region36: #{upsampling_block.1} parent=11 // pred_fallthru
          _
        // Predicated region
        $region37: #{upsampling_block.1} parent=11 // pred_check
          %p299 = pneg %p219
        $region38: #{upsampling_block.1} parent=11 // pred_check_branch
          %301 = sbr.rel (%p299) target = $region40
        $region39: #{upsampling_block.1} parent=11 // pred_region
          _
        $region40: #{upsampling_block.1} parent=11 // pred_fallthru
          _
        // Predicated region
        $region41: #{upsampling_block.1} parent=11 // pred_check
          %p302 = pneg %p240
        $region42: #{upsampling_block.1} parent=11 // pred_check_branch
          %304 = sbr.rel (%p302) target = $region44
        $region43: #{upsampling_block.1} parent=11 // pred_region
          _
        $region44: #{upsampling_block.1} parent=11 // pred_fallthru
          _
      $region12: #{upsampling_block.1} parent=5 // pred_fallthru
        _
      %p305 = scmp.lt.s32.totalorder %s20, 2
      // Predicated region
      $region45: #{upsampling_block.1} parent=5 // pred_check
        %p306 = pneg %p305
      $region46: #{upsampling_block.1} parent=5 // pred_check_branch
        %308 = sbr.rel (%p306) target = $region48
      $region47: #{upsampling_block.1} parent=5 // pred_region
        // Predicated region
        $region49: #{upsampling_block.1} parent=47 // pred_check
          %p309 = pneg %p40
        $region50: #{upsampling_block.1} parent=47 // pred_check_branch
          %311 = sbr.rel (%p309) target = $region52
        $region51: #{upsampling_block.1} parent=47 // pred_region
          %p312 = scmp.lt.s32.totalorder %s20, 1
          %s313 = scalar_select %p312, %s20, 1
          %s314 = smul.addr %s313, 2
          %s315 = smul.addr %s314, 4
          %s316 = scalar_lea.vmem %s0, %s315
        $region52: #{upsampling_block.1} parent=47 // pred_fallthru
          _
        // Predicated region
        $region53: #{upsampling_block.1} parent=47 // pred_check
          %p317 = pneg %p66
        $region54: #{upsampling_block.1} parent=47 // pred_check_branch
          %319 = sbr.rel (%p317) target = $region56
        $region55: #{upsampling_block.1} parent=47 // pred_region
          %p320 = scmp.lt.s32.totalorder %s20, 1
          %s321 = scalar_select %p320, %s20, 1
          %s322 = smul.addr %s321, 2
          %s323 = smul.addr %s322, 4
          %s324 = scalar_lea.vmem %s1, %s323
        $region56: #{upsampling_block.1} parent=47 // pred_fallthru
          _
      $region48: #{upsampling_block.1} parent=5 // pred_fallthru
        _
      %p325 = scmp.le.s32.totalorder 1, %s20
      %p326 = scmp.lt.s32.totalorder %s20, 3
      %p327 = pnand %p325, %p326
      %p328 = pneg %p327
      // Predicated region
      $region57: #{upsampling_block.1} parent=5 // pred_check
        _
      $region58: #{upsampling_block.1} parent=5 // pred_check_branch
        %330 = sbr.rel (%p327) target = $region60
      $region59: #{upsampling_block.1} parent=5 // pred_region
        %s331 = ssub.s32 %s20, 1
        %p332 = scmp.lt.s32.totalorder %s25, 1
        %s333 = scalar_select %p332, %s25, 1
        %s334 = smul.addr %s333, 2
        %s335 = smul.addr %s334, 4
        %s336 = scalar_lea.vmem %s0, %s335
        %p337 = pneg %p46
        %p338 = pneg %p43
        %p339 = scmp.lt.s32.totalorder %s25, 1
        %s340 = scalar_select %p339, %s25, 1
        %s341 = smul.addr %s340, 2
        %s342 = smul.addr %s341, 4
        %s343 = scalar_lea.vmem %s1, %s342
        %p344 = pneg %p72
        %p345 = pneg %p69
        %p346 = pneg %p93
        %p347 = pneg %p90
        %p348 = pneg %p114
        %p349 = pneg %p111
        %p350 = pneg %p135
        %p351 = pneg %p132
        %p352 = pneg %p156
        %p353 = pneg %p153
        %p354 = pneg %p177
        %p355 = pneg %p174
        %p356 = pneg %p198
        %p357 = pneg %p195
        %p358 = pneg %p219
        %p359 = pneg %p216
        %p360 = pneg %p240
        %p361 = pneg %p237
        %p362 = pneg %p266
        %p363 = pneg %p263
        %s364 = sand.u32 %s253, 1
        %s365 = scalar_lea.sflag [#allocation5], %s364
        %s366 = sand.u32 %s253, 1
        %s367 = smul.addr %s366, 512
        %s368 = scalar_lea.vmem [#allocation4], %s367
        %p369 = scmp.lt.s32.totalorder %s25, 1
        %s370 = scalar_select %p369, %s25, 1
        %s371 = smul.addr %s370, 2
        %s372 = smul.addr %s371, 4
        %s373 = scalar_lea.vmem %s0, %s372
        %p374 = scmp.lt.s32.totalorder %s25, 1
        %s375 = scalar_select %p374, %s25, 1
        %s376 = smul.addr %s375, 2
        %s377 = smul.addr %s376, 4
        %s378 = scalar_lea.vmem %s1, %s377
        %s379 = sld [smem:[#allocation3]]
        %v380 = vld [vmem:[%s2] sm:$0xff]
        %v381 = vld [vmem:[%s373] sm:$0xff]
        %v382 = vld [vmem:[%s3] sm:$0xff]
        %384 = vset.pattern.permute.xlu0 0
        %385 = vperm.xlu0 %384, %v382
        %v386 = vpop.permute.xlu0 %385
        %389 = vst [vmem:[#allocation1] ss:$2 sm:$0xff] %v381
        %v390 = vld.sshfl [vmem:[#allocation1] sm:$0xff pattern:$0x75316420]
        %v391 = vld.sshfl [vmem:[#allocation1 + $0x8] sm:$0xff pattern:$0x75316420]
        %vm392 = vcmask 31744
        %v394 = vsel %vm392, %v380, 0
        %vm396 = vcmask 1043456
        %v397 = vsel %vm396, %v390, 0
        %v399 = vsel %vm396, %v391, 0
        %401 = vmatpush.msra.mxu0 0.0
        %402 = vmatpush.msra.mxu0 0.0
        %403 = vmatpush.msra.mxu0 0.0
        %404 = vmatpush.msra.mxu0 0.0
        %405 = vmatpush.msra.mxu0 0.0
        %406 = vmatpush.msra.mxu0 0.0
        %407 = vmatpush.msra.mxu0 0.0
        %408 = vmatpush.msra.mxu0 0.0
        %409 = vmatpush.msra.mxu0 0.0
        %410 = vmatpush.msra.mxu0 0.0
        %411 = vmatpush.msra.mxu0 0.0
        %412 = vmatpush.msra.mxu0 0.0
        %413 = vmatpush.msra.mxu0 0.0
        %414 = vmatpush.msra.mxu0 0.0
        %415 = vmatpush.msra.mxu0 0.0
        %416 = vmatpush.msra.mxu0 %v397
        %417 = vmatmul.f32.gmra.mxu0 %v394
        %v418 = vpop.f32.mrf.mxu0
        %v419 = vadd.f32 %v386, %v418
        %420 = vdwg.mxu0
        %421 = vmatpush.msra.mxu0 0.0
        %422 = vmatpush.msra.mxu0 0.0
        %423 = vmatpush.msra.mxu0 0.0
        %424 = vmatpush.msra.mxu0 0.0
        %425 = vmatpush.msra.mxu0 0.0
        %426 = vmatpush.msra.mxu0 0.0
        %427 = vmatpush.msra.mxu0 0.0
        %428 = vmatpush.msra.mxu0 0.0
        %429 = vmatpush.msra.mxu0 0.0
        %430 = vmatpush.msra.mxu0 0.0
        %431 = vmatpush.msra.mxu0 0.0
        %432 = vmatpush.msra.mxu0 0.0
        %433 = vmatpush.msra.mxu0 0.0
        %434 = vmatpush.msra.mxu0 0.0
        %435 = vmatpush.msra.mxu0 0.0
        %436 = vmatpush.msra.mxu0 %v399
        %437 = vmatmul.f32.gmra.mxu0 %v394
        %v438 = vpop.f32.mrf.mxu0
        %v439 = vadd.f32 %v386, %v438
        %440 = vdwg.mxu0
        %v441 = vld [vmem:[%s4] sm:$0xff]
        %v442 = vld [vmem:[%s4 + $0x8] sm:$0xff]
        %v443 = vld [vmem:[%s4 + $0x10] sm:$0xff]
        %v444 = vld [vmem:[%s4 + $0x18] sm:$0xff]
        %v445 = vld [vmem:[%s378] sm:$0xff]
        %v446 = vld [vmem:[%s5] sm:$0xff]
        %v447 = vld [vmem:[%s5 + $0x8] sm:$0xff]
        %v448 = vld [vmem:[%s5 + $0x10] sm:$0xff]
        %v449 = vld [vmem:[%s5 + $0x18] sm:$0xff]
        %451 = vset.pattern.permute.xlu0 0
        %452 = vperm.xlu0 %451, %v446
        %v453 = vpop.permute.xlu0 %452
        %456 = vset.pattern.permute.xlu0 0
        %457 = vperm.xlu0 %456, %v447
        %v458 = vpop.permute.xlu0 %457
        %461 = vset.pattern.permute.xlu0 0
        %462 = vperm.xlu0 %461, %v448
        %v463 = vpop.permute.xlu0 %462
        %466 = vset.pattern.permute.xlu0 0
        %467 = vperm.xlu0 %466, %v449
        %v468 = vpop.permute.xlu0 %467
        %471 = vst [vmem:[#allocation1] ss:$2 sm:$0xff] %v445
        %v472 = vld.sshfl [vmem:[#allocation1] sm:$0xff pattern:$0x75316420]
        %v473 = vld.sshfl [vmem:[#allocation1 + $0x8] sm:$0xff pattern:$0x75316420]
        %v475 = vsel %vm392, %v441, 0
        %v478 = vsel %vm392, %v442, 0
        %v481 = vsel %vm392, %v443, 0
        %v484 = vsel %vm392, %v444, 0
        %v486 = vsel %vm396, %v472, 0
        %v488 = vsel %vm396, %v473, 0
        %490 = vmatpush.msra.mxu0 0.0
        %491 = vmatpush.msra.mxu0 0.0
        %492 = vmatpush.msra.mxu0 0.0
        %493 = vmatpush.msra.mxu0 0.0
        %494 = vmatpush.msra.mxu0 0.0
        %495 = vmatpush.msra.mxu0 0.0
        %496 = vmatpush.msra.mxu0 0.0
        %497 = vmatpush.msra.mxu0 0.0
        %498 = vmatpush.msra.mxu0 0.0
        %499 = vmatpush.msra.mxu0 0.0
        %500 = vmatpush.msra.mxu0 0.0
        %501 = vmatpush.msra.mxu0 0.0
        %502 = vmatpush.msra.mxu0 0.0
        %503 = vmatpush.msra.mxu0 0.0
        %504 = vmatpush.msra.mxu0 0.0
        %505 = vmatpush.msra.mxu0 %v486
        %506 = vmatmul.f32.gmra.mxu0 %v475
        %v507 = vpop.f32.mrf.mxu0
        %v508 = vadd.f32 %v453, %v507
        %509 = vmatmul.f32.gmra.mxu0 %v478
        %v510 = vpop.f32.mrf.mxu0
        %v511 = vadd.f32 %v458, %v510
        %512 = vmatmul.f32.gmra.mxu0 %v481
        %v513 = vpop.f32.mrf.mxu0
        %v514 = vadd.f32 %v463, %v513
        %515 = vmatmul.f32.gmra.mxu0 %v484
        %v516 = vpop.f32.mrf.mxu0
        %v517 = vadd.f32 %v468, %v516
        %518 = vdwg.mxu0
        %519 = vmatpush.msra.mxu0 0.0
        %520 = vmatpush.msra.mxu0 0.0
        %521 = vmatpush.msra.mxu0 0.0
        %522 = vmatpush.msra.mxu0 0.0
        %523 = vmatpush.msra.mxu0 0.0
        %524 = vmatpush.msra.mxu0 0.0
        %525 = vmatpush.msra.mxu0 0.0
        %526 = vmatpush.msra.mxu0 0.0
        %527 = vmatpush.msra.mxu0 0.0
        %528 = vmatpush.msra.mxu0 0.0
        %529 = vmatpush.msra.mxu0 0.0
        %530 = vmatpush.msra.mxu0 0.0
        %531 = vmatpush.msra.mxu0 0.0
        %532 = vmatpush.msra.mxu0 0.0
        %533 = vmatpush.msra.mxu0 0.0
        %534 = vmatpush.msra.mxu0 %v488
        %535 = vmatmul.f32.gmra.mxu0 %v475
        %v536 = vpop.f32.mrf.mxu0
        %v537 = vadd.f32 %v453, %v536
        %538 = vmatmul.f32.gmra.mxu0 %v478
        %v539 = vpop.f32.mrf.mxu0
        %v540 = vadd.f32 %v458, %v539
        %541 = vmatmul.f32.gmra.mxu0 %v481
        %v542 = vpop.f32.mrf.mxu0
        %v543 = vadd.f32 %v463, %v542
        %544 = vmatmul.f32.gmra.mxu0 %v484
        %v545 = vpop.f32.mrf.mxu0
        %v546 = vadd.f32 %v468, %v545
        %547 = vdwg.mxu0
        %v548 = vld [vmem:[%s7] sm:$0xff]
        %v549 = vld [vmem:[%s7 + $0x8] sm:$0xff]
        %v550 = vld [vmem:[%s8] sm:$0xff]
        %v551 = vld [vmem:[%s8 + $0x8] sm:$0xff]
        %s552 = scalar_lea.vmem %s8, 16
        %v553 = vld [vmem:[%s552] sm:$0xff]
        %v554 = vld [vmem:[%s552 + $0x8] sm:$0xff]
        %vm555 = vcmask 130048
        %v557 = vsel %vm555, %v419, 0
        %559 = vmatpush.msra.mxu0 0.0
        %560 = vmatpush.msra.mxu0 0.0
        %561 = vmatpush.msra.mxu0 0.0
        %562 = vmatpush.msra.mxu0 0.0
        %563 = vmatpush.msra.mxu0 0.0
        %564 = vmatpush.msra.mxu0 0.0
        %565 = vmatpush.msra.mxu0 0.0
        %566 = vmatpush.msra.mxu0 0.0
        %567 = vmatpush.msra.mxu0 0.0
        %568 = vmatpush.msra.mxu0 0.0
        %569 = vmatpush.msra.mxu0 0.0
        %570 = vmatpush.msra.mxu0 0.0
        %571 = vmatpush.msra.mxu0 0.0
        %572 = vmatpush.msra.mxu0 0.0
        %573 = vmatpush.msra.mxu0 %v549
        %574 = vmatpush.msra.mxu0 %v548
        %575 = vmatmul.f32.gmra.mxu0 %v557
        %v576 = vpop.f32.mrf.mxu0
        %v577 = vadd.f32 0.0, %v576
        %578 = vdwg.mxu0
        %v580 = vrot.slane %v577, 1
        %v581 = vrot.slane %v577, 2
        %v582 = vrot.slane %v577, 3
        %v583 = vrot.slane %v577, 4
        %v584 = vrot.slane %v577, 5
        %v585 = vrot.slane %v577, 6
        %v586 = vrot.slane %v577, 7
        %vm594 = vcmask 253952
        %595 = vst.msk [vmem:[#allocation2] sm:$0x1] %vm594, %v577
        %596 = vst.msk [vmem:[#allocation2 + $0x10] sm:$0x1] %vm594, %v580
        %597 = vst.msk [vmem:[#allocation2 + $0x20] sm:$0x1] %vm594, %v581
        %598 = vst.msk [vmem:[#allocation2 + $0x30] sm:$0x1] %vm594, %v582
        %599 = vst.msk [vmem:[#allocation2 + $0x40] sm:$0x1] %vm594, %v583
        %600 = vst.msk [vmem:[#allocation2 + $0x50] sm:$0x1] %vm594, %v584
        %601 = vst.msk [vmem:[#allocation2 + $0x60] sm:$0x1] %vm594, %v585
        %602 = vst.msk [vmem:[#allocation2 + $0x70] sm:$0x1] %vm594, %v586
        %v604 = vsel %vm555, %v514, 0
        %v607 = vsel %vm555, %v517, 0
        %609 = vmatpush.msra.mxu0 0.0
        %610 = vmatpush.msra.mxu0 0.0
        %611 = vmatpush.msra.mxu0 0.0
        %612 = vmatpush.msra.mxu0 0.0
        %613 = vmatpush.msra.mxu0 0.0
        %614 = vmatpush.msra.mxu0 0.0
        %615 = vmatpush.msra.mxu0 0.0
        %616 = vmatpush.msra.mxu0 0.0
        %617 = vmatpush.msra.mxu0 0.0
        %618 = vmatpush.msra.mxu0 0.0
        %619 = vmatpush.msra.mxu0 0.0
        %620 = vmatpush.msra.mxu0 0.0
        %621 = vmatpush.msra.mxu0 0.0
        %622 = vmatpush.msra.mxu0 0.0
        %623 = vmatpush.msra.mxu0 %v554
        %624 = vmatpush.msra.mxu0 %v553
        %625 = vmatmul.f32.gmra.mxu0 %v604
        %v626 = vpop.f32.mrf.mxu0
        %v627 = vadd.f32 0.0, %v626
        %628 = vmatmul.f32.gmra.mxu0 %v607
        %v629 = vpop.f32.mrf.mxu0
        %v630 = vadd.f32 0.0, %v629
        %631 = vdwg.mxu0
        %v633 = vsel %vm555, %v508, 0
        %v636 = vsel %vm555, %v511, 0
        %638 = vmatpush.msra.mxu0 0.0
        %639 = vmatpush.msra.mxu0 0.0
        %640 = vmatpush.msra.mxu0 0.0
        %641 = vmatpush.msra.mxu0 0.0
        %642 = vmatpush.msra.mxu0 0.0
        %643 = vmatpush.msra.mxu0 0.0
        %644 = vmatpush.msra.mxu0 0.0
        %645 = vmatpush.msra.mxu0 0.0
        %646 = vmatpush.msra.mxu0 0.0
        %647 = vmatpush.msra.mxu0 0.0
        %648 = vmatpush.msra.mxu0 0.0
        %649 = vmatpush.msra.mxu0 0.0
        %650 = vmatpush.msra.mxu0 0.0
        %651 = vmatpush.msra.mxu0 0.0
        %652 = vmatpush.msra.mxu0 %v551
        %653 = vmatpush.msra.mxu0 %v550
        %654 = vmatmul.f32.gmra.mxu0 %v633
        %v655 = vpop.f32.mrf.mxu0
        %v656 = vadd.f32 %v627, %v655
        %657 = vmatmul.f32.gmra.mxu0 %v636
        %v658 = vpop.f32.mrf.mxu0
        %v659 = vadd.f32 %v630, %v658
        %660 = vdwg.mxu0
        %vm661 = vcmp.ge.f32.partialorder %v656, 0.0
        %vm662 = vcmp.ge.f32.partialorder %v659, 0.0
        %v663 = vstv %s379
        %v664 = vmul.f32 %v663, %v656
        %v665 = vmul.f32 %v663, %v659
        %v666 = vsel %vm661, %v656, %v664
        %v667 = vsel %vm662, %v659, %v665
        %v669 = vrot.slane %v666, 1
        %v670 = vrot.slane %v666, 2
        %v671 = vrot.slane %v666, 3
        %v672 = vrot.slane %v666, 4
        %v673 = vrot.slane %v666, 5
        %v674 = vrot.slane %v666, 6
        %v675 = vrot.slane %v666, 7
        %s683 = scalar_lea.vmem %s368, 256 [#allocation4]
        %684 = vst.msk [vmem:[%s683] sm:$0x1] %vm594, %v666
        %685 = vst.msk [vmem:[%s683 + $0x20] sm:$0x1] %vm594, %v669
        %686 = vst.msk [vmem:[%s683 + $0x40] sm:$0x1] %vm594, %v670
        %687 = vst.msk [vmem:[%s683 + $0x60] sm:$0x1] %vm594, %v671
        %688 = vst.msk [vmem:[%s683 + $0x80] sm:$0x1] %vm594, %v672
        %689 = vst.msk [vmem:[%s683 + $0xa0] sm:$0x1] %vm594, %v673
        %690 = vst.msk [vmem:[%s683 + $0xc0] sm:$0x1] %vm594, %v674
        %691 = vst.msk [vmem:[%s683 + $0xe0] sm:$0x1] %vm594, %v675
        %v693 = vrot.slane %v667, 1
        %v694 = vrot.slane %v667, 2
        %v695 = vrot.slane %v667, 3
        %v696 = vrot.slane %v667, 4
        %v697 = vrot.slane %v667, 5
        %v698 = vrot.slane %v667, 6
        %v699 = vrot.slane %v667, 7
        %707 = vst.msk [vmem:[%s683 + $0x1] sm:$0x1] %vm594, %v667
        %708 = vst.msk [vmem:[%s683 + $0x21] sm:$0x1] %vm594, %v693
        %709 = vst.msk [vmem:[%s683 + $0x41] sm:$0x1] %vm594, %v694
        %710 = vst.msk [vmem:[%s683 + $0x61] sm:$0x1] %vm594, %v695
        %711 = vst.msk [vmem:[%s683 + $0x81] sm:$0x1] %vm594, %v696
        %712 = vst.msk [vmem:[%s683 + $0xa1] sm:$0x1] %vm594, %v697
        %713 = vst.msk [vmem:[%s683 + $0xc1] sm:$0x1] %vm594, %v698
        %714 = vst.msk [vmem:[%s683 + $0xe1] sm:$0x1] %vm594, %v699
        %715 = vrot.lane.b32.xlu0 %v419, 112
        %v716 = vpop.permute.xlu0 %715
        %v717 = vsel %vm555, %v716, 0
        %719 = vmatpush.msra.mxu0 0.0
        %720 = vmatpush.msra.mxu0 0.0
        %721 = vmatpush.msra.mxu0 0.0
        %722 = vmatpush.msra.mxu0 0.0
        %723 = vmatpush.msra.mxu0 0.0
        %724 = vmatpush.msra.mxu0 0.0
        %725 = vmatpush.msra.mxu0 0.0
        %726 = vmatpush.msra.mxu0 0.0
        %727 = vmatpush.msra.mxu0 0.0
        %728 = vmatpush.msra.mxu0 0.0
        %729 = vmatpush.msra.mxu0 0.0
        %730 = vmatpush.msra.mxu0 0.0
        %731 = vmatpush.msra.mxu0 0.0
        %732 = vmatpush.msra.mxu0 0.0
        %733 = vmatpush.msra.mxu0 %v549
        %734 = vmatpush.msra.mxu0 %v548
        %735 = vmatmul.f32.gmra.mxu0 %v717
        %v736 = vpop.f32.mrf.mxu0
        %v737 = vadd.f32 0.0, %v736
        %738 = vdwg.mxu0
        %v740 = vrot.slane %v737, 1
        %v741 = vrot.slane %v737, 2
        %v742 = vrot.slane %v737, 3
        %v743 = vrot.slane %v737, 4
        %v744 = vrot.slane %v737, 5
        %v745 = vrot.slane %v737, 6
        %v746 = vrot.slane %v737, 7
        %754 = vst.msk [vmem:[#allocation2 + $0x1] sm:$0x1] %vm594, %v737
        %755 = vst.msk [vmem:[#allocation2 + $0x11] sm:$0x1] %vm594, %v740
        %756 = vst.msk [vmem:[#allocation2 + $0x21] sm:$0x1] %vm594, %v741
        %757 = vst.msk [vmem:[#allocation2 + $0x31] sm:$0x1] %vm594, %v742
        %758 = vst.msk [vmem:[#allocation2 + $0x41] sm:$0x1] %vm594, %v743
        %759 = vst.msk [vmem:[#allocation2 + $0x51] sm:$0x1] %vm594, %v744
        %760 = vst.msk [vmem:[#allocation2 + $0x61] sm:$0x1] %vm594, %v745
        %761 = vst.msk [vmem:[#allocation2 + $0x71] sm:$0x1] %vm594, %v746
        %762 = vrot.lane.b32.xlu0 %v514, 112
        %v763 = vpop.permute.xlu0 %762
        %764 = vrot.lane.b32.xlu0 %v517, 112
        %v765 = vpop.permute.xlu0 %764
        %v766 = vsel %vm555, %v763, 0
        %v768 = vsel %vm555, %v765, 0
        %770 = vmatpush.msra.mxu0 0.0
        %771 = vmatpush.msra.mxu0 0.0
        %772 = vmatpush.msra.mxu0 0.0
        %773 = vmatpush.msra.mxu0 0.0
        %774 = vmatpush.msra.mxu0 0.0
        %775 = vmatpush.msra.mxu0 0.0
        %776 = vmatpush.msra.mxu0 0.0
        %777 = vmatpush.msra.mxu0 0.0
        %778 = vmatpush.msra.mxu0 0.0
        %779 = vmatpush.msra.mxu0 0.0
        %780 = vmatpush.msra.mxu0 0.0
        %781 = vmatpush.msra.mxu0 0.0
        %782 = vmatpush.msra.mxu0 0.0
        %783 = vmatpush.msra.mxu0 0.0
        %784 = vmatpush.msra.mxu0 %v554
        %785 = vmatpush.msra.mxu0 %v553
        %786 = vmatmul.f32.gmra.mxu0 %v766
        %v787 = vpop.f32.mrf.mxu0
        %v788 = vadd.f32 0.0, %v787
        %789 = vmatmul.f32.gmra.mxu0 %v768
        %v790 = vpop.f32.mrf.mxu0
        %v791 = vadd.f32 0.0, %v790
        %792 = vdwg.mxu0
        %793 = vrot.lane.b32.xlu0 %v508, 112
        %v794 = vpop.permute.xlu0 %793
        %795 = vrot.lane.b32.xlu0 %v511, 112
        %v796 = vpop.permute.xlu0 %795
        %v797 = vsel %vm555, %v794, 0
        %v799 = vsel %vm555, %v796, 0
        %801 = vmatpush.msra.mxu0 0.0
        %802 = vmatpush.msra.mxu0 0.0
        %803 = vmatpush.msra.mxu0 0.0
        %804 = vmatpush.msra.mxu0 0.0
        %805 = vmatpush.msra.mxu0 0.0
        %806 = vmatpush.msra.mxu0 0.0
        %807 = vmatpush.msra.mxu0 0.0
        %808 = vmatpush.msra.mxu0 0.0
        %809 = vmatpush.msra.mxu0 0.0
        %810 = vmatpush.msra.mxu0 0.0
        %811 = vmatpush.msra.mxu0 0.0
        %812 = vmatpush.msra.mxu0 0.0
        %813 = vmatpush.msra.mxu0 0.0
        %814 = vmatpush.msra.mxu0 0.0
        %815 = vmatpush.msra.mxu0 %v551
        %816 = vmatpush.msra.mxu0 %v550
        %817 = vmatmul.f32.gmra.mxu0 %v797
        %v818 = vpop.f32.mrf.mxu0
        %v819 = vadd.f32 %v788, %v818
        %820 = vmatmul.f32.gmra.mxu0 %v799
        %v821 = vpop.f32.mrf.mxu0
        %v822 = vadd.f32 %v791, %v821
        %823 = vdwg.mxu0
        %vm824 = vcmp.ge.f32.partialorder %v819, 0.0
        %vm825 = vcmp.ge.f32.partialorder %v822, 0.0
        %v826 = vmul.f32 %v663, %v819
        %v827 = vmul.f32 %v663, %v822
        %v828 = vsel %vm824, %v819, %v826
        %v829 = vsel %vm825, %v822, %v827
        %v831 = vrot.slane %v828, 1
        %v832 = vrot.slane %v828, 2
        %v833 = vrot.slane %v828, 3
        %v834 = vrot.slane %v828, 4
        %v835 = vrot.slane %v828, 5
        %v836 = vrot.slane %v828, 6
        %v837 = vrot.slane %v828, 7
        %845 = vst.msk [vmem:[%s683 + $0x2] sm:$0x1] %vm594, %v828
        %846 = vst.msk [vmem:[%s683 + $0x22] sm:$0x1] %vm594, %v831
        %847 = vst.msk [vmem:[%s683 + $0x42] sm:$0x1] %vm594, %v832
        %848 = vst.msk [vmem:[%s683 + $0x62] sm:$0x1] %vm594, %v833
        %849 = vst.msk [vmem:[%s683 + $0x82] sm:$0x1] %vm594, %v834
        %850 = vst.msk [vmem:[%s683 + $0xa2] sm:$0x1] %vm594, %v835
        %851 = vst.msk [vmem:[%s683 + $0xc2] sm:$0x1] %vm594, %v836
        %852 = vst.msk [vmem:[%s683 + $0xe2] sm:$0x1] %vm594, %v837
        %v854 = vrot.slane %v829, 1
        %v855 = vrot.slane %v829, 2
        %v856 = vrot.slane %v829, 3
        %v857 = vrot.slane %v829, 4
        %v858 = vrot.slane %v829, 5
        %v859 = vrot.slane %v829, 6
        %v860 = vrot.slane %v829, 7
        %868 = vst.msk [vmem:[%s683 + $0x3] sm:$0x1] %vm594, %v829
        %869 = vst.msk [vmem:[%s683 + $0x23] sm:$0x1] %vm594, %v854
        %870 = vst.msk [vmem:[%s683 + $0x43] sm:$0x1] %vm594, %v855
        %871 = vst.msk [vmem:[%s683 + $0x63] sm:$0x1] %vm594, %v856
        %872 = vst.msk [vmem:[%s683 + $0x83] sm:$0x1] %vm594, %v857
        %873 = vst.msk [vmem:[%s683 + $0xa3] sm:$0x1] %vm594, %v858
        %874 = vst.msk [vmem:[%s683 + $0xc3] sm:$0x1] %vm594, %v859
        %875 = vst.msk [vmem:[%s683 + $0xe3] sm:$0x1] %vm594, %v860
        %876 = vrot.lane.b32.xlu0 %v419, 96
        %v877 = vpop.permute.xlu0 %876
        %v878 = vsel %vm555, %v877, 0
        %880 = vmatpush.msra.mxu0 0.0
        %881 = vmatpush.msra.mxu0 0.0
        %882 = vmatpush.msra.mxu0 0.0
        %883 = vmatpush.msra.mxu0 0.0
        %884 = vmatpush.msra.mxu0 0.0
        %885 = vmatpush.msra.mxu0 0.0
        %886 = vmatpush.msra.mxu0 0.0
        %887 = vmatpush.msra.mxu0 0.0
        %888 = vmatpush.msra.mxu0 0.0
        %889 = vmatpush.msra.mxu0 0.0
        %890 = vmatpush.msra.mxu0 0.0
        %891 = vmatpush.msra.mxu0 0.0
        %892 = vmatpush.msra.mxu0 0.0
        %893 = vmatpush.msra.mxu0 0.0
        %894 = vmatpush.msra.mxu0 %v549
        %895 = vmatpush.msra.mxu0 %v548
        %896 = vmatmul.f32.gmra.mxu0 %v878
        %v897 = vpop.f32.mrf.mxu0
        %v898 = vadd.f32 0.0, %v897
        %899 = vdwg.mxu0
        %v901 = vrot.slane %v898, 1
        %v902 = vrot.slane %v898, 2
        %v903 = vrot.slane %v898, 3
        %v904 = vrot.slane %v898, 4
        %v905 = vrot.slane %v898, 5
        %v906 = vrot.slane %v898, 6
        %v907 = vrot.slane %v898, 7
        %915 = vst.msk [vmem:[#allocation2 + $0x2] sm:$0x1] %vm594, %v898
        %916 = vst.msk [vmem:[#allocation2 + $0x12] sm:$0x1] %vm594, %v901
        %917 = vst.msk [vmem:[#allocation2 + $0x22] sm:$0x1] %vm594, %v902
        %918 = vst.msk [vmem:[#allocation2 + $0x32] sm:$0x1] %vm594, %v903
        %919 = vst.msk [vmem:[#allocation2 + $0x42] sm:$0x1] %vm594, %v904
        %920 = vst.msk [vmem:[#allocation2 + $0x52] sm:$0x1] %vm594, %v905
        %921 = vst.msk [vmem:[#allocation2 + $0x62] sm:$0x1] %vm594, %v906
        %922 = vst.msk [vmem:[#allocation2 + $0x72] sm:$0x1] %vm594, %v907
        %923 = vrot.lane.b32.xlu0 %v514, 96
        %v924 = vpop.permute.xlu0 %923
        %925 = vrot.lane.b32.xlu0 %v517, 96
        %v926 = vpop.permute.xlu0 %925
        %v927 = vsel %vm555, %v924, 0
        %v929 = vsel %vm555, %v926, 0
        %931 = vmatpush.msra.mxu0 0.0
        %932 = vmatpush.msra.mxu0 0.0
        %933 = vmatpush.msra.mxu0 0.0
        %934 = vmatpush.msra.mxu0 0.0
        %935 = vmatpush.msra.mxu0 0.0
        %936 = vmatpush.msra.mxu0 0.0
        %937 = vmatpush.msra.mxu0 0.0
        %938 = vmatpush.msra.mxu0 0.0
        %939 = vmatpush.msra.mxu0 0.0
        %940 = vmatpush.msra.mxu0 0.0
        %941 = vmatpush.msra.mxu0 0.0
        %942 = vmatpush.msra.mxu0 0.0
        %943 = vmatpush.msra.mxu0 0.0
        %944 = vmatpush.msra.mxu0 0.0
        %945 = vmatpush.msra.mxu0 %v554
        %946 = vmatpush.msra.mxu0 %v553
        %947 = vmatmul.f32.gmra.mxu0 %v927
        %v948 = vpop.f32.mrf.mxu0
        %v949 = vadd.f32 0.0, %v948
        %950 = vmatmul.f32.gmra.mxu0 %v929
        %v951 = vpop.f32.mrf.mxu0
        %v952 = vadd.f32 0.0, %v951
        %953 = vdwg.mxu0
        %954 = vrot.lane.b32.xlu0 %v508, 96
        %v955 = vpop.permute.xlu0 %954
        %956 = vrot.lane.b32.xlu0 %v511, 96
        %v957 = vpop.permute.xlu0 %956
        %v958 = vsel %vm555, %v955, 0
        %v960 = vsel %vm555, %v957, 0
        %962 = vmatpush.msra.mxu0 0.0
        %963 = vmatpush.msra.mxu0 0.0
        %964 = vmatpush.msra.mxu0 0.0
        %965 = vmatpush.msra.mxu0 0.0
        %966 = vmatpush.msra.mxu0 0.0
        %967 = vmatpush.msra.mxu0 0.0
        %968 = vmatpush.msra.mxu0 0.0
        %969 = vmatpush.msra.mxu0 0.0
        %970 = vmatpush.msra.mxu0 0.0
        %971 = vmatpush.msra.mxu0 0.0
        %972 = vmatpush.msra.mxu0 0.0
        %973 = vmatpush.msra.mxu0 0.0
        %974 = vmatpush.msra.mxu0 0.0
        %975 = vmatpush.msra.mxu0 0.0
        %976 = vmatpush.msra.mxu0 %v551
        %977 = vmatpush.msra.mxu0 %v550
        %978 = vmatmul.f32.gmra.mxu0 %v958
        %v979 = vpop.f32.mrf.mxu0
        %v980 = vadd.f32 %v949, %v979
        %981 = vmatmul.f32.gmra.mxu0 %v960
        %v982 = vpop.f32.mrf.mxu0
        %v983 = vadd.f32 %v952, %v982
        %984 = vdwg.mxu0
        %vm985 = vcmp.ge.f32.partialorder %v980, 0.0
        %vm986 = vcmp.ge.f32.partialorder %v983, 0.0
        %v987 = vmul.f32 %v663, %v980
        %v988 = vmul.f32 %v663, %v983
        %v989 = vsel %vm985, %v980, %v987
        %v990 = vsel %vm986, %v983, %v988
        %v992 = vrot.slane %v989, 1
        %v993 = vrot.slane %v989, 2
        %v994 = vrot.slane %v989, 3
        %v995 = vrot.slane %v989, 4
        %v996 = vrot.slane %v989, 5
        %v997 = vrot.slane %v989, 6
        %v998 = vrot.slane %v989, 7
        %1006 = vst.msk [vmem:[%s683 + $0x4] sm:$0x1] %vm594, %v989
        %1007 = vst.msk [vmem:[%s683 + $0x24] sm:$0x1] %vm594, %v992
        %1008 = vst.msk [vmem:[%s683 + $0x44] sm:$0x1] %vm594, %v993
        %1009 = vst.msk [vmem:[%s683 + $0x64] sm:$0x1] %vm594, %v994
        %1010 = vst.msk [vmem:[%s683 + $0x84] sm:$0x1] %vm594, %v995
        %1011 = vst.msk [vmem:[%s683 + $0xa4] sm:$0x1] %vm594, %v996
        %1012 = vst.msk [vmem:[%s683 + $0xc4] sm:$0x1] %vm594, %v997
        %1013 = vst.msk [vmem:[%s683 + $0xe4] sm:$0x1] %vm594, %v998
        %v1015 = vrot.slane %v990, 1
        %v1016 = vrot.slane %v990, 2
        %v1017 = vrot.slane %v990, 3
        %v1018 = vrot.slane %v990, 4
        %v1019 = vrot.slane %v990, 5
        %v1020 = vrot.slane %v990, 6
        %v1021 = vrot.slane %v990, 7
        %1029 = vst.msk [vmem:[%s683 + $0x5] sm:$0x1] %vm594, %v990
        %1030 = vst.msk [vmem:[%s683 + $0x25] sm:$0x1] %vm594, %v1015
        %1031 = vst.msk [vmem:[%s683 + $0x45] sm:$0x1] %vm594, %v1016
        %1032 = vst.msk [vmem:[%s683 + $0x65] sm:$0x1] %vm594, %v1017
        %1033 = vst.msk [vmem:[%s683 + $0x85] sm:$0x1] %vm594, %v1018
        %1034 = vst.msk [vmem:[%s683 + $0xa5] sm:$0x1] %vm594, %v1019
        %1035 = vst.msk [vmem:[%s683 + $0xc5] sm:$0x1] %vm594, %v1020
        %1036 = vst.msk [vmem:[%s683 + $0xe5] sm:$0x1] %vm594, %v1021
        %1037 = vrot.lane.b32.xlu0 %v419, 80
        %v1038 = vpop.permute.xlu0 %1037
        %v1039 = vsel %vm555, %v1038, 0
        %1041 = vmatpush.msra.mxu0 0.0
        %1042 = vmatpush.msra.mxu0 0.0
        %1043 = vmatpush.msra.mxu0 0.0
        %1044 = vmatpush.msra.mxu0 0.0
        %1045 = vmatpush.msra.mxu0 0.0
        %1046 = vmatpush.msra.mxu0 0.0
        %1047 = vmatpush.msra.mxu0 0.0
        %1048 = vmatpush.msra.mxu0 0.0
        %1049 = vmatpush.msra.mxu0 0.0
        %1050 = vmatpush.msra.mxu0 0.0
        %1051 = vmatpush.msra.mxu0 0.0
        %1052 = vmatpush.msra.mxu0 0.0
        %1053 = vmatpush.msra.mxu0 0.0
        %1054 = vmatpush.msra.mxu0 0.0
        %1055 = vmatpush.msra.mxu0 %v549
        %1056 = vmatpush.msra.mxu0 %v548
        %1057 = vmatmul.f32.gmra.mxu0 %v1039
        %v1058 = vpop.f32.mrf.mxu0
        %v1059 = vadd.f32 0.0, %v1058
        %1060 = vdwg.mxu0
        %v1062 = vrot.slane %v1059, 1
        %v1063 = vrot.slane %v1059, 2
        %v1064 = vrot.slane %v1059, 3
        %v1065 = vrot.slane %v1059, 4
        %v1066 = vrot.slane %v1059, 5
        %v1067 = vrot.slane %v1059, 6
        %v1068 = vrot.slane %v1059, 7
        %1076 = vst.msk [vmem:[#allocation2 + $0x3] sm:$0x1] %vm594, %v1059
        %1077 = vst.msk [vmem:[#allocation2 + $0x13] sm:$0x1] %vm594, %v1062
        %1078 = vst.msk [vmem:[#allocation2 + $0x23] sm:$0x1] %vm594, %v1063
        %1079 = vst.msk [vmem:[#allocation2 + $0x33] sm:$0x1] %vm594, %v1064
        %1080 = vst.msk [vmem:[#allocation2 + $0x43] sm:$0x1] %vm594, %v1065
        %1081 = vst.msk [vmem:[#allocation2 + $0x53] sm:$0x1] %vm594, %v1066
        %1082 = vst.msk [vmem:[#allocation2 + $0x63] sm:$0x1] %vm594, %v1067
        %1083 = vst.msk [vmem:[#allocation2 + $0x73] sm:$0x1] %vm594, %v1068
        %1084 = vrot.lane.b32.xlu0 %v514, 80
        %v1085 = vpop.permute.xlu0 %1084
        %1086 = vrot.lane.b32.xlu0 %v517, 80
        %v1087 = vpop.permute.xlu0 %1086
        %v1088 = vsel %vm555, %v1085, 0
        %v1090 = vsel %vm555, %v1087, 0
        %1092 = vmatpush.msra.mxu0 0.0
        %1093 = vmatpush.msra.mxu0 0.0
        %1094 = vmatpush.msra.mxu0 0.0
        %1095 = vmatpush.msra.mxu0 0.0
        %1096 = vmatpush.msra.mxu0 0.0
        %1097 = vmatpush.msra.mxu0 0.0
        %1098 = vmatpush.msra.mxu0 0.0
        %1099 = vmatpush.msra.mxu0 0.0
        %1100 = vmatpush.msra.mxu0 0.0
        %1101 = vmatpush.msra.mxu0 0.0
        %1102 = vmatpush.msra.mxu0 0.0
        %1103 = vmatpush.msra.mxu0 0.0
        %1104 = vmatpush.msra.mxu0 0.0
        %1105 = vmatpush.msra.mxu0 0.0
        %1106 = vmatpush.msra.mxu0 %v554
        %1107 = vmatpush.msra.mxu0 %v553
        %1108 = vmatmul.f32.gmra.mxu0 %v1088
        %v1109 = vpop.f32.mrf.mxu0
        %v1110 = vadd.f32 0.0, %v1109
        %1111 = vmatmul.f32.gmra.mxu0 %v1090
        %v1112 = vpop.f32.mrf.mxu0
        %v1113 = vadd.f32 0.0, %v1112
        %1114 = vdwg.mxu0
        %1115 = vrot.lane.b32.xlu0 %v508, 80
        %v1116 = vpop.permute.xlu0 %1115
        %1117 = vrot.lane.b32.xlu0 %v511, 80
        %v1118 = vpop.permute.xlu0 %1117
        %v1119 = vsel %vm555, %v1116, 0
        %v1121 = vsel %vm555, %v1118, 0
        %1123 = vmatpush.msra.mxu0 0.0
        %1124 = vmatpush.msra.mxu0 0.0
        %1125 = vmatpush.msra.mxu0 0.0
        %1126 = vmatpush.msra.mxu0 0.0
        %1127 = vmatpush.msra.mxu0 0.0
        %1128 = vmatpush.msra.mxu0 0.0
        %1129 = vmatpush.msra.mxu0 0.0
        %1130 = vmatpush.msra.mxu0 0.0
        %1131 = vmatpush.msra.mxu0 0.0
        %1132 = vmatpush.msra.mxu0 0.0
        %1133 = vmatpush.msra.mxu0 0.0
        %1134 = vmatpush.msra.mxu0 0.0
        %1135 = vmatpush.msra.mxu0 0.0
        %1136 = vmatpush.msra.mxu0 0.0
        %1137 = vmatpush.msra.mxu0 %v551
        %1138 = vmatpush.msra.mxu0 %v550
        %1139 = vmatmul.f32.gmra.mxu0 %v1119
        %v1140 = vpop.f32.mrf.mxu0
        %v1141 = vadd.f32 %v1110, %v1140
        %1142 = vmatmul.f32.gmra.mxu0 %v1121
        %v1143 = vpop.f32.mrf.mxu0
        %v1144 = vadd.f32 %v1113, %v1143
        %1145 = vdwg.mxu0
        %vm1146 = vcmp.ge.f32.partialorder %v1141, 0.0
        %vm1147 = vcmp.ge.f32.partialorder %v1144, 0.0
        %v1148 = vmul.f32 %v663, %v1141
        %v1149 = vmul.f32 %v663, %v1144
        %v1150 = vsel %vm1146, %v1141, %v1148
        %v1151 = vsel %vm1147, %v1144, %v1149
        %v1153 = vrot.slane %v1150, 1
        %v1154 = vrot.slane %v1150, 2
        %v1155 = vrot.slane %v1150, 3
        %v1156 = vrot.slane %v1150, 4
        %v1157 = vrot.slane %v1150, 5
        %v1158 = vrot.slane %v1150, 6
        %v1159 = vrot.slane %v1150, 7
        %1167 = vst.msk [vmem:[%s683 + $0x6] sm:$0x1] %vm594, %v1150
        %1168 = vst.msk [vmem:[%s683 + $0x26] sm:$0x1] %vm594, %v1153
        %1169 = vst.msk [vmem:[%s683 + $0x46] sm:$0x1] %vm594, %v1154
        %1170 = vst.msk [vmem:[%s683 + $0x66] sm:$0x1] %vm594, %v1155
        %1171 = vst.msk [vmem:[%s683 + $0x86] sm:$0x1] %vm594, %v1156
        %1172 = vst.msk [vmem:[%s683 + $0xa6] sm:$0x1] %vm594, %v1157
        %1173 = vst.msk [vmem:[%s683 + $0xc6] sm:$0x1] %vm594, %v1158
        %1174 = vst.msk [vmem:[%s683 + $0xe6] sm:$0x1] %vm594, %v1159
        %v1176 = vrot.slane %v1151, 1
        %v1177 = vrot.slane %v1151, 2
        %v1178 = vrot.slane %v1151, 3
        %v1179 = vrot.slane %v1151, 4
        %v1180 = vrot.slane %v1151, 5
        %v1181 = vrot.slane %v1151, 6
        %v1182 = vrot.slane %v1151, 7
        %1190 = vst.msk [vmem:[%s683 + $0x7] sm:$0x1] %vm594, %v1151
        %1191 = vst.msk [vmem:[%s683 + $0x27] sm:$0x1] %vm594, %v1176
        %1192 = vst.msk [vmem:[%s683 + $0x47] sm:$0x1] %vm594, %v1177
        %1193 = vst.msk [vmem:[%s683 + $0x67] sm:$0x1] %vm594, %v1178
        %1194 = vst.msk [vmem:[%s683 + $0x87] sm:$0x1] %vm594, %v1179
        %1195 = vst.msk [vmem:[%s683 + $0xa7] sm:$0x1] %vm594, %v1180
        %1196 = vst.msk [vmem:[%s683 + $0xc7] sm:$0x1] %vm594, %v1181
        %1197 = vst.msk [vmem:[%s683 + $0xe7] sm:$0x1] %vm594, %v1182
        %1198 = vrot.lane.b32.xlu0 %v419, 64
        %v1199 = vpop.permute.xlu0 %1198
        %v1200 = vsel %vm555, %v1199, 0
        %1202 = vmatpush.msra.mxu0 0.0
        %1203 = vmatpush.msra.mxu0 0.0
        %1204 = vmatpush.msra.mxu0 0.0
        %1205 = vmatpush.msra.mxu0 0.0
        %1206 = vmatpush.msra.mxu0 0.0
        %1207 = vmatpush.msra.mxu0 0.0
        %1208 = vmatpush.msra.mxu0 0.0
        %1209 = vmatpush.msra.mxu0 0.0
        %1210 = vmatpush.msra.mxu0 0.0
        %1211 = vmatpush.msra.mxu0 0.0
        %1212 = vmatpush.msra.mxu0 0.0
        %1213 = vmatpush.msra.mxu0 0.0
        %1214 = vmatpush.msra.mxu0 0.0
        %1215 = vmatpush.msra.mxu0 0.0
        %1216 = vmatpush.msra.mxu0 %v549
        %1217 = vmatpush.msra.mxu0 %v548
        %1218 = vmatmul.f32.gmra.mxu0 %v1200
        %v1219 = vpop.f32.mrf.mxu0
        %v1220 = vadd.f32 0.0, %v1219
        %1221 = vdwg.mxu0
        %v1223 = vrot.slane %v1220, 1
        %v1224 = vrot.slane %v1220, 2
        %v1225 = vrot.slane %v1220, 3
        %v1226 = vrot.slane %v1220, 4
        %v1227 = vrot.slane %v1220, 5
        %v1228 = vrot.slane %v1220, 6
        %v1229 = vrot.slane %v1220, 7
        %1237 = vst.msk [vmem:[#allocation2 + $0x4] sm:$0x1] %vm594, %v1220
        %1238 = vst.msk [vmem:[#allocation2 + $0x14] sm:$0x1] %vm594, %v1223
        %1239 = vst.msk [vmem:[#allocation2 + $0x24] sm:$0x1] %vm594, %v1224
        %1240 = vst.msk [vmem:[#allocation2 + $0x34] sm:$0x1] %vm594, %v1225
        %1241 = vst.msk [vmem:[#allocation2 + $0x44] sm:$0x1] %vm594, %v1226
        %1242 = vst.msk [vmem:[#allocation2 + $0x54] sm:$0x1] %vm594, %v1227
        %1243 = vst.msk [vmem:[#allocation2 + $0x64] sm:$0x1] %vm594, %v1228
        %1244 = vst.msk [vmem:[#allocation2 + $0x74] sm:$0x1] %vm594, %v1229
        %1245 = vrot.lane.b32.xlu0 %v514, 64
        %v1246 = vpop.permute.xlu0 %1245
        %1247 = vrot.lane.b32.xlu0 %v517, 64
        %v1248 = vpop.permute.xlu0 %1247
        %v1249 = vsel %vm555, %v1246, 0
        %v1251 = vsel %vm555, %v1248, 0
        %1253 = vmatpush.msra.mxu0 0.0
        %1254 = vmatpush.msra.mxu0 0.0
        %1255 = vmatpush.msra.mxu0 0.0
        %1256 = vmatpush.msra.mxu0 0.0
        %1257 = vmatpush.msra.mxu0 0.0
        %1258 = vmatpush.msra.mxu0 0.0
        %1259 = vmatpush.msra.mxu0 0.0
        %1260 = vmatpush.msra.mxu0 0.0
        %1261 = vmatpush.msra.mxu0 0.0
        %1262 = vmatpush.msra.mxu0 0.0
        %1263 = vmatpush.msra.mxu0 0.0
        %1264 = vmatpush.msra.mxu0 0.0
        %1265 = vmatpush.msra.mxu0 0.0
        %1266 = vmatpush.msra.mxu0 0.0
        %1267 = vmatpush.msra.mxu0 %v554
        %1268 = vmatpush.msra.mxu0 %v553
        %1269 = vmatmul.f32.gmra.mxu0 %v1249
        %v1270 = vpop.f32.mrf.mxu0
        %v1271 = vadd.f32 0.0, %v1270
        %1272 = vmatmul.f32.gmra.mxu0 %v1251
        %v1273 = vpop.f32.mrf.mxu0
        %v1274 = vadd.f32 0.0, %v1273
        %1275 = vdwg.mxu0
        %1276 = vrot.lane.b32.xlu0 %v508, 64
        %v1277 = vpop.permute.xlu0 %1276
        %1278 = vrot.lane.b32.xlu0 %v511, 64
        %v1279 = vpop.permute.xlu0 %1278
        %v1280 = vsel %vm555, %v1277, 0
        %v1282 = vsel %vm555, %v1279, 0
        %1284 = vmatpush.msra.mxu0 0.0
        %1285 = vmatpush.msra.mxu0 0.0
        %1286 = vmatpush.msra.mxu0 0.0
        %1287 = vmatpush.msra.mxu0 0.0
        %1288 = vmatpush.msra.mxu0 0.0
        %1289 = vmatpush.msra.mxu0 0.0
        %1290 = vmatpush.msra.mxu0 0.0
        %1291 = vmatpush.msra.mxu0 0.0
        %1292 = vmatpush.msra.mxu0 0.0
        %1293 = vmatpush.msra.mxu0 0.0
        %1294 = vmatpush.msra.mxu0 0.0
        %1295 = vmatpush.msra.mxu0 0.0
        %1296 = vmatpush.msra.mxu0 0.0
        %1297 = vmatpush.msra.mxu0 0.0
        %1298 = vmatpush.msra.mxu0 %v551
        %1299 = vmatpush.msra.mxu0 %v550
        %1300 = vmatmul.f32.gmra.mxu0 %v1280
        %v1301 = vpop.f32.mrf.mxu0
        %v1302 = vadd.f32 %v1271, %v1301
        %1303 = vmatmul.f32.gmra.mxu0 %v1282
        %v1304 = vpop.f32.mrf.mxu0
        %v1305 = vadd.f32 %v1274, %v1304
        %1306 = vdwg.mxu0
        %vm1307 = vcmp.ge.f32.partialorder %v1302, 0.0
        %vm1308 = vcmp.ge.f32.partialorder %v1305, 0.0
        %v1309 = vmul.f32 %v663, %v1302
        %v1310 = vmul.f32 %v663, %v1305
        %v1311 = vsel %vm1307, %v1302, %v1309
        %v1312 = vsel %vm1308, %v1305, %v1310
        %v1314 = vrot.slane %v1311, 1
        %v1315 = vrot.slane %v1311, 2
        %v1316 = vrot.slane %v1311, 3
        %v1317 = vrot.slane %v1311, 4
        %v1318 = vrot.slane %v1311, 5
        %v1319 = vrot.slane %v1311, 6
        %v1320 = vrot.slane %v1311, 7
        %1328 = vst.msk [vmem:[%s683 + $0x8] sm:$0x1] %vm594, %v1311
        %1329 = vst.msk [vmem:[%s683 + $0x28] sm:$0x1] %vm594, %v1314
        %1330 = vst.msk [vmem:[%s683 + $0x48] sm:$0x1] %vm594, %v1315
        %1331 = vst.msk [vmem:[%s683 + $0x68] sm:$0x1] %vm594, %v1316
        %1332 = vst.msk [vmem:[%s683 + $0x88] sm:$0x1] %vm594, %v1317
        %1333 = vst.msk [vmem:[%s683 + $0xa8] sm:$0x1] %vm594, %v1318
        %1334 = vst.msk [vmem:[%s683 + $0xc8] sm:$0x1] %vm594, %v1319
        %1335 = vst.msk [vmem:[%s683 + $0xe8] sm:$0x1] %vm594, %v1320
        %v1337 = vrot.slane %v1312, 1
        %v1338 = vrot.slane %v1312, 2
        %v1339 = vrot.slane %v1312, 3
        %v1340 = vrot.slane %v1312, 4
        %v1341 = vrot.slane %v1312, 5
        %v1342 = vrot.slane %v1312, 6
        %v1343 = vrot.slane %v1312, 7
        %1351 = vst.msk [vmem:[%s683 + $0x9] sm:$0x1] %vm594, %v1312
        %1352 = vst.msk [vmem:[%s683 + $0x29] sm:$0x1] %vm594, %v1337
        %1353 = vst.msk [vmem:[%s683 + $0x49] sm:$0x1] %vm594, %v1338
        %1354 = vst.msk [vmem:[%s683 + $0x69] sm:$0x1] %vm594, %v1339
        %1355 = vst.msk [vmem:[%s683 + $0x89] sm:$0x1] %vm594, %v1340
        %1356 = vst.msk [vmem:[%s683 + $0xa9] sm:$0x1] %vm594, %v1341
        %1357 = vst.msk [vmem:[%s683 + $0xc9] sm:$0x1] %vm594, %v1342
        %1358 = vst.msk [vmem:[%s683 + $0xe9] sm:$0x1] %vm594, %v1343
        %1359 = vrot.lane.b32.xlu0 %v419, 48
        %v1360 = vpop.permute.xlu0 %1359
        %v1361 = vsel %vm555, %v1360, 0
        %1363 = vmatpush.msra.mxu0 0.0
        %1364 = vmatpush.msra.mxu0 0.0
        %1365 = vmatpush.msra.mxu0 0.0
        %1366 = vmatpush.msra.mxu0 0.0
        %1367 = vmatpush.msra.mxu0 0.0
        %1368 = vmatpush.msra.mxu0 0.0
        %1369 = vmatpush.msra.mxu0 0.0
        %1370 = vmatpush.msra.mxu0 0.0
        %1371 = vmatpush.msra.mxu0 0.0
        %1372 = vmatpush.msra.mxu0 0.0
        %1373 = vmatpush.msra.mxu0 0.0
        %1374 = vmatpush.msra.mxu0 0.0
        %1375 = vmatpush.msra.mxu0 0.0
        %1376 = vmatpush.msra.mxu0 0.0
        %1377 = vmatpush.msra.mxu0 %v549
        %1378 = vmatpush.msra.mxu0 %v548
        %1379 = vmatmul.f32.gmra.mxu0 %v1361
        %v1380 = vpop.f32.mrf.mxu0
        %v1381 = vadd.f32 0.0, %v1380
        %1382 = vdwg.mxu0
        %v1384 = vrot.slane %v1381, 1
        %v1385 = vrot.slane %v1381, 2
        %v1386 = vrot.slane %v1381, 3
        %v1387 = vrot.slane %v1381, 4
        %v1388 = vrot.slane %v1381, 5
        %v1389 = vrot.slane %v1381, 6
        %v1390 = vrot.slane %v1381, 7
        %1398 = vst.msk [vmem:[#allocation2 + $0x5] sm:$0x1] %vm594, %v1381
        %1399 = vst.msk [vmem:[#allocation2 + $0x15] sm:$0x1] %vm594, %v1384
        %1400 = vst.msk [vmem:[#allocation2 + $0x25] sm:$0x1] %vm594, %v1385
        %1401 = vst.msk [vmem:[#allocation2 + $0x35] sm:$0x1] %vm594, %v1386
        %1402 = vst.msk [vmem:[#allocation2 + $0x45] sm:$0x1] %vm594, %v1387
        %1403 = vst.msk [vmem:[#allocation2 + $0x55] sm:$0x1] %vm594, %v1388
        %1404 = vst.msk [vmem:[#allocation2 + $0x65] sm:$0x1] %vm594, %v1389
        %1405 = vst.msk [vmem:[#allocation2 + $0x75] sm:$0x1] %vm594, %v1390
        %1406 = vrot.lane.b32.xlu0 %v514, 48
        %v1407 = vpop.permute.xlu0 %1406
        %1408 = vrot.lane.b32.xlu0 %v517, 48
        %v1409 = vpop.permute.xlu0 %1408
        %v1410 = vsel %vm555, %v1407, 0
        %v1412 = vsel %vm555, %v1409, 0
        %1414 = vmatpush.msra.mxu0 0.0
        %1415 = vmatpush.msra.mxu0 0.0
        %1416 = vmatpush.msra.mxu0 0.0
        %1417 = vmatpush.msra.mxu0 0.0
        %1418 = vmatpush.msra.mxu0 0.0
        %1419 = vmatpush.msra.mxu0 0.0
        %1420 = vmatpush.msra.mxu0 0.0
        %1421 = vmatpush.msra.mxu0 0.0
        %1422 = vmatpush.msra.mxu0 0.0
        %1423 = vmatpush.msra.mxu0 0.0
        %1424 = vmatpush.msra.mxu0 0.0
        %1425 = vmatpush.msra.mxu0 0.0
        %1426 = vmatpush.msra.mxu0 0.0
        %1427 = vmatpush.msra.mxu0 0.0
        %1428 = vmatpush.msra.mxu0 %v554
        %1429 = vmatpush.msra.mxu0 %v553
        %1430 = vmatmul.f32.gmra.mxu0 %v1410
        %v1431 = vpop.f32.mrf.mxu0
        %v1432 = vadd.f32 0.0, %v1431
        %1433 = vmatmul.f32.gmra.mxu0 %v1412
        %v1434 = vpop.f32.mrf.mxu0
        %v1435 = vadd.f32 0.0, %v1434
        %1436 = vdwg.mxu0
        %1437 = vrot.lane.b32.xlu0 %v508, 48
        %v1438 = vpop.permute.xlu0 %1437
        %1439 = vrot.lane.b32.xlu0 %v511, 48
        %v1440 = vpop.permute.xlu0 %1439
        %v1441 = vsel %vm555, %v1438, 0
        %v1443 = vsel %vm555, %v1440, 0
        %1445 = vmatpush.msra.mxu0 0.0
        %1446 = vmatpush.msra.mxu0 0.0
        %1447 = vmatpush.msra.mxu0 0.0
        %1448 = vmatpush.msra.mxu0 0.0
        %1449 = vmatpush.msra.mxu0 0.0
        %1450 = vmatpush.msra.mxu0 0.0
        %1451 = vmatpush.msra.mxu0 0.0
        %1452 = vmatpush.msra.mxu0 0.0
        %1453 = vmatpush.msra.mxu0 0.0
        %1454 = vmatpush.msra.mxu0 0.0
        %1455 = vmatpush.msra.mxu0 0.0
        %1456 = vmatpush.msra.mxu0 0.0
        %1457 = vmatpush.msra.mxu0 0.0
        %1458 = vmatpush.msra.mxu0 0.0
        %1459 = vmatpush.msra.mxu0 %v551
        %1460 = vmatpush.msra.mxu0 %v550
        %1461 = vmatmul.f32.gmra.mxu0 %v1441
        %v1462 = vpop.f32.mrf.mxu0
        %v1463 = vadd.f32 %v1432, %v1462
        %1464 = vmatmul.f32.gmra.mxu0 %v1443
        %v1465 = vpop.f32.mrf.mxu0
        %v1466 = vadd.f32 %v1435, %v1465
        %1467 = vdwg.mxu0
        %vm1468 = vcmp.ge.f32.partialorder %v1463, 0.0
        %vm1469 = vcmp.ge.f32.partialorder %v1466, 0.0
        %v1470 = vmul.f32 %v663, %v1463
        %v1471 = vmul.f32 %v663, %v1466
        %v1472 = vsel %vm1468, %v1463, %v1470
        %v1473 = vsel %vm1469, %v1466, %v1471
        %v1475 = vrot.slane %v1472, 1
        %v1476 = vrot.slane %v1472, 2
        %v1477 = vrot.slane %v1472, 3
        %v1478 = vrot.slane %v1472, 4
        %v1479 = vrot.slane %v1472, 5
        %v1480 = vrot.slane %v1472, 6
        %v1481 = vrot.slane %v1472, 7
        %1489 = vst.msk [vmem:[%s683 + $0xa] sm:$0x1] %vm594, %v1472
        %1490 = vst.msk [vmem:[%s683 + $0x2a] sm:$0x1] %vm594, %v1475
        %1491 = vst.msk [vmem:[%s683 + $0x4a] sm:$0x1] %vm594, %v1476
        %1492 = vst.msk [vmem:[%s683 + $0x6a] sm:$0x1] %vm594, %v1477
        %1493 = vst.msk [vmem:[%s683 + $0x8a] sm:$0x1] %vm594, %v1478
        %1494 = vst.msk [vmem:[%s683 + $0xaa] sm:$0x1] %vm594, %v1479
        %1495 = vst.msk [vmem:[%s683 + $0xca] sm:$0x1] %vm594, %v1480
        %1496 = vst.msk [vmem:[%s683 + $0xea] sm:$0x1] %vm594, %v1481
        %v1498 = vrot.slane %v1473, 1
        %v1499 = vrot.slane %v1473, 2
        %v1500 = vrot.slane %v1473, 3
        %v1501 = vrot.slane %v1473, 4
        %v1502 = vrot.slane %v1473, 5
        %v1503 = vrot.slane %v1473, 6
        %v1504 = vrot.slane %v1473, 7
        %1512 = vst.msk [vmem:[%s683 + $0xb] sm:$0x1] %vm594, %v1473
        %1513 = vst.msk [vmem:[%s683 + $0x2b] sm:$0x1] %vm594, %v1498
        %1514 = vst.msk [vmem:[%s683 + $0x4b] sm:$0x1] %vm594, %v1499
        %1515 = vst.msk [vmem:[%s683 + $0x6b] sm:$0x1] %vm594, %v1500
        %1516 = vst.msk [vmem:[%s683 + $0x8b] sm:$0x1] %vm594, %v1501
        %1517 = vst.msk [vmem:[%s683 + $0xab] sm:$0x1] %vm594, %v1502
        %1518 = vst.msk [vmem:[%s683 + $0xcb] sm:$0x1] %vm594, %v1503
        %1519 = vst.msk [vmem:[%s683 + $0xeb] sm:$0x1] %vm594, %v1504
        %1520 = vrot.lane.b32.xlu0 %v419, 32
        %v1521 = vpop.permute.xlu0 %1520
        %v1522 = vsel %vm555, %v1521, 0
        %1524 = vmatpush.msra.mxu0 0.0
        %1525 = vmatpush.msra.mxu0 0.0
        %1526 = vmatpush.msra.mxu0 0.0
        %1527 = vmatpush.msra.mxu0 0.0
        %1528 = vmatpush.msra.mxu0 0.0
        %1529 = vmatpush.msra.mxu0 0.0
        %1530 = vmatpush.msra.mxu0 0.0
        %1531 = vmatpush.msra.mxu0 0.0
        %1532 = vmatpush.msra.mxu0 0.0
        %1533 = vmatpush.msra.mxu0 0.0
        %1534 = vmatpush.msra.mxu0 0.0
        %1535 = vmatpush.msra.mxu0 0.0
        %1536 = vmatpush.msra.mxu0 0.0
        %1537 = vmatpush.msra.mxu0 0.0
        %1538 = vmatpush.msra.mxu0 %v549
        %1539 = vmatpush.msra.mxu0 %v548
        %1540 = vmatmul.f32.gmra.mxu0 %v1522
        %v1541 = vpop.f32.mrf.mxu0
        %v1542 = vadd.f32 0.0, %v1541
        %1543 = vdwg.mxu0
        %v1545 = vrot.slane %v1542, 1
        %v1546 = vrot.slane %v1542, 2
        %v1547 = vrot.slane %v1542, 3
        %v1548 = vrot.slane %v1542, 4
        %v1549 = vrot.slane %v1542, 5
        %v1550 = vrot.slane %v1542, 6
        %v1551 = vrot.slane %v1542, 7
        %1559 = vst.msk [vmem:[#allocation2 + $0x6] sm:$0x1] %vm594, %v1542
        %1560 = vst.msk [vmem:[#allocation2 + $0x16] sm:$0x1] %vm594, %v1545
        %1561 = vst.msk [vmem:[#allocation2 + $0x26] sm:$0x1] %vm594, %v1546
        %1562 = vst.msk [vmem:[#allocation2 + $0x36] sm:$0x1] %vm594, %v1547
        %1563 = vst.msk [vmem:[#allocation2 + $0x46] sm:$0x1] %vm594, %v1548
        %1564 = vst.msk [vmem:[#allocation2 + $0x56] sm:$0x1] %vm594, %v1549
        %1565 = vst.msk [vmem:[#allocation2 + $0x66] sm:$0x1] %vm594, %v1550
        %1566 = vst.msk [vmem:[#allocation2 + $0x76] sm:$0x1] %vm594, %v1551
        %1567 = vrot.lane.b32.xlu0 %v514, 32
        %v1568 = vpop.permute.xlu0 %1567
        %1569 = vrot.lane.b32.xlu0 %v517, 32
        %v1570 = vpop.permute.xlu0 %1569
        %v1571 = vsel %vm555, %v1568, 0
        %v1573 = vsel %vm555, %v1570, 0
        %1575 = vmatpush.msra.mxu0 0.0
        %1576 = vmatpush.msra.mxu0 0.0
        %1577 = vmatpush.msra.mxu0 0.0
        %1578 = vmatpush.msra.mxu0 0.0
        %1579 = vmatpush.msra.mxu0 0.0
        %1580 = vmatpush.msra.mxu0 0.0
        %1581 = vmatpush.msra.mxu0 0.0
        %1582 = vmatpush.msra.mxu0 0.0
        %1583 = vmatpush.msra.mxu0 0.0
        %1584 = vmatpush.msra.mxu0 0.0
        %1585 = vmatpush.msra.mxu0 0.0
        %1586 = vmatpush.msra.mxu0 0.0
        %1587 = vmatpush.msra.mxu0 0.0
        %1588 = vmatpush.msra.mxu0 0.0
        %1589 = vmatpush.msra.mxu0 %v554
        %1590 = vmatpush.msra.mxu0 %v553
        %1591 = vmatmul.f32.gmra.mxu0 %v1571
        %v1592 = vpop.f32.mrf.mxu0
        %v1593 = vadd.f32 0.0, %v1592
        %1594 = vmatmul.f32.gmra.mxu0 %v1573
        %v1595 = vpop.f32.mrf.mxu0
        %v1596 = vadd.f32 0.0, %v1595
        %1597 = vdwg.mxu0
        %1598 = vrot.lane.b32.xlu0 %v508, 32
        %v1599 = vpop.permute.xlu0 %1598
        %1600 = vrot.lane.b32.xlu0 %v511, 32
        %v1601 = vpop.permute.xlu0 %1600
        %v1602 = vsel %vm555, %v1599, 0
        %v1604 = vsel %vm555, %v1601, 0
        %1606 = vmatpush.msra.mxu0 0.0
        %1607 = vmatpush.msra.mxu0 0.0
        %1608 = vmatpush.msra.mxu0 0.0
        %1609 = vmatpush.msra.mxu0 0.0
        %1610 = vmatpush.msra.mxu0 0.0
        %1611 = vmatpush.msra.mxu0 0.0
        %1612 = vmatpush.msra.mxu0 0.0
        %1613 = vmatpush.msra.mxu0 0.0
        %1614 = vmatpush.msra.mxu0 0.0
        %1615 = vmatpush.msra.mxu0 0.0
        %1616 = vmatpush.msra.mxu0 0.0
        %1617 = vmatpush.msra.mxu0 0.0
        %1618 = vmatpush.msra.mxu0 0.0
        %1619 = vmatpush.msra.mxu0 0.0
        %1620 = vmatpush.msra.mxu0 %v551
        %1621 = vmatpush.msra.mxu0 %v550
        %1622 = vmatmul.f32.gmra.mxu0 %v1602
        %v1623 = vpop.f32.mrf.mxu0
        %v1624 = vadd.f32 %v1593, %v1623
        %1625 = vmatmul.f32.gmra.mxu0 %v1604
        %v1626 = vpop.f32.mrf.mxu0
        %v1627 = vadd.f32 %v1596, %v1626
        %1628 = vdwg.mxu0
        %vm1629 = vcmp.ge.f32.partialorder %v1624, 0.0
        %vm1630 = vcmp.ge.f32.partialorder %v1627, 0.0
        %v1631 = vmul.f32 %v663, %v1624
        %v1632 = vmul.f32 %v663, %v1627
        %v1633 = vsel %vm1629, %v1624, %v1631
        %v1634 = vsel %vm1630, %v1627, %v1632
        %v1636 = vrot.slane %v1633, 1
        %v1637 = vrot.slane %v1633, 2
        %v1638 = vrot.slane %v1633, 3
        %v1639 = vrot.slane %v1633, 4
        %v1640 = vrot.slane %v1633, 5
        %v1641 = vrot.slane %v1633, 6
        %v1642 = vrot.slane %v1633, 7
        %1650 = vst.msk [vmem:[%s683 + $0xc] sm:$0x1] %vm594, %v1633
        %1651 = vst.msk [vmem:[%s683 + $0x2c] sm:$0x1] %vm594, %v1636
        %1652 = vst.msk [vmem:[%s683 + $0x4c] sm:$0x1] %vm594, %v1637
        %1653 = vst.msk [vmem:[%s683 + $0x6c] sm:$0x1] %vm594, %v1638
        %1654 = vst.msk [vmem:[%s683 + $0x8c] sm:$0x1] %vm594, %v1639
        %1655 = vst.msk [vmem:[%s683 + $0xac] sm:$0x1] %vm594, %v1640
        %1656 = vst.msk [vmem:[%s683 + $0xcc] sm:$0x1] %vm594, %v1641
        %1657 = vst.msk [vmem:[%s683 + $0xec] sm:$0x1] %vm594, %v1642
        %v1659 = vrot.slane %v1634, 1
        %v1660 = vrot.slane %v1634, 2
        %v1661 = vrot.slane %v1634, 3
        %v1662 = vrot.slane %v1634, 4
        %v1663 = vrot.slane %v1634, 5
        %v1664 = vrot.slane %v1634, 6
        %v1665 = vrot.slane %v1634, 7
        %1673 = vst.msk [vmem:[%s683 + $0xd] sm:$0x1] %vm594, %v1634
        %1674 = vst.msk [vmem:[%s683 + $0x2d] sm:$0x1] %vm594, %v1659
        %1675 = vst.msk [vmem:[%s683 + $0x4d] sm:$0x1] %vm594, %v1660
        %1676 = vst.msk [vmem:[%s683 + $0x6d] sm:$0x1] %vm594, %v1661
        %1677 = vst.msk [vmem:[%s683 + $0x8d] sm:$0x1] %vm594, %v1662
        %1678 = vst.msk [vmem:[%s683 + $0xad] sm:$0x1] %vm594, %v1663
        %1679 = vst.msk [vmem:[%s683 + $0xcd] sm:$0x1] %vm594, %v1664
        %1680 = vst.msk [vmem:[%s683 + $0xed] sm:$0x1] %vm594, %v1665
        %1681 = vrot.lane.b32.xlu0 %v419, 16
        %v1682 = vpop.permute.xlu0 %1681
        %v1683 = vsel %vm555, %v1682, 0
        %1685 = vmatpush.msra.mxu0 0.0
        %1686 = vmatpush.msra.mxu0 0.0
        %1687 = vmatpush.msra.mxu0 0.0
        %1688 = vmatpush.msra.mxu0 0.0
        %1689 = vmatpush.msra.mxu0 0.0
        %1690 = vmatpush.msra.mxu0 0.0
        %1691 = vmatpush.msra.mxu0 0.0
        %1692 = vmatpush.msra.mxu0 0.0
        %1693 = vmatpush.msra.mxu0 0.0
        %1694 = vmatpush.msra.mxu0 0.0
        %1695 = vmatpush.msra.mxu0 0.0
        %1696 = vmatpush.msra.mxu0 0.0
        %1697 = vmatpush.msra.mxu0 0.0
        %1698 = vmatpush.msra.mxu0 0.0
        %1699 = vmatpush.msra.mxu0 %v549
        %1700 = vmatpush.msra.mxu0 %v548
        %1701 = vmatmul.f32.gmra.mxu0 %v1683
        %v1702 = vpop.f32.mrf.mxu0
        %v1703 = vadd.f32 0.0, %v1702
        %1704 = vdwg.mxu0
        %v1706 = vrot.slane %v1703, 1
        %v1707 = vrot.slane %v1703, 2
        %v1708 = vrot.slane %v1703, 3
        %v1709 = vrot.slane %v1703, 4
        %v1710 = vrot.slane %v1703, 5
        %v1711 = vrot.slane %v1703, 6
        %v1712 = vrot.slane %v1703, 7
        %1720 = vst.msk [vmem:[#allocation2 + $0x7] sm:$0x1] %vm594, %v1703
        %1721 = vst.msk [vmem:[#allocation2 + $0x17] sm:$0x1] %vm594, %v1706
        %1722 = vst.msk [vmem:[#allocation2 + $0x27] sm:$0x1] %vm594, %v1707
        %1723 = vst.msk [vmem:[#allocation2 + $0x37] sm:$0x1] %vm594, %v1708
        %1724 = vst.msk [vmem:[#allocation2 + $0x47] sm:$0x1] %vm594, %v1709
        %1725 = vst.msk [vmem:[#allocation2 + $0x57] sm:$0x1] %vm594, %v1710
        %1726 = vst.msk [vmem:[#allocation2 + $0x67] sm:$0x1] %vm594, %v1711
        %1727 = vst.msk [vmem:[#allocation2 + $0x77] sm:$0x1] %vm594, %v1712
        %1728 = vrot.lane.b32.xlu0 %v514, 16
        %v1729 = vpop.permute.xlu0 %1728
        %1730 = vrot.lane.b32.xlu0 %v517, 16
        %v1731 = vpop.permute.xlu0 %1730
        %v1732 = vsel %vm555, %v1729, 0
        %v1734 = vsel %vm555, %v1731, 0
        %1736 = vmatpush.msra.mxu0 0.0
        %1737 = vmatpush.msra.mxu0 0.0
        %1738 = vmatpush.msra.mxu0 0.0
        %1739 = vmatpush.msra.mxu0 0.0
        %1740 = vmatpush.msra.mxu0 0.0
        %1741 = vmatpush.msra.mxu0 0.0
        %1742 = vmatpush.msra.mxu0 0.0
        %1743 = vmatpush.msra.mxu0 0.0
        %1744 = vmatpush.msra.mxu0 0.0
        %1745 = vmatpush.msra.mxu0 0.0
        %1746 = vmatpush.msra.mxu0 0.0
        %1747 = vmatpush.msra.mxu0 0.0
        %1748 = vmatpush.msra.mxu0 0.0
        %1749 = vmatpush.msra.mxu0 0.0
        %1750 = vmatpush.msra.mxu0 %v554
        %1751 = vmatpush.msra.mxu0 %v553
        %1752 = vmatmul.f32.gmra.mxu0 %v1732
        %v1753 = vpop.f32.mrf.mxu0
        %v1754 = vadd.f32 0.0, %v1753
        %1755 = vmatmul.f32.gmra.mxu0 %v1734
        %v1756 = vpop.f32.mrf.mxu0
        %v1757 = vadd.f32 0.0, %v1756
        %1758 = vdwg.mxu0
        %1759 = vrot.lane.b32.xlu0 %v508, 16
        %v1760 = vpop.permute.xlu0 %1759
        %1761 = vrot.lane.b32.xlu0 %v511, 16
        %v1762 = vpop.permute.xlu0 %1761
        %v1763 = vsel %vm555, %v1760, 0
        %v1765 = vsel %vm555, %v1762, 0
        %1767 = vmatpush.msra.mxu0 0.0
        %1768 = vmatpush.msra.mxu0 0.0
        %1769 = vmatpush.msra.mxu0 0.0
        %1770 = vmatpush.msra.mxu0 0.0
        %1771 = vmatpush.msra.mxu0 0.0
        %1772 = vmatpush.msra.mxu0 0.0
        %1773 = vmatpush.msra.mxu0 0.0
        %1774 = vmatpush.msra.mxu0 0.0
        %1775 = vmatpush.msra.mxu0 0.0
        %1776 = vmatpush.msra.mxu0 0.0
        %1777 = vmatpush.msra.mxu0 0.0
        %1778 = vmatpush.msra.mxu0 0.0
        %1779 = vmatpush.msra.mxu0 0.0
        %1780 = vmatpush.msra.mxu0 0.0
        %1781 = vmatpush.msra.mxu0 %v551
        %1782 = vmatpush.msra.mxu0 %v550
        %1783 = vmatmul.f32.gmra.mxu0 %v1763
        %v1784 = vpop.f32.mrf.mxu0
        %v1785 = vadd.f32 %v1754, %v1784
        %1786 = vmatmul.f32.gmra.mxu0 %v1765
        %v1787 = vpop.f32.mrf.mxu0
        %v1788 = vadd.f32 %v1757, %v1787
        %1789 = vdwg.mxu0
        %vm1790 = vcmp.ge.f32.partialorder %v1785, 0.0
        %vm1791 = vcmp.ge.f32.partialorder %v1788, 0.0
        %v1792 = vmul.f32 %v663, %v1785
        %v1793 = vmul.f32 %v663, %v1788
        %v1794 = vsel %vm1790, %v1785, %v1792
        %v1795 = vsel %vm1791, %v1788, %v1793
        %v1797 = vrot.slane %v1794, 1
        %v1798 = vrot.slane %v1794, 2
        %v1799 = vrot.slane %v1794, 3
        %v1800 = vrot.slane %v1794, 4
        %v1801 = vrot.slane %v1794, 5
        %v1802 = vrot.slane %v1794, 6
        %v1803 = vrot.slane %v1794, 7
        %1811 = vst.msk [vmem:[%s683 + $0xe] sm:$0x1] %vm594, %v1794
        %1812 = vst.msk [vmem:[%s683 + $0x2e] sm:$0x1] %vm594, %v1797
        %1813 = vst.msk [vmem:[%s683 + $0x4e] sm:$0x1] %vm594, %v1798
        %1814 = vst.msk [vmem:[%s683 + $0x6e] sm:$0x1] %vm594, %v1799
        %1815 = vst.msk [vmem:[%s683 + $0x8e] sm:$0x1] %vm594, %v1800
        %1816 = vst.msk [vmem:[%s683 + $0xae] sm:$0x1] %vm594, %v1801
        %1817 = vst.msk [vmem:[%s683 + $0xce] sm:$0x1] %vm594, %v1802
        %1818 = vst.msk [vmem:[%s683 + $0xee] sm:$0x1] %vm594, %v1803
        %v1820 = vrot.slane %v1795, 1
        %v1821 = vrot.slane %v1795, 2
        %v1822 = vrot.slane %v1795, 3
        %v1823 = vrot.slane %v1795, 4
        %v1824 = vrot.slane %v1795, 5
        %v1825 = vrot.slane %v1795, 6
        %v1826 = vrot.slane %v1795, 7
        %1834 = vst.msk [vmem:[%s683 + $0xf] sm:$0x1] %vm594, %v1795
        %1835 = vst.msk [vmem:[%s683 + $0x2f] sm:$0x1] %vm594, %v1820
        %1836 = vst.msk [vmem:[%s683 + $0x4f] sm:$0x1] %vm594, %v1821
        %1837 = vst.msk [vmem:[%s683 + $0x6f] sm:$0x1] %vm594, %v1822
        %1838 = vst.msk [vmem:[%s683 + $0x8f] sm:$0x1] %vm594, %v1823
        %1839 = vst.msk [vmem:[%s683 + $0xaf] sm:$0x1] %vm594, %v1824
        %1840 = vst.msk [vmem:[%s683 + $0xcf] sm:$0x1] %vm594, %v1825
        %1841 = vst.msk [vmem:[%s683 + $0xef] sm:$0x1] %vm594, %v1826
        %v1843 = vsel %vm555, %v439, 0
        %1845 = vmatpush.msra.mxu0 0.0
        %1846 = vmatpush.msra.mxu0 0.0
        %1847 = vmatpush.msra.mxu0 0.0
        %1848 = vmatpush.msra.mxu0 0.0
        %1849 = vmatpush.msra.mxu0 0.0
        %1850 = vmatpush.msra.mxu0 0.0
        %1851 = vmatpush.msra.mxu0 0.0
        %1852 = vmatpush.msra.mxu0 0.0
        %1853 = vmatpush.msra.mxu0 0.0
        %1854 = vmatpush.msra.mxu0 0.0
        %1855 = vmatpush.msra.mxu0 0.0
        %1856 = vmatpush.msra.mxu0 0.0
        %1857 = vmatpush.msra.mxu0 0.0
        %1858 = vmatpush.msra.mxu0 0.0
        %1859 = vmatpush.msra.mxu0 %v549
        %1860 = vmatpush.msra.mxu0 %v548
        %1861 = vmatmul.f32.gmra.mxu0 %v1843
        %v1862 = vpop.f32.mrf.mxu0
        %v1863 = vadd.f32 0.0, %v1862
        %1864 = vdwg.mxu0
        %v1866 = vrot.slane %v1863, 1
        %v1867 = vrot.slane %v1863, 2
        %v1868 = vrot.slane %v1863, 3
        %v1869 = vrot.slane %v1863, 4
        %v1870 = vrot.slane %v1863, 5
        %v1871 = vrot.slane %v1863, 6
        %v1872 = vrot.slane %v1863, 7
        %1880 = vst.msk [vmem:[#allocation2 + $0x8] sm:$0x1] %vm594, %v1863
        %1881 = vst.msk [vmem:[#allocation2 + $0x18] sm:$0x1] %vm594, %v1866
        %1882 = vst.msk [vmem:[#allocation2 + $0x28] sm:$0x1] %vm594, %v1867
        %1883 = vst.msk [vmem:[#allocation2 + $0x38] sm:$0x1] %vm594, %v1868
        %1884 = vst.msk [vmem:[#allocation2 + $0x48] sm:$0x1] %vm594, %v1869
        %1885 = vst.msk [vmem:[#allocation2 + $0x58] sm:$0x1] %vm594, %v1870
        %1886 = vst.msk [vmem:[#allocation2 + $0x68] sm:$0x1] %vm594, %v1871
        %1887 = vst.msk [vmem:[#allocation2 + $0x78] sm:$0x1] %vm594, %v1872
        %v1889 = vsel %vm555, %v543, 0
        %v1892 = vsel %vm555, %v546, 0
        %1894 = vmatpush.msra.mxu0 0.0
        %1895 = vmatpush.msra.mxu0 0.0
        %1896 = vmatpush.msra.mxu0 0.0
        %1897 = vmatpush.msra.mxu0 0.0
        %1898 = vmatpush.msra.mxu0 0.0
        %1899 = vmatpush.msra.mxu0 0.0
        %1900 = vmatpush.msra.mxu0 0.0
        %1901 = vmatpush.msra.mxu0 0.0
        %1902 = vmatpush.msra.mxu0 0.0
        %1903 = vmatpush.msra.mxu0 0.0
        %1904 = vmatpush.msra.mxu0 0.0
        %1905 = vmatpush.msra.mxu0 0.0
        %1906 = vmatpush.msra.mxu0 0.0
        %1907 = vmatpush.msra.mxu0 0.0
        %1908 = vmatpush.msra.mxu0 %v554
        %1909 = vmatpush.msra.mxu0 %v553
        %1910 = vmatmul.f32.gmra.mxu0 %v1889
        %v1911 = vpop.f32.mrf.mxu0
        %v1912 = vadd.f32 0.0, %v1911
        %1913 = vmatmul.f32.gmra.mxu0 %v1892
        %v1914 = vpop.f32.mrf.mxu0
        %v1915 = vadd.f32 0.0, %v1914
        %1916 = vdwg.mxu0
        %v1918 = vsel %vm555, %v537, 0
        %v1921 = vsel %vm555, %v540, 0
        %1923 = vmatpush.msra.mxu0 0.0
        %1924 = vmatpush.msra.mxu0 0.0
        %1925 = vmatpush.msra.mxu0 0.0
        %1926 = vmatpush.msra.mxu0 0.0
        %1927 = vmatpush.msra.mxu0 0.0
        %1928 = vmatpush.msra.mxu0 0.0
        %1929 = vmatpush.msra.mxu0 0.0
        %1930 = vmatpush.msra.mxu0 0.0
        %1931 = vmatpush.msra.mxu0 0.0
        %1932 = vmatpush.msra.mxu0 0.0
        %1933 = vmatpush.msra.mxu0 0.0
        %1934 = vmatpush.msra.mxu0 0.0
        %1935 = vmatpush.msra.mxu0 0.0
        %1936 = vmatpush.msra.mxu0 0.0
        %1937 = vmatpush.msra.mxu0 %v551
        %1938 = vmatpush.msra.mxu0 %v550
        %1939 = vmatmul.f32.gmra.mxu0 %v1918
        %v1940 = vpop.f32.mrf.mxu0
        %v1941 = vadd.f32 %v1912, %v1940
        %1942 = vmatmul.f32.gmra.mxu0 %v1921
        %v1943 = vpop.f32.mrf.mxu0
        %v1944 = vadd.f32 %v1915, %v1943
        %1945 = vdwg.mxu0
        %vm1946 = vcmp.ge.f32.partialorder %v1941, 0.0
        %vm1947 = vcmp.ge.f32.partialorder %v1944, 0.0
        %v1948 = vmul.f32 %v663, %v1941
        %v1949 = vmul.f32 %v663, %v1944
        %v1950 = vsel %vm1946, %v1941, %v1948
        %v1951 = vsel %vm1947, %v1944, %v1949
        %v1953 = vrot.slane %v1950, 1
        %v1954 = vrot.slane %v1950, 2
        %v1955 = vrot.slane %v1950, 3
        %v1956 = vrot.slane %v1950, 4
        %v1957 = vrot.slane %v1950, 5
        %v1958 = vrot.slane %v1950, 6
        %v1959 = vrot.slane %v1950, 7
        %1967 = vst.msk [vmem:[%s683 + $0x10] sm:$0x1] %vm594, %v1950
        %1968 = vst.msk [vmem:[%s683 + $0x30] sm:$0x1] %vm594, %v1953
        %1969 = vst.msk [vmem:[%s683 + $0x50] sm:$0x1] %vm594, %v1954
        %1970 = vst.msk [vmem:[%s683 + $0x70] sm:$0x1] %vm594, %v1955
        %1971 = vst.msk [vmem:[%s683 + $0x90] sm:$0x1] %vm594, %v1956
        %1972 = vst.msk [vmem:[%s683 + $0xb0] sm:$0x1] %vm594, %v1957
        %1973 = vst.msk [vmem:[%s683 + $0xd0] sm:$0x1] %vm594, %v1958
        %1974 = vst.msk [vmem:[%s683 + $0xf0] sm:$0x1] %vm594, %v1959
        %v1976 = vrot.slane %v1951, 1
        %v1977 = vrot.slane %v1951, 2
        %v1978 = vrot.slane %v1951, 3
        %v1979 = vrot.slane %v1951, 4
        %v1980 = vrot.slane %v1951, 5
        %v1981 = vrot.slane %v1951, 6
        %v1982 = vrot.slane %v1951, 7
        %1990 = vst.msk [vmem:[%s683 + $0x11] sm:$0x1] %vm594, %v1951
        %1991 = vst.msk [vmem:[%s683 + $0x31] sm:$0x1] %vm594, %v1976
        %1992 = vst.msk [vmem:[%s683 + $0x51] sm:$0x1] %vm594, %v1977
        %1993 = vst.msk [vmem:[%s683 + $0x71] sm:$0x1] %vm594, %v1978
        %1994 = vst.msk [vmem:[%s683 + $0x91] sm:$0x1] %vm594, %v1979
        %1995 = vst.msk [vmem:[%s683 + $0xb1] sm:$0x1] %vm594, %v1980
        %1996 = vst.msk [vmem:[%s683 + $0xd1] sm:$0x1] %vm594, %v1981
        %1997 = vst.msk [vmem:[%s683 + $0xf1] sm:$0x1] %vm594, %v1982
        %1998 = vrot.lane.b32.xlu0 %v439, 112
        %v1999 = vpop.permute.xlu0 %1998
        %v2000 = vsel %vm555, %v1999, 0
        %2002 = vmatpush.msra.mxu0 0.0
        %2003 = vmatpush.msra.mxu0 0.0
        %2004 = vmatpush.msra.mxu0 0.0
        %2005 = vmatpush.msra.mxu0 0.0
        %2006 = vmatpush.msra.mxu0 0.0
        %2007 = vmatpush.msra.mxu0 0.0
        %2008 = vmatpush.msra.mxu0 0.0
        %2009 = vmatpush.msra.mxu0 0.0
        %2010 = vmatpush.msra.mxu0 0.0
        %2011 = vmatpush.msra.mxu0 0.0
        %2012 = vmatpush.msra.mxu0 0.0
        %2013 = vmatpush.msra.mxu0 0.0
        %2014 = vmatpush.msra.mxu0 0.0
        %2015 = vmatpush.msra.mxu0 0.0
        %2016 = vmatpush.msra.mxu0 %v549
        %2017 = vmatpush.msra.mxu0 %v548
        %2018 = vmatmul.f32.gmra.mxu0 %v2000
        %v2019 = vpop.f32.mrf.mxu0
        %v2020 = vadd.f32 0.0, %v2019
        %2021 = vdwg.mxu0
        %v2023 = vrot.slane %v2020, 1
        %v2024 = vrot.slane %v2020, 2
        %v2025 = vrot.slane %v2020, 3
        %v2026 = vrot.slane %v2020, 4
        %v2027 = vrot.slane %v2020, 5
        %v2028 = vrot.slane %v2020, 6
        %v2029 = vrot.slane %v2020, 7
        %2037 = vst.msk [vmem:[#allocation2 + $0x9] sm:$0x1] %vm594, %v2020
        %2038 = vst.msk [vmem:[#allocation2 + $0x19] sm:$0x1] %vm594, %v2023
        %2039 = vst.msk [vmem:[#allocation2 + $0x29] sm:$0x1] %vm594, %v2024
        %2040 = vst.msk [vmem:[#allocation2 + $0x39] sm:$0x1] %vm594, %v2025
        %2041 = vst.msk [vmem:[#allocation2 + $0x49] sm:$0x1] %vm594, %v2026
        %2042 = vst.msk [vmem:[#allocation2 + $0x59] sm:$0x1] %vm594, %v2027
        %2043 = vst.msk [vmem:[#allocation2 + $0x69] sm:$0x1] %vm594, %v2028
        %2044 = vst.msk [vmem:[#allocation2 + $0x79] sm:$0x1] %vm594, %v2029
        %2045 = vrot.lane.b32.xlu0 %v543, 112
        %v2046 = vpop.permute.xlu0 %2045
        %2047 = vrot.lane.b32.xlu0 %v546, 112
        %v2048 = vpop.permute.xlu0 %2047
        %v2049 = vsel %vm555, %v2046, 0
        %v2051 = vsel %vm555, %v2048, 0
        %2053 = vmatpush.msra.mxu0 0.0
        %2054 = vmatpush.msra.mxu0 0.0
        %2055 = vmatpush.msra.mxu0 0.0
        %2056 = vmatpush.msra.mxu0 0.0
        %2057 = vmatpush.msra.mxu0 0.0
        %2058 = vmatpush.msra.mxu0 0.0
        %2059 = vmatpush.msra.mxu0 0.0
        %2060 = vmatpush.msra.mxu0 0.0
        %2061 = vmatpush.msra.mxu0 0.0
        %2062 = vmatpush.msra.mxu0 0.0
        %2063 = vmatpush.msra.mxu0 0.0
        %2064 = vmatpush.msra.mxu0 0.0
        %2065 = vmatpush.msra.mxu0 0.0
        %2066 = vmatpush.msra.mxu0 0.0
        %2067 = vmatpush.msra.mxu0 %v554
        %2068 = vmatpush.msra.mxu0 %v553
        %2069 = vmatmul.f32.gmra.mxu0 %v2049
        %v2070 = vpop.f32.mrf.mxu0
        %v2071 = vadd.f32 0.0, %v2070
        %2072 = vmatmul.f32.gmra.mxu0 %v2051
        %v2073 = vpop.f32.mrf.mxu0
        %v2074 = vadd.f32 0.0, %v2073
        %2075 = vdwg.mxu0
        %2076 = vrot.lane.b32.xlu0 %v537, 112
        %v2077 = vpop.permute.xlu0 %2076
        %2078 = vrot.lane.b32.xlu0 %v540, 112
        %v2079 = vpop.permute.xlu0 %2078
        %v2080 = vsel %vm555, %v2077, 0
        %v2082 = vsel %vm555, %v2079, 0
        %2084 = vmatpush.msra.mxu0 0.0
        %2085 = vmatpush.msra.mxu0 0.0
        %2086 = vmatpush.msra.mxu0 0.0
        %2087 = vmatpush.msra.mxu0 0.0
        %2088 = vmatpush.msra.mxu0 0.0
        %2089 = vmatpush.msra.mxu0 0.0
        %2090 = vmatpush.msra.mxu0 0.0
        %2091 = vmatpush.msra.mxu0 0.0
        %2092 = vmatpush.msra.mxu0 0.0
        %2093 = vmatpush.msra.mxu0 0.0
        %2094 = vmatpush.msra.mxu0 0.0
        %2095 = vmatpush.msra.mxu0 0.0
        %2096 = vmatpush.msra.mxu0 0.0
        %2097 = vmatpush.msra.mxu0 0.0
        %2098 = vmatpush.msra.mxu0 %v551
        %2099 = vmatpush.msra.mxu0 %v550
        %2100 = vmatmul.f32.gmra.mxu0 %v2080
        %v2101 = vpop.f32.mrf.mxu0
        %v2102 = vadd.f32 %v2071, %v2101
        %2103 = vmatmul.f32.gmra.mxu0 %v2082
        %v2104 = vpop.f32.mrf.mxu0
        %v2105 = vadd.f32 %v2074, %v2104
        %2106 = vdwg.mxu0
        %vm2107 = vcmp.ge.f32.partialorder %v2102, 0.0
        %vm2108 = vcmp.ge.f32.partialorder %v2105, 0.0
        %v2109 = vmul.f32 %v663, %v2102
        %v2110 = vmul.f32 %v663, %v2105
        %v2111 = vsel %vm2107, %v2102, %v2109
        %v2112 = vsel %vm2108, %v2105, %v2110
        %v2114 = vrot.slane %v2111, 1
        %v2115 = vrot.slane %v2111, 2
        %v2116 = vrot.slane %v2111, 3
        %v2117 = vrot.slane %v2111, 4
        %v2118 = vrot.slane %v2111, 5
        %v2119 = vrot.slane %v2111, 6
        %v2120 = vrot.slane %v2111, 7
        %2128 = vst.msk [vmem:[%s683 + $0x12] sm:$0x1] %vm594, %v2111
        %2129 = vst.msk [vmem:[%s683 + $0x32] sm:$0x1] %vm594, %v2114
        %2130 = vst.msk [vmem:[%s683 + $0x52] sm:$0x1] %vm594, %v2115
        %2131 = vst.msk [vmem:[%s683 + $0x72] sm:$0x1] %vm594, %v2116
        %2132 = vst.msk [vmem:[%s683 + $0x92] sm:$0x1] %vm594, %v2117
        %2133 = vst.msk [vmem:[%s683 + $0xb2] sm:$0x1] %vm594, %v2118
        %2134 = vst.msk [vmem:[%s683 + $0xd2] sm:$0x1] %vm594, %v2119
        %2135 = vst.msk [vmem:[%s683 + $0xf2] sm:$0x1] %vm594, %v2120
        %v2137 = vrot.slane %v2112, 1
        %v2138 = vrot.slane %v2112, 2
        %v2139 = vrot.slane %v2112, 3
        %v2140 = vrot.slane %v2112, 4
        %v2141 = vrot.slane %v2112, 5
        %v2142 = vrot.slane %v2112, 6
        %v2143 = vrot.slane %v2112, 7
        %2151 = vst.msk [vmem:[%s683 + $0x13] sm:$0x1] %vm594, %v2112
        %2152 = vst.msk [vmem:[%s683 + $0x33] sm:$0x1] %vm594, %v2137
        %2153 = vst.msk [vmem:[%s683 + $0x53] sm:$0x1] %vm594, %v2138
        %2154 = vst.msk [vmem:[%s683 + $0x73] sm:$0x1] %vm594, %v2139
        %2155 = vst.msk [vmem:[%s683 + $0x93] sm:$0x1] %vm594, %v2140
        %2156 = vst.msk [vmem:[%s683 + $0xb3] sm:$0x1] %vm594, %v2141
        %2157 = vst.msk [vmem:[%s683 + $0xd3] sm:$0x1] %vm594, %v2142
        %2158 = vst.msk [vmem:[%s683 + $0xf3] sm:$0x1] %vm594, %v2143
        %2159 = vrot.lane.b32.xlu0 %v439, 96
        %v2160 = vpop.permute.xlu0 %2159
        %v2161 = vsel %vm555, %v2160, 0
        %2163 = vmatpush.msra.mxu0 0.0
        %2164 = vmatpush.msra.mxu0 0.0
        %2165 = vmatpush.msra.mxu0 0.0
        %2166 = vmatpush.msra.mxu0 0.0
        %2167 = vmatpush.msra.mxu0 0.0
        %2168 = vmatpush.msra.mxu0 0.0
        %2169 = vmatpush.msra.mxu0 0.0
        %2170 = vmatpush.msra.mxu0 0.0
        %2171 = vmatpush.msra.mxu0 0.0
        %2172 = vmatpush.msra.mxu0 0.0
        %2173 = vmatpush.msra.mxu0 0.0
        %2174 = vmatpush.msra.mxu0 0.0
        %2175 = vmatpush.msra.mxu0 0.0
        %2176 = vmatpush.msra.mxu0 0.0
        %2177 = vmatpush.msra.mxu0 %v549
        %2178 = vmatpush.msra.mxu0 %v548
        %2179 = vmatmul.f32.gmra.mxu0 %v2161
        %v2180 = vpop.f32.mrf.mxu0
        %v2181 = vadd.f32 0.0, %v2180
        %2182 = vdwg.mxu0
        %v2184 = vrot.slane %v2181, 1
        %v2185 = vrot.slane %v2181, 2
        %v2186 = vrot.slane %v2181, 3
        %v2187 = vrot.slane %v2181, 4
        %v2188 = vrot.slane %v2181, 5
        %v2189 = vrot.slane %v2181, 6
        %v2190 = vrot.slane %v2181, 7
        %2198 = vst.msk [vmem:[#allocation2 + $0xa] sm:$0x1] %vm594, %v2181
        %2199 = vst.msk [vmem:[#allocation2 + $0x1a] sm:$0x1] %vm594, %v2184
        %2200 = vst.msk [vmem:[#allocation2 + $0x2a] sm:$0x1] %vm594, %v2185
        %2201 = vst.msk [vmem:[#allocation2 + $0x3a] sm:$0x1] %vm594, %v2186
        %2202 = vst.msk [vmem:[#allocation2 + $0x4a] sm:$0x1] %vm594, %v2187
        %2203 = vst.msk [vmem:[#allocation2 + $0x5a] sm:$0x1] %vm594, %v2188
        %2204 = vst.msk [vmem:[#allocation2 + $0x6a] sm:$0x1] %vm594, %v2189
        %2205 = vst.msk [vmem:[#allocation2 + $0x7a] sm:$0x1] %vm594, %v2190
        %2206 = vrot.lane.b32.xlu0 %v543, 96
        %v2207 = vpop.permute.xlu0 %2206
        %2208 = vrot.lane.b32.xlu0 %v546, 96
        %v2209 = vpop.permute.xlu0 %2208
        %v2210 = vsel %vm555, %v2207, 0
        %v2212 = vsel %vm555, %v2209, 0
        %2214 = vmatpush.msra.mxu0 0.0
        %2215 = vmatpush.msra.mxu0 0.0
        %2216 = vmatpush.msra.mxu0 0.0
        %2217 = vmatpush.msra.mxu0 0.0
        %2218 = vmatpush.msra.mxu0 0.0
        %2219 = vmatpush.msra.mxu0 0.0
        %2220 = vmatpush.msra.mxu0 0.0
        %2221 = vmatpush.msra.mxu0 0.0
        %2222 = vmatpush.msra.mxu0 0.0
        %2223 = vmatpush.msra.mxu0 0.0
        %2224 = vmatpush.msra.mxu0 0.0
        %2225 = vmatpush.msra.mxu0 0.0
        %2226 = vmatpush.msra.mxu0 0.0
        %2227 = vmatpush.msra.mxu0 0.0
        %2228 = vmatpush.msra.mxu0 %v554
        %2229 = vmatpush.msra.mxu0 %v553
        %2230 = vmatmul.f32.gmra.mxu0 %v2210
        %v2231 = vpop.f32.mrf.mxu0
        %v2232 = vadd.f32 0.0, %v2231
        %2233 = vmatmul.f32.gmra.mxu0 %v2212
        %v2234 = vpop.f32.mrf.mxu0
        %v2235 = vadd.f32 0.0, %v2234
        %2236 = vdwg.mxu0
        %2237 = vrot.lane.b32.xlu0 %v537, 96
        %v2238 = vpop.permute.xlu0 %2237
        %2239 = vrot.lane.b32.xlu0 %v540, 96
        %v2240 = vpop.permute.xlu0 %2239
        %v2241 = vsel %vm555, %v2238, 0
        %v2243 = vsel %vm555, %v2240, 0
        %2245 = vmatpush.msra.mxu0 0.0
        %2246 = vmatpush.msra.mxu0 0.0
        %2247 = vmatpush.msra.mxu0 0.0
        %2248 = vmatpush.msra.mxu0 0.0
        %2249 = vmatpush.msra.mxu0 0.0
        %2250 = vmatpush.msra.mxu0 0.0
        %2251 = vmatpush.msra.mxu0 0.0
        %2252 = vmatpush.msra.mxu0 0.0
        %2253 = vmatpush.msra.mxu0 0.0
        %2254 = vmatpush.msra.mxu0 0.0
        %2255 = vmatpush.msra.mxu0 0.0
        %2256 = vmatpush.msra.mxu0 0.0
        %2257 = vmatpush.msra.mxu0 0.0
        %2258 = vmatpush.msra.mxu0 0.0
        %2259 = vmatpush.msra.mxu0 %v551
        %2260 = vmatpush.msra.mxu0 %v550
        %2261 = vmatmul.f32.gmra.mxu0 %v2241
        %v2262 = vpop.f32.mrf.mxu0
        %v2263 = vadd.f32 %v2232, %v2262
        %2264 = vmatmul.f32.gmra.mxu0 %v2243
        %v2265 = vpop.f32.mrf.mxu0
        %v2266 = vadd.f32 %v2235, %v2265
        %2267 = vdwg.mxu0
        %vm2268 = vcmp.ge.f32.partialorder %v2263, 0.0
        %vm2269 = vcmp.ge.f32.partialorder %v2266, 0.0
        %v2270 = vmul.f32 %v663, %v2263
        %v2271 = vmul.f32 %v663, %v2266
        %v2272 = vsel %vm2268, %v2263, %v2270
        %v2273 = vsel %vm2269, %v2266, %v2271
        %v2275 = vrot.slane %v2272, 1
        %v2276 = vrot.slane %v2272, 2
        %v2277 = vrot.slane %v2272, 3
        %v2278 = vrot.slane %v2272, 4
        %v2279 = vrot.slane %v2272, 5
        %v2280 = vrot.slane %v2272, 6
        %v2281 = vrot.slane %v2272, 7
        %2289 = vst.msk [vmem:[%s683 + $0x14] sm:$0x1] %vm594, %v2272
        %2290 = vst.msk [vmem:[%s683 + $0x34] sm:$0x1] %vm594, %v2275
        %2291 = vst.msk [vmem:[%s683 + $0x54] sm:$0x1] %vm594, %v2276
        %2292 = vst.msk [vmem:[%s683 + $0x74] sm:$0x1] %vm594, %v2277
        %2293 = vst.msk [vmem:[%s683 + $0x94] sm:$0x1] %vm594, %v2278
        %2294 = vst.msk [vmem:[%s683 + $0xb4] sm:$0x1] %vm594, %v2279
        %2295 = vst.msk [vmem:[%s683 + $0xd4] sm:$0x1] %vm594, %v2280
        %2296 = vst.msk [vmem:[%s683 + $0xf4] sm:$0x1] %vm594, %v2281
        %v2298 = vrot.slane %v2273, 1
        %v2299 = vrot.slane %v2273, 2
        %v2300 = vrot.slane %v2273, 3
        %v2301 = vrot.slane %v2273, 4
        %v2302 = vrot.slane %v2273, 5
        %v2303 = vrot.slane %v2273, 6
        %v2304 = vrot.slane %v2273, 7
        %2312 = vst.msk [vmem:[%s683 + $0x15] sm:$0x1] %vm594, %v2273
        %2313 = vst.msk [vmem:[%s683 + $0x35] sm:$0x1] %vm594, %v2298
        %2314 = vst.msk [vmem:[%s683 + $0x55] sm:$0x1] %vm594, %v2299
        %2315 = vst.msk [vmem:[%s683 + $0x75] sm:$0x1] %vm594, %v2300
        %2316 = vst.msk [vmem:[%s683 + $0x95] sm:$0x1] %vm594, %v2301
        %2317 = vst.msk [vmem:[%s683 + $0xb5] sm:$0x1] %vm594, %v2302
        %2318 = vst.msk [vmem:[%s683 + $0xd5] sm:$0x1] %vm594, %v2303
        %2319 = vst.msk [vmem:[%s683 + $0xf5] sm:$0x1] %vm594, %v2304
        %2320 = vrot.lane.b32.xlu0 %v439, 80
        %v2321 = vpop.permute.xlu0 %2320
        %v2322 = vsel %vm555, %v2321, 0
        %2324 = vmatpush.msra.mxu0 0.0
        %2325 = vmatpush.msra.mxu0 0.0
        %2326 = vmatpush.msra.mxu0 0.0
        %2327 = vmatpush.msra.mxu0 0.0
        %2328 = vmatpush.msra.mxu0 0.0
        %2329 = vmatpush.msra.mxu0 0.0
        %2330 = vmatpush.msra.mxu0 0.0
        %2331 = vmatpush.msra.mxu0 0.0
        %2332 = vmatpush.msra.mxu0 0.0
        %2333 = vmatpush.msra.mxu0 0.0
        %2334 = vmatpush.msra.mxu0 0.0
        %2335 = vmatpush.msra.mxu0 0.0
        %2336 = vmatpush.msra.mxu0 0.0
        %2337 = vmatpush.msra.mxu0 0.0
        %2338 = vmatpush.msra.mxu0 %v549
        %2339 = vmatpush.msra.mxu0 %v548
        %2340 = vmatmul.f32.gmra.mxu0 %v2322
        %v2341 = vpop.f32.mrf.mxu0
        %v2342 = vadd.f32 0.0, %v2341
        %2343 = vdwg.mxu0
        %v2345 = vrot.slane %v2342, 1
        %v2346 = vrot.slane %v2342, 2
        %v2347 = vrot.slane %v2342, 3
        %v2348 = vrot.slane %v2342, 4
        %v2349 = vrot.slane %v2342, 5
        %v2350 = vrot.slane %v2342, 6
        %v2351 = vrot.slane %v2342, 7
        %2359 = vst.msk [vmem:[#allocation2 + $0xb] sm:$0x1] %vm594, %v2342
        %2360 = vst.msk [vmem:[#allocation2 + $0x1b] sm:$0x1] %vm594, %v2345
        %2361 = vst.msk [vmem:[#allocation2 + $0x2b] sm:$0x1] %vm594, %v2346
        %2362 = vst.msk [vmem:[#allocation2 + $0x3b] sm:$0x1] %vm594, %v2347
        %2363 = vst.msk [vmem:[#allocation2 + $0x4b] sm:$0x1] %vm594, %v2348
        %2364 = vst.msk [vmem:[#allocation2 + $0x5b] sm:$0x1] %vm594, %v2349
        %2365 = vst.msk [vmem:[#allocation2 + $0x6b] sm:$0x1] %vm594, %v2350
        %2366 = vst.msk [vmem:[#allocation2 + $0x7b] sm:$0x1] %vm594, %v2351
        %2367 = vrot.lane.b32.xlu0 %v543, 80
        %v2368 = vpop.permute.xlu0 %2367
        %2369 = vrot.lane.b32.xlu0 %v546, 80
        %v2370 = vpop.permute.xlu0 %2369
        %v2371 = vsel %vm555, %v2368, 0
        %v2373 = vsel %vm555, %v2370, 0
        %2375 = vmatpush.msra.mxu0 0.0
        %2376 = vmatpush.msra.mxu0 0.0
        %2377 = vmatpush.msra.mxu0 0.0
        %2378 = vmatpush.msra.mxu0 0.0
        %2379 = vmatpush.msra.mxu0 0.0
        %2380 = vmatpush.msra.mxu0 0.0
        %2381 = vmatpush.msra.mxu0 0.0
        %2382 = vmatpush.msra.mxu0 0.0
        %2383 = vmatpush.msra.mxu0 0.0
        %2384 = vmatpush.msra.mxu0 0.0
        %2385 = vmatpush.msra.mxu0 0.0
        %2386 = vmatpush.msra.mxu0 0.0
        %2387 = vmatpush.msra.mxu0 0.0
        %2388 = vmatpush.msra.mxu0 0.0
        %2389 = vmatpush.msra.mxu0 %v554
        %2390 = vmatpush.msra.mxu0 %v553
        %2391 = vmatmul.f32.gmra.mxu0 %v2371
        %v2392 = vpop.f32.mrf.mxu0
        %v2393 = vadd.f32 0.0, %v2392
        %2394 = vmatmul.f32.gmra.mxu0 %v2373
        %v2395 = vpop.f32.mrf.mxu0
        %v2396 = vadd.f32 0.0, %v2395
        %2397 = vdwg.mxu0
        %2398 = vrot.lane.b32.xlu0 %v537, 80
        %v2399 = vpop.permute.xlu0 %2398
        %2400 = vrot.lane.b32.xlu0 %v540, 80
        %v2401 = vpop.permute.xlu0 %2400
        %v2402 = vsel %vm555, %v2399, 0
        %v2404 = vsel %vm555, %v2401, 0
        %2406 = vmatpush.msra.mxu0 0.0
        %2407 = vmatpush.msra.mxu0 0.0
        %2408 = vmatpush.msra.mxu0 0.0
        %2409 = vmatpush.msra.mxu0 0.0
        %2410 = vmatpush.msra.mxu0 0.0
        %2411 = vmatpush.msra.mxu0 0.0
        %2412 = vmatpush.msra.mxu0 0.0
        %2413 = vmatpush.msra.mxu0 0.0
        %2414 = vmatpush.msra.mxu0 0.0
        %2415 = vmatpush.msra.mxu0 0.0
        %2416 = vmatpush.msra.mxu0 0.0
        %2417 = vmatpush.msra.mxu0 0.0
        %2418 = vmatpush.msra.mxu0 0.0
        %2419 = vmatpush.msra.mxu0 0.0
        %2420 = vmatpush.msra.mxu0 %v551
        %2421 = vmatpush.msra.mxu0 %v550
        %2422 = vmatmul.f32.gmra.mxu0 %v2402
        %v2423 = vpop.f32.mrf.mxu0
        %v2424 = vadd.f32 %v2393, %v2423
        %2425 = vmatmul.f32.gmra.mxu0 %v2404
        %v2426 = vpop.f32.mrf.mxu0
        %v2427 = vadd.f32 %v2396, %v2426
        %2428 = vdwg.mxu0
        %vm2429 = vcmp.ge.f32.partialorder %v2424, 0.0
        %vm2430 = vcmp.ge.f32.partialorder %v2427, 0.0
        %v2431 = vmul.f32 %v663, %v2424
        %v2432 = vmul.f32 %v663, %v2427
        %v2433 = vsel %vm2429, %v2424, %v2431
        %v2434 = vsel %vm2430, %v2427, %v2432
        %v2436 = vrot.slane %v2433, 1
        %v2437 = vrot.slane %v2433, 2
        %v2438 = vrot.slane %v2433, 3
        %v2439 = vrot.slane %v2433, 4
        %v2440 = vrot.slane %v2433, 5
        %v2441 = vrot.slane %v2433, 6
        %v2442 = vrot.slane %v2433, 7
        %2450 = vst.msk [vmem:[%s683 + $0x16] sm:$0x1] %vm594, %v2433
        %2451 = vst.msk [vmem:[%s683 + $0x36] sm:$0x1] %vm594, %v2436
        %2452 = vst.msk [vmem:[%s683 + $0x56] sm:$0x1] %vm594, %v2437
        %2453 = vst.msk [vmem:[%s683 + $0x76] sm:$0x1] %vm594, %v2438
        %2454 = vst.msk [vmem:[%s683 + $0x96] sm:$0x1] %vm594, %v2439
        %2455 = vst.msk [vmem:[%s683 + $0xb6] sm:$0x1] %vm594, %v2440
        %2456 = vst.msk [vmem:[%s683 + $0xd6] sm:$0x1] %vm594, %v2441
        %2457 = vst.msk [vmem:[%s683 + $0xf6] sm:$0x1] %vm594, %v2442
        %v2459 = vrot.slane %v2434, 1
        %v2460 = vrot.slane %v2434, 2
        %v2461 = vrot.slane %v2434, 3
        %v2462 = vrot.slane %v2434, 4
        %v2463 = vrot.slane %v2434, 5
        %v2464 = vrot.slane %v2434, 6
        %v2465 = vrot.slane %v2434, 7
        %2473 = vst.msk [vmem:[%s683 + $0x17] sm:$0x1] %vm594, %v2434
        %2474 = vst.msk [vmem:[%s683 + $0x37] sm:$0x1] %vm594, %v2459
        %2475 = vst.msk [vmem:[%s683 + $0x57] sm:$0x1] %vm594, %v2460
        %2476 = vst.msk [vmem:[%s683 + $0x77] sm:$0x1] %vm594, %v2461
        %2477 = vst.msk [vmem:[%s683 + $0x97] sm:$0x1] %vm594, %v2462
        %2478 = vst.msk [vmem:[%s683 + $0xb7] sm:$0x1] %vm594, %v2463
        %2479 = vst.msk [vmem:[%s683 + $0xd7] sm:$0x1] %vm594, %v2464
        %2480 = vst.msk [vmem:[%s683 + $0xf7] sm:$0x1] %vm594, %v2465
        %2481 = vrot.lane.b32.xlu0 %v439, 64
        %v2482 = vpop.permute.xlu0 %2481
        %v2483 = vsel %vm555, %v2482, 0
        %2485 = vmatpush.msra.mxu0 0.0
        %2486 = vmatpush.msra.mxu0 0.0
        %2487 = vmatpush.msra.mxu0 0.0
        %2488 = vmatpush.msra.mxu0 0.0
        %2489 = vmatpush.msra.mxu0 0.0
        %2490 = vmatpush.msra.mxu0 0.0
        %2491 = vmatpush.msra.mxu0 0.0
        %2492 = vmatpush.msra.mxu0 0.0
        %2493 = vmatpush.msra.mxu0 0.0
        %2494 = vmatpush.msra.mxu0 0.0
        %2495 = vmatpush.msra.mxu0 0.0
        %2496 = vmatpush.msra.mxu0 0.0
        %2497 = vmatpush.msra.mxu0 0.0
        %2498 = vmatpush.msra.mxu0 0.0
        %2499 = vmatpush.msra.mxu0 %v549
        %2500 = vmatpush.msra.mxu0 %v548
        %2501 = vmatmul.f32.gmra.mxu0 %v2483
        %v2502 = vpop.f32.mrf.mxu0
        %v2503 = vadd.f32 0.0, %v2502
        %2504 = vdwg.mxu0
        %v2506 = vrot.slane %v2503, 1
        %v2507 = vrot.slane %v2503, 2
        %v2508 = vrot.slane %v2503, 3
        %v2509 = vrot.slane %v2503, 4
        %v2510 = vrot.slane %v2503, 5
        %v2511 = vrot.slane %v2503, 6
        %v2512 = vrot.slane %v2503, 7
        %2520 = vst.msk [vmem:[#allocation2 + $0xc] sm:$0x1] %vm594, %v2503
        %2521 = vst.msk [vmem:[#allocation2 + $0x1c] sm:$0x1] %vm594, %v2506
        %2522 = vst.msk [vmem:[#allocation2 + $0x2c] sm:$0x1] %vm594, %v2507
        %2523 = vst.msk [vmem:[#allocation2 + $0x3c] sm:$0x1] %vm594, %v2508
        %2524 = vst.msk [vmem:[#allocation2 + $0x4c] sm:$0x1] %vm594, %v2509
        %2525 = vst.msk [vmem:[#allocation2 + $0x5c] sm:$0x1] %vm594, %v2510
        %2526 = vst.msk [vmem:[#allocation2 + $0x6c] sm:$0x1] %vm594, %v2511
        %2527 = vst.msk [vmem:[#allocation2 + $0x7c] sm:$0x1] %vm594, %v2512
        %2528 = vrot.lane.b32.xlu0 %v543, 64
        %v2529 = vpop.permute.xlu0 %2528
        %2530 = vrot.lane.b32.xlu0 %v546, 64
        %v2531 = vpop.permute.xlu0 %2530
        %v2532 = vsel %vm555, %v2529, 0
        %v2534 = vsel %vm555, %v2531, 0
        %2536 = vmatpush.msra.mxu0 0.0
        %2537 = vmatpush.msra.mxu0 0.0
        %2538 = vmatpush.msra.mxu0 0.0
        %2539 = vmatpush.msra.mxu0 0.0
        %2540 = vmatpush.msra.mxu0 0.0
        %2541 = vmatpush.msra.mxu0 0.0
        %2542 = vmatpush.msra.mxu0 0.0
        %2543 = vmatpush.msra.mxu0 0.0
        %2544 = vmatpush.msra.mxu0 0.0
        %2545 = vmatpush.msra.mxu0 0.0
        %2546 = vmatpush.msra.mxu0 0.0
        %2547 = vmatpush.msra.mxu0 0.0
        %2548 = vmatpush.msra.mxu0 0.0
        %2549 = vmatpush.msra.mxu0 0.0
        %2550 = vmatpush.msra.mxu0 %v554
        %2551 = vmatpush.msra.mxu0 %v553
        %2552 = vmatmul.f32.gmra.mxu0 %v2532
        %v2553 = vpop.f32.mrf.mxu0
        %v2554 = vadd.f32 0.0, %v2553
        %2555 = vmatmul.f32.gmra.mxu0 %v2534
        %v2556 = vpop.f32.mrf.mxu0
        %v2557 = vadd.f32 0.0, %v2556
        %2558 = vdwg.mxu0
        %2559 = vrot.lane.b32.xlu0 %v537, 64
        %v2560 = vpop.permute.xlu0 %2559
        %2561 = vrot.lane.b32.xlu0 %v540, 64
        %v2562 = vpop.permute.xlu0 %2561
        %v2563 = vsel %vm555, %v2560, 0
        %v2565 = vsel %vm555, %v2562, 0
        %2567 = vmatpush.msra.mxu0 0.0
        %2568 = vmatpush.msra.mxu0 0.0
        %2569 = vmatpush.msra.mxu0 0.0
        %2570 = vmatpush.msra.mxu0 0.0
        %2571 = vmatpush.msra.mxu0 0.0
        %2572 = vmatpush.msra.mxu0 0.0
        %2573 = vmatpush.msra.mxu0 0.0
        %2574 = vmatpush.msra.mxu0 0.0
        %2575 = vmatpush.msra.mxu0 0.0
        %2576 = vmatpush.msra.mxu0 0.0
        %2577 = vmatpush.msra.mxu0 0.0
        %2578 = vmatpush.msra.mxu0 0.0
        %2579 = vmatpush.msra.mxu0 0.0
        %2580 = vmatpush.msra.mxu0 0.0
        %2581 = vmatpush.msra.mxu0 %v551
        %2582 = vmatpush.msra.mxu0 %v550
        %2583 = vmatmul.f32.gmra.mxu0 %v2563
        %v2584 = vpop.f32.mrf.mxu0
        %v2585 = vadd.f32 %v2554, %v2584
        %2586 = vmatmul.f32.gmra.mxu0 %v2565
        %v2587 = vpop.f32.mrf.mxu0
        %v2588 = vadd.f32 %v2557, %v2587
        %2589 = vdwg.mxu0
        %vm2590 = vcmp.ge.f32.partialorder %v2585, 0.0
        %vm2591 = vcmp.ge.f32.partialorder %v2588, 0.0
        %v2592 = vmul.f32 %v663, %v2585
        %v2593 = vmul.f32 %v663, %v2588
        %v2594 = vsel %vm2590, %v2585, %v2592
        %v2595 = vsel %vm2591, %v2588, %v2593
        %v2597 = vrot.slane %v2594, 1
        %v2598 = vrot.slane %v2594, 2
        %v2599 = vrot.slane %v2594, 3
        %v2600 = vrot.slane %v2594, 4
        %v2601 = vrot.slane %v2594, 5
        %v2602 = vrot.slane %v2594, 6
        %v2603 = vrot.slane %v2594, 7
        %2611 = vst.msk [vmem:[%s683 + $0x18] sm:$0x1] %vm594, %v2594
        %2612 = vst.msk [vmem:[%s683 + $0x38] sm:$0x1] %vm594, %v2597
        %2613 = vst.msk [vmem:[%s683 + $0x58] sm:$0x1] %vm594, %v2598
        %2614 = vst.msk [vmem:[%s683 + $0x78] sm:$0x1] %vm594, %v2599
        %2615 = vst.msk [vmem:[%s683 + $0x98] sm:$0x1] %vm594, %v2600
        %2616 = vst.msk [vmem:[%s683 + $0xb8] sm:$0x1] %vm594, %v2601
        %2617 = vst.msk [vmem:[%s683 + $0xd8] sm:$0x1] %vm594, %v2602
        %2618 = vst.msk [vmem:[%s683 + $0xf8] sm:$0x1] %vm594, %v2603
        %v2620 = vrot.slane %v2595, 1
        %v2621 = vrot.slane %v2595, 2
        %v2622 = vrot.slane %v2595, 3
        %v2623 = vrot.slane %v2595, 4
        %v2624 = vrot.slane %v2595, 5
        %v2625 = vrot.slane %v2595, 6
        %v2626 = vrot.slane %v2595, 7
        %2634 = vst.msk [vmem:[%s683 + $0x19] sm:$0x1] %vm594, %v2595
        %2635 = vst.msk [vmem:[%s683 + $0x39] sm:$0x1] %vm594, %v2620
        %2636 = vst.msk [vmem:[%s683 + $0x59] sm:$0x1] %vm594, %v2621
        %2637 = vst.msk [vmem:[%s683 + $0x79] sm:$0x1] %vm594, %v2622
        %2638 = vst.msk [vmem:[%s683 + $0x99] sm:$0x1] %vm594, %v2623
        %2639 = vst.msk [vmem:[%s683 + $0xb9] sm:$0x1] %vm594, %v2624
        %2640 = vst.msk [vmem:[%s683 + $0xd9] sm:$0x1] %vm594, %v2625
        %2641 = vst.msk [vmem:[%s683 + $0xf9] sm:$0x1] %vm594, %v2626
        %2642 = vrot.lane.b32.xlu0 %v439, 48
        %v2643 = vpop.permute.xlu0 %2642
        %v2644 = vsel %vm555, %v2643, 0
        %2646 = vmatpush.msra.mxu0 0.0
        %2647 = vmatpush.msra.mxu0 0.0
        %2648 = vmatpush.msra.mxu0 0.0
        %2649 = vmatpush.msra.mxu0 0.0
        %2650 = vmatpush.msra.mxu0 0.0
        %2651 = vmatpush.msra.mxu0 0.0
        %2652 = vmatpush.msra.mxu0 0.0
        %2653 = vmatpush.msra.mxu0 0.0
        %2654 = vmatpush.msra.mxu0 0.0
        %2655 = vmatpush.msra.mxu0 0.0
        %2656 = vmatpush.msra.mxu0 0.0
        %2657 = vmatpush.msra.mxu0 0.0
        %2658 = vmatpush.msra.mxu0 0.0
        %2659 = vmatpush.msra.mxu0 0.0
        %2660 = vmatpush.msra.mxu0 %v549
        %2661 = vmatpush.msra.mxu0 %v548
        %2662 = vmatmul.f32.gmra.mxu0 %v2644
        %v2663 = vpop.f32.mrf.mxu0
        %v2664 = vadd.f32 0.0, %v2663
        %2665 = vdwg.mxu0
        %v2667 = vrot.slane %v2664, 1
        %v2668 = vrot.slane %v2664, 2
        %v2669 = vrot.slane %v2664, 3
        %v2670 = vrot.slane %v2664, 4
        %v2671 = vrot.slane %v2664, 5
        %v2672 = vrot.slane %v2664, 6
        %v2673 = vrot.slane %v2664, 7
        %2681 = vst.msk [vmem:[#allocation2 + $0xd] sm:$0x1] %vm594, %v2664
        %2682 = vst.msk [vmem:[#allocation2 + $0x1d] sm:$0x1] %vm594, %v2667
        %2683 = vst.msk [vmem:[#allocation2 + $0x2d] sm:$0x1] %vm594, %v2668
        %2684 = vst.msk [vmem:[#allocation2 + $0x3d] sm:$0x1] %vm594, %v2669
        %2685 = vst.msk [vmem:[#allocation2 + $0x4d] sm:$0x1] %vm594, %v2670
        %2686 = vst.msk [vmem:[#allocation2 + $0x5d] sm:$0x1] %vm594, %v2671
        %2687 = vst.msk [vmem:[#allocation2 + $0x6d] sm:$0x1] %vm594, %v2672
        %2688 = vst.msk [vmem:[#allocation2 + $0x7d] sm:$0x1] %vm594, %v2673
        %2689 = vrot.lane.b32.xlu0 %v543, 48
        %v2690 = vpop.permute.xlu0 %2689
        %2691 = vrot.lane.b32.xlu0 %v546, 48
        %v2692 = vpop.permute.xlu0 %2691
        %v2693 = vsel %vm555, %v2690, 0
        %v2695 = vsel %vm555, %v2692, 0
        %2697 = vmatpush.msra.mxu0 0.0
        %2698 = vmatpush.msra.mxu0 0.0
        %2699 = vmatpush.msra.mxu0 0.0
        %2700 = vmatpush.msra.mxu0 0.0
        %2701 = vmatpush.msra.mxu0 0.0
        %2702 = vmatpush.msra.mxu0 0.0
        %2703 = vmatpush.msra.mxu0 0.0
        %2704 = vmatpush.msra.mxu0 0.0
        %2705 = vmatpush.msra.mxu0 0.0
        %2706 = vmatpush.msra.mxu0 0.0
        %2707 = vmatpush.msra.mxu0 0.0
        %2708 = vmatpush.msra.mxu0 0.0
        %2709 = vmatpush.msra.mxu0 0.0
        %2710 = vmatpush.msra.mxu0 0.0
        %2711 = vmatpush.msra.mxu0 %v554
        %2712 = vmatpush.msra.mxu0 %v553
        %2713 = vmatmul.f32.gmra.mxu0 %v2693
        %v2714 = vpop.f32.mrf.mxu0
        %v2715 = vadd.f32 0.0, %v2714
        %2716 = vmatmul.f32.gmra.mxu0 %v2695
        %v2717 = vpop.f32.mrf.mxu0
        %v2718 = vadd.f32 0.0, %v2717
        %2719 = vdwg.mxu0
        %2720 = vrot.lane.b32.xlu0 %v537, 48
        %v2721 = vpop.permute.xlu0 %2720
        %2722 = vrot.lane.b32.xlu0 %v540, 48
        %v2723 = vpop.permute.xlu0 %2722
        %v2724 = vsel %vm555, %v2721, 0
        %v2726 = vsel %vm555, %v2723, 0
        %2728 = vmatpush.msra.mxu0 0.0
        %2729 = vmatpush.msra.mxu0 0.0
        %2730 = vmatpush.msra.mxu0 0.0
        %2731 = vmatpush.msra.mxu0 0.0
        %2732 = vmatpush.msra.mxu0 0.0
        %2733 = vmatpush.msra.mxu0 0.0
        %2734 = vmatpush.msra.mxu0 0.0
        %2735 = vmatpush.msra.mxu0 0.0
        %2736 = vmatpush.msra.mxu0 0.0
        %2737 = vmatpush.msra.mxu0 0.0
        %2738 = vmatpush.msra.mxu0 0.0
        %2739 = vmatpush.msra.mxu0 0.0
        %2740 = vmatpush.msra.mxu0 0.0
        %2741 = vmatpush.msra.mxu0 0.0
        %2742 = vmatpush.msra.mxu0 %v551
        %2743 = vmatpush.msra.mxu0 %v550
        %2744 = vmatmul.f32.gmra.mxu0 %v2724
        %v2745 = vpop.f32.mrf.mxu0
        %v2746 = vadd.f32 %v2715, %v2745
        %2747 = vmatmul.f32.gmra.mxu0 %v2726
        %v2748 = vpop.f32.mrf.mxu0
        %v2749 = vadd.f32 %v2718, %v2748
        %2750 = vdwg.mxu0
        %vm2751 = vcmp.ge.f32.partialorder %v2746, 0.0
        %vm2752 = vcmp.ge.f32.partialorder %v2749, 0.0
        %v2753 = vmul.f32 %v663, %v2746
        %v2754 = vmul.f32 %v663, %v2749
        %v2755 = vsel %vm2751, %v2746, %v2753
        %v2756 = vsel %vm2752, %v2749, %v2754
        %v2758 = vrot.slane %v2755, 1
        %v2759 = vrot.slane %v2755, 2
        %v2760 = vrot.slane %v2755, 3
        %v2761 = vrot.slane %v2755, 4
        %v2762 = vrot.slane %v2755, 5
        %v2763 = vrot.slane %v2755, 6
        %v2764 = vrot.slane %v2755, 7
        %2772 = vst.msk [vmem:[%s683 + $0x1a] sm:$0x1] %vm594, %v2755
        %2773 = vst.msk [vmem:[%s683 + $0x3a] sm:$0x1] %vm594, %v2758
        %2774 = vst.msk [vmem:[%s683 + $0x5a] sm:$0x1] %vm594, %v2759
        %2775 = vst.msk [vmem:[%s683 + $0x7a] sm:$0x1] %vm594, %v2760
        %2776 = vst.msk [vmem:[%s683 + $0x9a] sm:$0x1] %vm594, %v2761
        %2777 = vst.msk [vmem:[%s683 + $0xba] sm:$0x1] %vm594, %v2762
        %2778 = vst.msk [vmem:[%s683 + $0xda] sm:$0x1] %vm594, %v2763
        %2779 = vst.msk [vmem:[%s683 + $0xfa] sm:$0x1] %vm594, %v2764
        %v2781 = vrot.slane %v2756, 1
        %v2782 = vrot.slane %v2756, 2
        %v2783 = vrot.slane %v2756, 3
        %v2784 = vrot.slane %v2756, 4
        %v2785 = vrot.slane %v2756, 5
        %v2786 = vrot.slane %v2756, 6
        %v2787 = vrot.slane %v2756, 7
        %2795 = vst.msk [vmem:[%s683 + $0x1b] sm:$0x1] %vm594, %v2756
        %2796 = vst.msk [vmem:[%s683 + $0x3b] sm:$0x1] %vm594, %v2781
        %2797 = vst.msk [vmem:[%s683 + $0x5b] sm:$0x1] %vm594, %v2782
        %2798 = vst.msk [vmem:[%s683 + $0x7b] sm:$0x1] %vm594, %v2783
        %2799 = vst.msk [vmem:[%s683 + $0x9b] sm:$0x1] %vm594, %v2784
        %2800 = vst.msk [vmem:[%s683 + $0xbb] sm:$0x1] %vm594, %v2785
        %2801 = vst.msk [vmem:[%s683 + $0xdb] sm:$0x1] %vm594, %v2786
        %2802 = vst.msk [vmem:[%s683 + $0xfb] sm:$0x1] %vm594, %v2787
        %2803 = vrot.lane.b32.xlu0 %v439, 32
        %v2804 = vpop.permute.xlu0 %2803
        %v2805 = vsel %vm555, %v2804, 0
        %2807 = vmatpush.msra.mxu0 0.0
        %2808 = vmatpush.msra.mxu0 0.0
        %2809 = vmatpush.msra.mxu0 0.0
        %2810 = vmatpush.msra.mxu0 0.0
        %2811 = vmatpush.msra.mxu0 0.0
        %2812 = vmatpush.msra.mxu0 0.0
        %2813 = vmatpush.msra.mxu0 0.0
        %2814 = vmatpush.msra.mxu0 0.0
        %2815 = vmatpush.msra.mxu0 0.0
        %2816 = vmatpush.msra.mxu0 0.0
        %2817 = vmatpush.msra.mxu0 0.0
        %2818 = vmatpush.msra.mxu0 0.0
        %2819 = vmatpush.msra.mxu0 0.0
        %2820 = vmatpush.msra.mxu0 0.0
        %2821 = vmatpush.msra.mxu0 %v549
        %2822 = vmatpush.msra.mxu0 %v548
        %2823 = vmatmul.f32.gmra.mxu0 %v2805
        %v2824 = vpop.f32.mrf.mxu0
        %v2825 = vadd.f32 0.0, %v2824
        %2826 = vdwg.mxu0
        %v2828 = vrot.slane %v2825, 1
        %v2829 = vrot.slane %v2825, 2
        %v2830 = vrot.slane %v2825, 3
        %v2831 = vrot.slane %v2825, 4
        %v2832 = vrot.slane %v2825, 5
        %v2833 = vrot.slane %v2825, 6
        %v2834 = vrot.slane %v2825, 7
        %2842 = vst.msk [vmem:[#allocation2 + $0xe] sm:$0x1] %vm594, %v2825
        %2843 = vst.msk [vmem:[#allocation2 + $0x1e] sm:$0x1] %vm594, %v2828
        %2844 = vst.msk [vmem:[#allocation2 + $0x2e] sm:$0x1] %vm594, %v2829
        %2845 = vst.msk [vmem:[#allocation2 + $0x3e] sm:$0x1] %vm594, %v2830
        %2846 = vst.msk [vmem:[#allocation2 + $0x4e] sm:$0x1] %vm594, %v2831
        %2847 = vst.msk [vmem:[#allocation2 + $0x5e] sm:$0x1] %vm594, %v2832
        %2848 = vst.msk [vmem:[#allocation2 + $0x6e] sm:$0x1] %vm594, %v2833
        %2849 = vst.msk [vmem:[#allocation2 + $0x7e] sm:$0x1] %vm594, %v2834
        %2850 = vrot.lane.b32.xlu0 %v543, 32
        %v2851 = vpop.permute.xlu0 %2850
        %2852 = vrot.lane.b32.xlu0 %v546, 32
        %v2853 = vpop.permute.xlu0 %2852
        %v2854 = vsel %vm555, %v2851, 0
        %v2856 = vsel %vm555, %v2853, 0
        %2858 = vmatpush.msra.mxu0 0.0
        %2859 = vmatpush.msra.mxu0 0.0
        %2860 = vmatpush.msra.mxu0 0.0
        %2861 = vmatpush.msra.mxu0 0.0
        %2862 = vmatpush.msra.mxu0 0.0
        %2863 = vmatpush.msra.mxu0 0.0
        %2864 = vmatpush.msra.mxu0 0.0
        %2865 = vmatpush.msra.mxu0 0.0
        %2866 = vmatpush.msra.mxu0 0.0
        %2867 = vmatpush.msra.mxu0 0.0
        %2868 = vmatpush.msra.mxu0 0.0
        %2869 = vmatpush.msra.mxu0 0.0
        %2870 = vmatpush.msra.mxu0 0.0
        %2871 = vmatpush.msra.mxu0 0.0
        %2872 = vmatpush.msra.mxu0 %v554
        %2873 = vmatpush.msra.mxu0 %v553
        %2874 = vmatmul.f32.gmra.mxu0 %v2854
        %v2875 = vpop.f32.mrf.mxu0
        %v2876 = vadd.f32 0.0, %v2875
        %2877 = vmatmul.f32.gmra.mxu0 %v2856
        %v2878 = vpop.f32.mrf.mxu0
        %v2879 = vadd.f32 0.0, %v2878
        %2880 = vdwg.mxu0
        %2881 = vrot.lane.b32.xlu0 %v537, 32
        %v2882 = vpop.permute.xlu0 %2881
        %2883 = vrot.lane.b32.xlu0 %v540, 32
        %v2884 = vpop.permute.xlu0 %2883
        %v2885 = vsel %vm555, %v2882, 0
        %v2887 = vsel %vm555, %v2884, 0
        %2889 = vmatpush.msra.mxu0 0.0
        %2890 = vmatpush.msra.mxu0 0.0
        %2891 = vmatpush.msra.mxu0 0.0
        %2892 = vmatpush.msra.mxu0 0.0
        %2893 = vmatpush.msra.mxu0 0.0
        %2894 = vmatpush.msra.mxu0 0.0
        %2895 = vmatpush.msra.mxu0 0.0
        %2896 = vmatpush.msra.mxu0 0.0
        %2897 = vmatpush.msra.mxu0 0.0
        %2898 = vmatpush.msra.mxu0 0.0
        %2899 = vmatpush.msra.mxu0 0.0
        %2900 = vmatpush.msra.mxu0 0.0
        %2901 = vmatpush.msra.mxu0 0.0
        %2902 = vmatpush.msra.mxu0 0.0
        %2903 = vmatpush.msra.mxu0 %v551
        %2904 = vmatpush.msra.mxu0 %v550
        %2905 = vmatmul.f32.gmra.mxu0 %v2885
        %v2906 = vpop.f32.mrf.mxu0
        %v2907 = vadd.f32 %v2876, %v2906
        %2908 = vmatmul.f32.gmra.mxu0 %v2887
        %v2909 = vpop.f32.mrf.mxu0
        %v2910 = vadd.f32 %v2879, %v2909
        %2911 = vdwg.mxu0
        %vm2912 = vcmp.ge.f32.partialorder %v2907, 0.0
        %vm2913 = vcmp.ge.f32.partialorder %v2910, 0.0
        %v2914 = vmul.f32 %v663, %v2907
        %v2915 = vmul.f32 %v663, %v2910
        %v2916 = vsel %vm2912, %v2907, %v2914
        %v2917 = vsel %vm2913, %v2910, %v2915
        %v2919 = vrot.slane %v2916, 1
        %v2920 = vrot.slane %v2916, 2
        %v2921 = vrot.slane %v2916, 3
        %v2922 = vrot.slane %v2916, 4
        %v2923 = vrot.slane %v2916, 5
        %v2924 = vrot.slane %v2916, 6
        %v2925 = vrot.slane %v2916, 7
        %2933 = vst.msk [vmem:[%s683 + $0x1c] sm:$0x1] %vm594, %v2916
        %2934 = vst.msk [vmem:[%s683 + $0x3c] sm:$0x1] %vm594, %v2919
        %2935 = vst.msk [vmem:[%s683 + $0x5c] sm:$0x1] %vm594, %v2920
        %2936 = vst.msk [vmem:[%s683 + $0x7c] sm:$0x1] %vm594, %v2921
        %2937 = vst.msk [vmem:[%s683 + $0x9c] sm:$0x1] %vm594, %v2922
        %2938 = vst.msk [vmem:[%s683 + $0xbc] sm:$0x1] %vm594, %v2923
        %2939 = vst.msk [vmem:[%s683 + $0xdc] sm:$0x1] %vm594, %v2924
        %2940 = vst.msk [vmem:[%s683 + $0xfc] sm:$0x1] %vm594, %v2925
        %v2942 = vrot.slane %v2917, 1
        %v2943 = vrot.slane %v2917, 2
        %v2944 = vrot.slane %v2917, 3
        %v2945 = vrot.slane %v2917, 4
        %v2946 = vrot.slane %v2917, 5
        %v2947 = vrot.slane %v2917, 6
        %v2948 = vrot.slane %v2917, 7
        %2956 = vst.msk [vmem:[%s683 + $0x1d] sm:$0x1] %vm594, %v2917
        %2957 = vst.msk [vmem:[%s683 + $0x3d] sm:$0x1] %vm594, %v2942
        %2958 = vst.msk [vmem:[%s683 + $0x5d] sm:$0x1] %vm594, %v2943
        %2959 = vst.msk [vmem:[%s683 + $0x7d] sm:$0x1] %vm594, %v2944
        %2960 = vst.msk [vmem:[%s683 + $0x9d] sm:$0x1] %vm594, %v2945
        %2961 = vst.msk [vmem:[%s683 + $0xbd] sm:$0x1] %vm594, %v2946
        %2962 = vst.msk [vmem:[%s683 + $0xdd] sm:$0x1] %vm594, %v2947
        %2963 = vst.msk [vmem:[%s683 + $0xfd] sm:$0x1] %vm594, %v2948
        %2964 = vrot.lane.b32.xlu0 %v439, 16
        %v2965 = vpop.permute.xlu0 %2964
        %v2966 = vsel %vm555, %v2965, 0
        %2968 = vmatpush.msra.mxu0 0.0
        %2969 = vmatpush.msra.mxu0 0.0
        %2970 = vmatpush.msra.mxu0 0.0
        %2971 = vmatpush.msra.mxu0 0.0
        %2972 = vmatpush.msra.mxu0 0.0
        %2973 = vmatpush.msra.mxu0 0.0
        %2974 = vmatpush.msra.mxu0 0.0
        %2975 = vmatpush.msra.mxu0 0.0
        %2976 = vmatpush.msra.mxu0 0.0
        %2977 = vmatpush.msra.mxu0 0.0
        %2978 = vmatpush.msra.mxu0 0.0
        %2979 = vmatpush.msra.mxu0 0.0
        %2980 = vmatpush.msra.mxu0 0.0
        %2981 = vmatpush.msra.mxu0 0.0
        %2982 = vmatpush.msra.mxu0 %v549
        %2983 = vmatpush.msra.mxu0 %v548
        %2984 = vmatmul.f32.gmra.mxu0 %v2966
        %v2985 = vpop.f32.mrf.mxu0
        %v2986 = vadd.f32 0.0, %v2985
        %2987 = vdwg.mxu0
        %v2989 = vrot.slane %v2986, 1
        %v2990 = vrot.slane %v2986, 2
        %v2991 = vrot.slane %v2986, 3
        %v2992 = vrot.slane %v2986, 4
        %v2993 = vrot.slane %v2986, 5
        %v2994 = vrot.slane %v2986, 6
        %v2995 = vrot.slane %v2986, 7
        %3003 = vst.msk [vmem:[#allocation2 + $0xf] sm:$0x1] %vm594, %v2986
        %3004 = vst.msk [vmem:[#allocation2 + $0x1f] sm:$0x1] %vm594, %v2989
        %3005 = vst.msk [vmem:[#allocation2 + $0x2f] sm:$0x1] %vm594, %v2990
        %3006 = vst.msk [vmem:[#allocation2 + $0x3f] sm:$0x1] %vm594, %v2991
        %3007 = vst.msk [vmem:[#allocation2 + $0x4f] sm:$0x1] %vm594, %v2992
        %3008 = vst.msk [vmem:[#allocation2 + $0x5f] sm:$0x1] %vm594, %v2993
        %3009 = vst.msk [vmem:[#allocation2 + $0x6f] sm:$0x1] %vm594, %v2994
        %3010 = vst.msk [vmem:[#allocation2 + $0x7f] sm:$0x1] %vm594, %v2995
        %3011 = vrot.lane.b32.xlu0 %v543, 16
        %v3012 = vpop.permute.xlu0 %3011
        %3013 = vrot.lane.b32.xlu0 %v546, 16
        %v3014 = vpop.permute.xlu0 %3013
        %v3015 = vsel %vm555, %v3012, 0
        %v3017 = vsel %vm555, %v3014, 0
        %3019 = vmatpush.msra.mxu0 0.0
        %3020 = vmatpush.msra.mxu0 0.0
        %3021 = vmatpush.msra.mxu0 0.0
        %3022 = vmatpush.msra.mxu0 0.0
        %3023 = vmatpush.msra.mxu0 0.0
        %3024 = vmatpush.msra.mxu0 0.0
        %3025 = vmatpush.msra.mxu0 0.0
        %3026 = vmatpush.msra.mxu0 0.0
        %3027 = vmatpush.msra.mxu0 0.0
        %3028 = vmatpush.msra.mxu0 0.0
        %3029 = vmatpush.msra.mxu0 0.0
        %3030 = vmatpush.msra.mxu0 0.0
        %3031 = vmatpush.msra.mxu0 0.0
        %3032 = vmatpush.msra.mxu0 0.0
        %3033 = vmatpush.msra.mxu0 %v554
        %3034 = vmatpush.msra.mxu0 %v553
        %3035 = vmatmul.f32.gmra.mxu0 %v3015
        %v3036 = vpop.f32.mrf.mxu0
        %v3037 = vadd.f32 0.0, %v3036
        %3038 = vmatmul.f32.gmra.mxu0 %v3017
        %v3039 = vpop.f32.mrf.mxu0
        %v3040 = vadd.f32 0.0, %v3039
        %3041 = vdwg.mxu0
        %3042 = vrot.lane.b32.xlu0 %v537, 16
        %v3043 = vpop.permute.xlu0 %3042
        %3044 = vrot.lane.b32.xlu0 %v540, 16
        %v3045 = vpop.permute.xlu0 %3044
        %v3046 = vsel %vm555, %v3043, 0
        %v3048 = vsel %vm555, %v3045, 0
        %3050 = vmatpush.msra.mxu0 0.0
        %3051 = vmatpush.msra.mxu0 0.0
        %3052 = vmatpush.msra.mxu0 0.0
        %3053 = vmatpush.msra.mxu0 0.0
        %3054 = vmatpush.msra.mxu0 0.0
        %3055 = vmatpush.msra.mxu0 0.0
        %3056 = vmatpush.msra.mxu0 0.0
        %3057 = vmatpush.msra.mxu0 0.0
        %3058 = vmatpush.msra.mxu0 0.0
        %3059 = vmatpush.msra.mxu0 0.0
        %3060 = vmatpush.msra.mxu0 0.0
        %3061 = vmatpush.msra.mxu0 0.0
        %3062 = vmatpush.msra.mxu0 0.0
        %3063 = vmatpush.msra.mxu0 0.0
        %3064 = vmatpush.msra.mxu0 %v551
        %3065 = vmatpush.msra.mxu0 %v550
        %3066 = vmatmul.f32.gmra.mxu0 %v3046
        %v3067 = vpop.f32.mrf.mxu0
        %v3068 = vadd.f32 %v3037, %v3067
        %3069 = vmatmul.f32.gmra.mxu0 %v3048
        %v3070 = vpop.f32.mrf.mxu0
        %v3071 = vadd.f32 %v3040, %v3070
        %3072 = vdwg.mxu0
        %vm3073 = vcmp.ge.f32.partialorder %v3068, 0.0
        %vm3074 = vcmp.ge.f32.partialorder %v3071, 0.0
        %v3075 = vmul.f32 %v663, %v3068
        %v3076 = vmul.f32 %v663, %v3071
        %v3077 = vsel %vm3073, %v3068, %v3075
        %v3078 = vsel %vm3074, %v3071, %v3076
        %v3080 = vrot.slane %v3077, 1
        %v3081 = vrot.slane %v3077, 2
        %v3082 = vrot.slane %v3077, 3
        %v3083 = vrot.slane %v3077, 4
        %v3084 = vrot.slane %v3077, 5
        %v3085 = vrot.slane %v3077, 6
        %v3086 = vrot.slane %v3077, 7
        %3094 = vst.msk [vmem:[%s683 + $0x1e] sm:$0x1] %vm594, %v3077
        %3095 = vst.msk [vmem:[%s683 + $0x3e] sm:$0x1] %vm594, %v3080
        %3096 = vst.msk [vmem:[%s683 + $0x5e] sm:$0x1] %vm594, %v3081
        %3097 = vst.msk [vmem:[%s683 + $0x7e] sm:$0x1] %vm594, %v3082
        %3098 = vst.msk [vmem:[%s683 + $0x9e] sm:$0x1] %vm594, %v3083
        %3099 = vst.msk [vmem:[%s683 + $0xbe] sm:$0x1] %vm594, %v3084
        %3100 = vst.msk [vmem:[%s683 + $0xde] sm:$0x1] %vm594, %v3085
        %3101 = vst.msk [vmem:[%s683 + $0xfe] sm:$0x1] %vm594, %v3086
        %v3103 = vrot.slane %v3078, 1
        %v3104 = vrot.slane %v3078, 2
        %v3105 = vrot.slane %v3078, 3
        %v3106 = vrot.slane %v3078, 4
        %v3107 = vrot.slane %v3078, 5
        %v3108 = vrot.slane %v3078, 6
        %v3109 = vrot.slane %v3078, 7
        %3117 = vst.msk [vmem:[%s683 + $0x1f] sm:$0x1] %vm594, %v3078
        %3118 = vst.msk [vmem:[%s683 + $0x3f] sm:$0x1] %vm594, %v3103
        %3119 = vst.msk [vmem:[%s683 + $0x5f] sm:$0x1] %vm594, %v3104
        %3120 = vst.msk [vmem:[%s683 + $0x7f] sm:$0x1] %vm594, %v3105
        %3121 = vst.msk [vmem:[%s683 + $0x9f] sm:$0x1] %vm594, %v3106
        %3122 = vst.msk [vmem:[%s683 + $0xbf] sm:$0x1] %vm594, %v3107
        %3123 = vst.msk [vmem:[%s683 + $0xdf] sm:$0x1] %vm594, %v3108
        %3124 = vst.msk [vmem:[%s683 + $0xff] sm:$0x1] %vm594, %v3109
        %v3125 = vld [vmem:[%s6] sm:$0xff]
        %v3126 = vld [vmem:[%s6 + $0x8] sm:$0xff]
        %v3127 = vld [vmem:[%s6 + $0x10] sm:$0xff]
        %v3128 = vld [vmem:[%s6 + $0x18] sm:$0xff]
        %v3129 = vld [vmem:[#allocation2] sm:$0xff]
        %v3130 = vld [vmem:[#allocation2 + $0x8] sm:$0xff]
        %v3131 = vld [vmem:[#allocation2 + $0x10] sm:$0xff]
        %v3132 = vld [vmem:[#allocation2 + $0x18] sm:$0xff]
        %v3133 = vld [vmem:[#allocation2 + $0x20] sm:$0xff]
        %v3134 = vld [vmem:[#allocation2 + $0x28] sm:$0xff]
        %v3135 = vld [vmem:[#allocation2 + $0x30] sm:$0xff]
        %v3136 = vld [vmem:[#allocation2 + $0x38] sm:$0xff]
        %v3137 = vld [vmem:[#allocation2 + $0x40] sm:$0xff]
        %v3138 = vld [vmem:[#allocation2 + $0x48] sm:$0xff]
        %v3139 = vld [vmem:[#allocation2 + $0x50] sm:$0xff]
        %v3140 = vld [vmem:[#allocation2 + $0x58] sm:$0xff]
        %v3141 = vld [vmem:[#allocation2 + $0x60] sm:$0xff]
        %v3142 = vld [vmem:[#allocation2 + $0x68] sm:$0xff]
        %v3143 = vld [vmem:[#allocation2 + $0x70] sm:$0xff]
        %v3144 = vld [vmem:[#allocation2 + $0x78] sm:$0xff]
        %v3146 = vsel %vm555, %v3125, 0
        %v3149 = vsel %vm555, %v3126, 0
        %v3152 = vsel %vm555, %v3127, 0
        %v3155 = vsel %vm555, %v3128, 0
        %3157 = vmatpush.msra.mxu0 0.0
        %3158 = vmatpush.msra.mxu0 0.0
        %3159 = vmatpush.msra.mxu0 0.0
        %3160 = vmatpush.msra.mxu0 0.0
        %3161 = vmatpush.msra.mxu0 0.0
        %3162 = vmatpush.msra.mxu0 0.0
        %3163 = vmatpush.msra.mxu0 0.0
        %3164 = vmatpush.msra.mxu0 0.0
        %3165 = vmatpush.msra.mxu0 0.0
        %3166 = vmatpush.msra.mxu0 0.0
        %3167 = vmatpush.msra.mxu0 0.0
        %3168 = vmatpush.msra.mxu0 0.0
        %3169 = vmatpush.msra.mxu0 0.0
        %3170 = vmatpush.msra.mxu0 0.0
        %3171 = vmatpush.msra.mxu0 %v3130
        %3172 = vmatpush.msra.mxu0 %v3129
        %3173 = vmatmul.f32.gmra.mxu0 %v3146
        %v3174 = vpop.f32.mrf.mxu0
        %v3175 = vadd.f32 0.0, %v3174
        %3176 = vmatmul.f32.gmra.mxu0 %v3149
        %v3177 = vpop.f32.mrf.mxu0
        %v3178 = vadd.f32 0.0, %v3177
        %3179 = vmatmul.f32.gmra.mxu0 %v3152
        %v3180 = vpop.f32.mrf.mxu0
        %v3181 = vadd.f32 0.0, %v3180
        %3182 = vmatmul.f32.gmra.mxu0 %v3155
        %v3183 = vpop.f32.mrf.mxu0
        %v3184 = vadd.f32 0.0, %v3183
        %3185 = vdwg.mxu0
        %3186 = vmatpush.msra.mxu0 0.0
        %3187 = vmatpush.msra.mxu0 0.0
        %3188 = vmatpush.msra.mxu0 0.0
        %3189 = vmatpush.msra.mxu0 0.0
        %3190 = vmatpush.msra.mxu0 0.0
        %3191 = vmatpush.msra.mxu0 0.0
        %3192 = vmatpush.msra.mxu0 0.0
        %3193 = vmatpush.msra.mxu0 0.0
        %3194 = vmatpush.msra.mxu0 0.0
        %3195 = vmatpush.msra.mxu0 0.0
        %3196 = vmatpush.msra.mxu0 0.0
        %3197 = vmatpush.msra.mxu0 0.0
        %3198 = vmatpush.msra.mxu0 0.0
        %3199 = vmatpush.msra.mxu0 0.0
        %3200 = vmatpush.msra.mxu0 %v3132
        %3201 = vmatpush.msra.mxu0 %v3131
        %3202 = vmatmul.f32.gmra.mxu0 %v3146
        %v3203 = vpop.f32.mrf.mxu0
        %v3204 = vadd.f32 0.0, %v3203
        %3205 = vmatmul.f32.gmra.mxu0 %v3149
        %v3206 = vpop.f32.mrf.mxu0
        %v3207 = vadd.f32 0.0, %v3206
        %3208 = vmatmul.f32.gmra.mxu0 %v3152
        %v3209 = vpop.f32.mrf.mxu0
        %v3210 = vadd.f32 0.0, %v3209
        %3211 = vmatmul.f32.gmra.mxu0 %v3155
        %v3212 = vpop.f32.mrf.mxu0
        %v3213 = vadd.f32 0.0, %v3212
        %3214 = vdwg.mxu0
        %3215 = vmatpush.msra.mxu0 0.0
        %3216 = vmatpush.msra.mxu0 0.0
        %3217 = vmatpush.msra.mxu0 0.0
        %3218 = vmatpush.msra.mxu0 0.0
        %3219 = vmatpush.msra.mxu0 0.0
        %3220 = vmatpush.msra.mxu0 0.0
        %3221 = vmatpush.msra.mxu0 0.0
        %3222 = vmatpush.msra.mxu0 0.0
        %3223 = vmatpush.msra.mxu0 0.0
        %3224 = vmatpush.msra.mxu0 0.0
        %3225 = vmatpush.msra.mxu0 0.0
        %3226 = vmatpush.msra.mxu0 0.0
        %3227 = vmatpush.msra.mxu0 0.0
        %3228 = vmatpush.msra.mxu0 0.0
        %3229 = vmatpush.msra.mxu0 %v3134
        %3230 = vmatpush.msra.mxu0 %v3133
        %3231 = vmatmul.f32.gmra.mxu0 %v3146
        %v3232 = vpop.f32.mrf.mxu0
        %v3233 = vadd.f32 0.0, %v3232
        %3234 = vmatmul.f32.gmra.mxu0 %v3149
        %v3235 = vpop.f32.mrf.mxu0
        %v3236 = vadd.f32 0.0, %v3235
        %3237 = vmatmul.f32.gmra.mxu0 %v3152
        %v3238 = vpop.f32.mrf.mxu0
        %v3239 = vadd.f32 0.0, %v3238
        %3240 = vmatmul.f32.gmra.mxu0 %v3155
        %v3241 = vpop.f32.mrf.mxu0
        %v3242 = vadd.f32 0.0, %v3241
        %3243 = vdwg.mxu0
        %3244 = vmatpush.msra.mxu0 0.0
        %3245 = vmatpush.msra.mxu0 0.0
        %3246 = vmatpush.msra.mxu0 0.0
        %3247 = vmatpush.msra.mxu0 0.0
        %3248 = vmatpush.msra.mxu0 0.0
        %3249 = vmatpush.msra.mxu0 0.0
        %3250 = vmatpush.msra.mxu0 0.0
        %3251 = vmatpush.msra.mxu0 0.0
        %3252 = vmatpush.msra.mxu0 0.0
        %3253 = vmatpush.msra.mxu0 0.0
        %3254 = vmatpush.msra.mxu0 0.0
        %3255 = vmatpush.msra.mxu0 0.0
        %3256 = vmatpush.msra.mxu0 0.0
        %3257 = vmatpush.msra.mxu0 0.0
        %3258 = vmatpush.msra.mxu0 %v3136
        %3259 = vmatpush.msra.mxu0 %v3135
        %3260 = vmatmul.f32.gmra.mxu0 %v3146
        %v3261 = vpop.f32.mrf.mxu0
        %v3262 = vadd.f32 0.0, %v3261
        %3263 = vmatmul.f32.gmra.mxu0 %v3149
        %v3264 = vpop.f32.mrf.mxu0
        %v3265 = vadd.f32 0.0, %v3264
        %3266 = vmatmul.f32.gmra.mxu0 %v3152
        %v3267 = vpop.f32.mrf.mxu0
        %v3268 = vadd.f32 0.0, %v3267
        %3269 = vmatmul.f32.gmra.mxu0 %v3155
        %v3270 = vpop.f32.mrf.mxu0
        %v3271 = vadd.f32 0.0, %v3270
        %3272 = vdwg.mxu0
        %3273 = vmatpush.msra.mxu0 0.0
        %3274 = vmatpush.msra.mxu0 0.0
        %3275 = vmatpush.msra.mxu0 0.0
        %3276 = vmatpush.msra.mxu0 0.0
        %3277 = vmatpush.msra.mxu0 0.0
        %3278 = vmatpush.msra.mxu0 0.0
        %3279 = vmatpush.msra.mxu0 0.0
        %3280 = vmatpush.msra.mxu0 0.0
        %3281 = vmatpush.msra.mxu0 0.0
        %3282 = vmatpush.msra.mxu0 0.0
        %3283 = vmatpush.msra.mxu0 0.0
        %3284 = vmatpush.msra.mxu0 0.0
        %3285 = vmatpush.msra.mxu0 0.0
        %3286 = vmatpush.msra.mxu0 0.0
        %3287 = vmatpush.msra.mxu0 %v3138
        %3288 = vmatpush.msra.mxu0 %v3137
        %3289 = vmatmul.f32.gmra.mxu0 %v3146
        %v3290 = vpop.f32.mrf.mxu0
        %v3291 = vadd.f32 0.0, %v3290
        %3292 = vmatmul.f32.gmra.mxu0 %v3149
        %v3293 = vpop.f32.mrf.mxu0
        %v3294 = vadd.f32 0.0, %v3293
        %3295 = vmatmul.f32.gmra.mxu0 %v3152
        %v3296 = vpop.f32.mrf.mxu0
        %v3297 = vadd.f32 0.0, %v3296
        %3298 = vmatmul.f32.gmra.mxu0 %v3155
        %v3299 = vpop.f32.mrf.mxu0
        %v3300 = vadd.f32 0.0, %v3299
        %3301 = vdwg.mxu0
        %3302 = vmatpush.msra.mxu0 0.0
        %3303 = vmatpush.msra.mxu0 0.0
        %3304 = vmatpush.msra.mxu0 0.0
        %3305 = vmatpush.msra.mxu0 0.0
        %3306 = vmatpush.msra.mxu0 0.0
        %3307 = vmatpush.msra.mxu0 0.0
        %3308 = vmatpush.msra.mxu0 0.0
        %3309 = vmatpush.msra.mxu0 0.0
        %3310 = vmatpush.msra.mxu0 0.0
        %3311 = vmatpush.msra.mxu0 0.0
        %3312 = vmatpush.msra.mxu0 0.0
        %3313 = vmatpush.msra.mxu0 0.0
        %3314 = vmatpush.msra.mxu0 0.0
        %3315 = vmatpush.msra.mxu0 0.0
        %3316 = vmatpush.msra.mxu0 %v3140
        %3317 = vmatpush.msra.mxu0 %v3139
        %3318 = vmatmul.f32.gmra.mxu0 %v3146
        %v3319 = vpop.f32.mrf.mxu0
        %v3320 = vadd.f32 0.0, %v3319
        %3321 = vmatmul.f32.gmra.mxu0 %v3149
        %v3322 = vpop.f32.mrf.mxu0
        %v3323 = vadd.f32 0.0, %v3322
        %3324 = vmatmul.f32.gmra.mxu0 %v3152
        %v3325 = vpop.f32.mrf.mxu0
        %v3326 = vadd.f32 0.0, %v3325
        %3327 = vmatmul.f32.gmra.mxu0 %v3155
        %v3328 = vpop.f32.mrf.mxu0
        %v3329 = vadd.f32 0.0, %v3328
        %3330 = vdwg.mxu0
        %3331 = vmatpush.msra.mxu0 0.0
        %3332 = vmatpush.msra.mxu0 0.0
        %3333 = vmatpush.msra.mxu0 0.0
        %3334 = vmatpush.msra.mxu0 0.0
        %3335 = vmatpush.msra.mxu0 0.0
        %3336 = vmatpush.msra.mxu0 0.0
        %3337 = vmatpush.msra.mxu0 0.0
        %3338 = vmatpush.msra.mxu0 0.0
        %3339 = vmatpush.msra.mxu0 0.0
        %3340 = vmatpush.msra.mxu0 0.0
        %3341 = vmatpush.msra.mxu0 0.0
        %3342 = vmatpush.msra.mxu0 0.0
        %3343 = vmatpush.msra.mxu0 0.0
        %3344 = vmatpush.msra.mxu0 0.0
        %3345 = vmatpush.msra.mxu0 %v3142
        %3346 = vmatpush.msra.mxu0 %v3141
        %3347 = vmatmul.f32.gmra.mxu0 %v3146
        %v3348 = vpop.f32.mrf.mxu0
        %v3349 = vadd.f32 0.0, %v3348
        %3350 = vmatmul.f32.gmra.mxu0 %v3149
        %v3351 = vpop.f32.mrf.mxu0
        %v3352 = vadd.f32 0.0, %v3351
        %3353 = vmatmul.f32.gmra.mxu0 %v3152
        %v3354 = vpop.f32.mrf.mxu0
        %v3355 = vadd.f32 0.0, %v3354
        %3356 = vmatmul.f32.gmra.mxu0 %v3155
        %v3357 = vpop.f32.mrf.mxu0
        %v3358 = vadd.f32 0.0, %v3357
        %3359 = vdwg.mxu0
        %3360 = vmatpush.msra.mxu0 0.0
        %3361 = vmatpush.msra.mxu0 0.0
        %3362 = vmatpush.msra.mxu0 0.0
        %3363 = vmatpush.msra.mxu0 0.0
        %3364 = vmatpush.msra.mxu0 0.0
        %3365 = vmatpush.msra.mxu0 0.0
        %3366 = vmatpush.msra.mxu0 0.0
        %3367 = vmatpush.msra.mxu0 0.0
        %3368 = vmatpush.msra.mxu0 0.0
        %3369 = vmatpush.msra.mxu0 0.0
        %3370 = vmatpush.msra.mxu0 0.0
        %3371 = vmatpush.msra.mxu0 0.0
        %3372 = vmatpush.msra.mxu0 0.0
        %3373 = vmatpush.msra.mxu0 0.0
        %3374 = vmatpush.msra.mxu0 %v3144
        %3375 = vmatpush.msra.mxu0 %v3143
        %3376 = vmatmul.f32.gmra.mxu0 %v3146
        %v3377 = vpop.f32.mrf.mxu0
        %v3378 = vadd.f32 0.0, %v3377
        %3379 = vmatmul.f32.gmra.mxu0 %v3149
        %v3380 = vpop.f32.mrf.mxu0
        %v3381 = vadd.f32 0.0, %v3380
        %3382 = vmatmul.f32.gmra.mxu0 %v3152
        %v3383 = vpop.f32.mrf.mxu0
        %v3384 = vadd.f32 0.0, %v3383
        %3385 = vmatmul.f32.gmra.mxu0 %v3155
        %v3386 = vpop.f32.mrf.mxu0
        %v3387 = vadd.f32 0.0, %v3386
        %3388 = vdwg.mxu0
        %vm3389 = vcmp.ge.f32.partialorder %v3175, 0.0
        %vm3390 = vcmp.ge.f32.partialorder %v3178, 0.0
        %vm3391 = vcmp.ge.f32.partialorder %v3181, 0.0
        %vm3392 = vcmp.ge.f32.partialorder %v3184, 0.0
        %vm3393 = vcmp.ge.f32.partialorder %v3204, 0.0
        %vm3394 = vcmp.ge.f32.partialorder %v3207, 0.0
        %vm3395 = vcmp.ge.f32.partialorder %v3210, 0.0
        %vm3396 = vcmp.ge.f32.partialorder %v3213, 0.0
        %vm3397 = vcmp.ge.f32.partialorder %v3233, 0.0
        %vm3398 = vcmp.ge.f32.partialorder %v3236, 0.0
        %vm3399 = vcmp.ge.f32.partialorder %v3239, 0.0
        %vm3400 = vcmp.ge.f32.partialorder %v3242, 0.0
        %vm3401 = vcmp.ge.f32.partialorder %v3262, 0.0
        %vm3402 = vcmp.ge.f32.partialorder %v3265, 0.0
        %vm3403 = vcmp.ge.f32.partialorder %v3268, 0.0
        %vm3404 = vcmp.ge.f32.partialorder %v3271, 0.0
        %vm3405 = vcmp.ge.f32.partialorder %v3291, 0.0
        %vm3406 = vcmp.ge.f32.partialorder %v3294, 0.0
        %vm3407 = vcmp.ge.f32.partialorder %v3297, 0.0
        %vm3408 = vcmp.ge.f32.partialorder %v3300, 0.0
        %vm3409 = vcmp.ge.f32.partialorder %v3320, 0.0
        %vm3410 = vcmp.ge.f32.partialorder %v3323, 0.0
        %vm3411 = vcmp.ge.f32.partialorder %v3326, 0.0
        %vm3412 = vcmp.ge.f32.partialorder %v3329, 0.0
        %vm3413 = vcmp.ge.f32.partialorder %v3349, 0.0
        %vm3414 = vcmp.ge.f32.partialorder %v3352, 0.0
        %vm3415 = vcmp.ge.f32.partialorder %v3355, 0.0
        %vm3416 = vcmp.ge.f32.partialorder %v3358, 0.0
        %vm3417 = vcmp.ge.f32.partialorder %v3378, 0.0
        %vm3418 = vcmp.ge.f32.partialorder %v3381, 0.0
        %vm3419 = vcmp.ge.f32.partialorder %v3384, 0.0
        %vm3420 = vcmp.ge.f32.partialorder %v3387, 0.0
        %v3421 = vmul.f32 %v663, %v3175
        %v3422 = vmul.f32 %v663, %v3178
        %v3423 = vmul.f32 %v663, %v3181
        %v3424 = vmul.f32 %v663, %v3184
        %v3425 = vmul.f32 %v663, %v3204
        %v3426 = vmul.f32 %v663, %v3207
        %v3427 = vmul.f32 %v663, %v3210
        %v3428 = vmul.f32 %v663, %v3213
        %v3429 = vmul.f32 %v663, %v3233
        %v3430 = vmul.f32 %v663, %v3236
        %v3431 = vmul.f32 %v663, %v3239
        %v3432 = vmul.f32 %v663, %v3242
        %v3433 = vmul.f32 %v663, %v3262
        %v3434 = vmul.f32 %v663, %v3265
        %v3435 = vmul.f32 %v663, %v3268
        %v3436 = vmul.f32 %v663, %v3271
        %v3437 = vmul.f32 %v663, %v3291
        %v3438 = vmul.f32 %v663, %v3294
        %v3439 = vmul.f32 %v663, %v3297
        %v3440 = vmul.f32 %v663, %v3300
        %v3441 = vmul.f32 %v663, %v3320
        %v3442 = vmul.f32 %v663, %v3323
        %v3443 = vmul.f32 %v663, %v3326
        %v3444 = vmul.f32 %v663, %v3329
        %v3445 = vmul.f32 %v663, %v3349
        %v3446 = vmul.f32 %v663, %v3352
        %v3447 = vmul.f32 %v663, %v3355
        %v3448 = vmul.f32 %v663, %v3358
        %v3449 = vmul.f32 %v663, %v3378
        %v3450 = vmul.f32 %v663, %v3381
        %v3451 = vmul.f32 %v663, %v3384
        %v3452 = vmul.f32 %v663, %v3387
        %v3453 = vsel %vm3389, %v3175, %v3421
        %v3454 = vsel %vm3390, %v3178, %v3422
        %v3455 = vsel %vm3391, %v3181, %v3423
        %v3456 = vsel %vm3392, %v3184, %v3424
        %v3457 = vsel %vm3393, %v3204, %v3425
        %v3458 = vsel %vm3394, %v3207, %v3426
        %v3459 = vsel %vm3395, %v3210, %v3427
        %v3460 = vsel %vm3396, %v3213, %v3428
        %v3461 = vsel %vm3397, %v3233, %v3429
        %v3462 = vsel %vm3398, %v3236, %v3430
        %v3463 = vsel %vm3399, %v3239, %v3431
        %v3464 = vsel %vm3400, %v3242, %v3432
        %v3465 = vsel %vm3401, %v3262, %v3433
        %v3466 = vsel %vm3402, %v3265, %v3434
        %v3467 = vsel %vm3403, %v3268, %v3435
        %v3468 = vsel %vm3404, %v3271, %v3436
        %v3469 = vsel %vm3405, %v3291, %v3437
        %v3470 = vsel %vm3406, %v3294, %v3438
        %v3471 = vsel %vm3407, %v3297, %v3439
        %v3472 = vsel %vm3408, %v3300, %v3440
        %v3473 = vsel %vm3409, %v3320, %v3441
        %v3474 = vsel %vm3410, %v3323, %v3442
        %v3475 = vsel %vm3411, %v3326, %v3443
        %v3476 = vsel %vm3412, %v3329, %v3444
        %v3477 = vsel %vm3413, %v3349, %v3445
        %v3478 = vsel %vm3414, %v3352, %v3446
        %v3479 = vsel %vm3415, %v3355, %v3447
        %v3480 = vsel %vm3416, %v3358, %v3448
        %v3481 = vsel %vm3417, %v3378, %v3449
        %v3482 = vsel %vm3418, %v3381, %v3450
        %v3483 = vsel %vm3419, %v3384, %v3451
        %v3484 = vsel %vm3420, %v3387, %v3452
        %vm3485 = vcmask 261120
        %3486 = vst.msk [vmem:[%s368] sm:$0xff] %vm3485, %v3453
        %3487 = vst.msk [vmem:[%s368 + $0x8] sm:$0xff] %vm3485, %v3454
        %3488 = vst.msk [vmem:[%s368 + $0x10] sm:$0xff] %vm3485, %v3455
        %3489 = vst.msk [vmem:[%s368 + $0x18] sm:$0xff] %vm3485, %v3456
        %3490 = vst.msk [vmem:[%s368 + $0x20] sm:$0xff] %vm3485, %v3457
        %3491 = vst.msk [vmem:[%s368 + $0x28] sm:$0xff] %vm3485, %v3458
        %3492 = vst.msk [vmem:[%s368 + $0x30] sm:$0xff] %vm3485, %v3459
        %3493 = vst.msk [vmem:[%s368 + $0x38] sm:$0xff] %vm3485, %v3460
        %3494 = vst.msk [vmem:[%s368 + $0x40] sm:$0xff] %vm3485, %v3461
        %3495 = vst.msk [vmem:[%s368 + $0x48] sm:$0xff] %vm3485, %v3462
        %3496 = vst.msk [vmem:[%s368 + $0x50] sm:$0xff] %vm3485, %v3463
        %3497 = vst.msk [vmem:[%s368 + $0x58] sm:$0xff] %vm3485, %v3464
        %3498 = vst.msk [vmem:[%s368 + $0x60] sm:$0xff] %vm3485, %v3465
        %3499 = vst.msk [vmem:[%s368 + $0x68] sm:$0xff] %vm3485, %v3466
        %3500 = vst.msk [vmem:[%s368 + $0x70] sm:$0xff] %vm3485, %v3467
        %3501 = vst.msk [vmem:[%s368 + $0x78] sm:$0xff] %vm3485, %v3468
        %3502 = vst.msk [vmem:[%s368 + $0x80] sm:$0xff] %vm3485, %v3469
        %3503 = vst.msk [vmem:[%s368 + $0x88] sm:$0xff] %vm3485, %v3470
        %3504 = vst.msk [vmem:[%s368 + $0x90] sm:$0xff] %vm3485, %v3471
        %3505 = vst.msk [vmem:[%s368 + $0x98] sm:$0xff] %vm3485, %v3472
        %3506 = vst.msk [vmem:[%s368 + $0xa0] sm:$0xff] %vm3485, %v3473
        %3507 = vst.msk [vmem:[%s368 + $0xa8] sm:$0xff] %vm3485, %v3474
        %3508 = vst.msk [vmem:[%s368 + $0xb0] sm:$0xff] %vm3485, %v3475
        %3509 = vst.msk [vmem:[%s368 + $0xb8] sm:$0xff] %vm3485, %v3476
        %3510 = vst.msk [vmem:[%s368 + $0xc0] sm:$0xff] %vm3485, %v3477
        %3511 = vst.msk [vmem:[%s368 + $0xc8] sm:$0xff] %vm3485, %v3478
        %3512 = vst.msk [vmem:[%s368 + $0xd0] sm:$0xff] %vm3485, %v3479
        %3513 = vst.msk [vmem:[%s368 + $0xd8] sm:$0xff] %vm3485, %v3480
        %3514 = vst.msk [vmem:[%s368 + $0xe0] sm:$0xff] %vm3485, %v3481
        %3515 = vst.msk [vmem:[%s368 + $0xe8] sm:$0xff] %vm3485, %v3482
        %3516 = vst.msk [vmem:[%s368 + $0xf0] sm:$0xff] %vm3485, %v3483
        %3517 = vst.msk [vmem:[%s368 + $0xf8] sm:$0xff] %vm3485, %v3484
        %s3518 = sand.u32 %s253, 1
        %s3519 = scalar_lea.sflag [#allocation5], %s3518
        %s3520 = sand.u32 %s253, 1
        %s3521 = smul.addr %s3520, 512
        %s3522 = scalar_lea.vmem [#allocation4], %s3521
        // Predicated region
        $region61: #{upsampling_block.1} parent=59 // pred_check
          %p3523 = pneg %p263
        $region62: #{upsampling_block.1} parent=59 // pred_check_branch
          %3525 = sbr.rel (%p3523) target = $region64
        $region63: #{upsampling_block.1} parent=59 // pred_region
          %3527 = vsyncadd %s3519, 0
          %s3528 = smul.addr %s25, 64
          %s3529 = smul.addr %s3528, 8
          %s3530 = scalar_lea.hbm %s10, %s3529
          %s3531 = sshll.u32 %s3522, 4
          %s3532 = int_to_ptr.vmem [resolvable:$true] %s3531
          %s3533 = sshll.u32 %s3530, 4
          %s3534 = int_to_ptr.hbm [resolvable:$true] %s3533
          %3539 = dma.vmem_to_hbm [thread:$0]  %s3532, 8192, %s3534, %s3519, 128, 128, 8
        $region64: #{upsampling_block.1} parent=59 // pred_fallthru
          _
      $region60: #{upsampling_block.1} parent=5 // pred_fallthru
        _
      %p3540 = scmp.le.s32.totalorder 2, %s20
      // Predicated region
      $region65: #{upsampling_block.1} parent=5 // pred_check
        %p3541 = pneg %p3540
      $region66: #{upsampling_block.1} parent=5 // pred_check_branch
        %3543 = sbr.rel (%p3541) target = $region68
      $region67: #{upsampling_block.1} parent=5 // pred_region
        %s3544 = ssub.s32 %s20, 2
        // Predicated region
        $region69: #{upsampling_block.1} parent=67 // pred_check
          %p3545 = pneg %p269
        $region70: #{upsampling_block.1} parent=67 // pred_check_branch
          %3547 = sbr.rel (%p3545) target = $region72
        $region71: #{upsampling_block.1} parent=67 // pred_region
          %s3548 = sand.u32 %s254, 1
          %s3549 = scalar_lea.sflag [#allocation5], %s3548
          %s3550 = sand.u32 %s254, 1
          %s3551 = smul.addr %s3550, 512
          %s3552 = scalar_lea.vmem [#allocation4], %s3551
          %3554 = dma.done %s3549, 8192
        $region72: #{upsampling_block.1} parent=67 // pred_fallthru
          _
      $region68: #{upsampling_block.1} parent=5 // pred_fallthru
        _
    $region6: #{upsampling_block.1} parent=1 // loop_footer
      %s24 = sadd.s32 1, %s20
    $region7: #{upsampling_block.1} parent=1 // loop_footer_branch
      %19 = sbr.rel target = $region3
    $region8: #{upsampling_block.1} parent=1 // loop_exit
      _
    %3555 = vsyncpa [#allocation5], 1
    %s3556 = scalar_lea.sflag [#allocation5], 1
    %3557 = vsyncpa %s3556, 1

</llo_original>
